<compile_context>
chip_gen: v7x
topology: tpu7x:2x2x1
jax: 0.10.0
libtpu: 0.0.40
codegen_flags: <defaults>
</compile_context>

<pallas_src>
import functools

import jax
import jax.numpy as jnp
from jax import lax
from jax.experimental import pallas as pl
from jax.experimental.pallas import tpu as pltpu

_LANE = 128


@functools.lru_cache(maxsize=None)
def _vmem_limit_bytes():
    """Generation-aware scoped-VMEM budget: ~96 MiB on 128 MiB parts, <=48 MiB on v7x."""
    try:
        cap = int(pltpu.get_tpu_info().vmem_capacity_bytes)
    except Exception:
        cap = 128 * 1024 * 1024
    return int(min(cap * 3 // 4, 96 * 1024 * 1024))


def _round_up(v, m):
    return (v + m - 1) // m * m


def _pick_tile_h(h, w, target_m=512):
    """Row-tile height: divisor of H (prefer multiple of 8) with TH*W >= target_m."""
    divs = [d for d in range(1, h + 1) if h % d == 0]
    for need_mult8 in (True, False):
        for d in divs:
            if need_mult8 and d % 8:
                continue
            if d * w >= target_m:
                return d
    return h  # whole sample per step (small H*W)


def _pad_vec(v, c_pad):
    return jnp.pad(v, (0, c_pad - v.shape[0]))


def _pad_mat(m, r_pad, c_pad):
    return jnp.pad(m, ((0, r_pad - m.shape[0]), (0, c_pad - m.shape[1])))


def _pad_hwio(w, ci_pad, co_pad):
    return jnp.pad(w, ((0, 0), (0, 0), (0, ci_pad - w.shape[2]), (0, co_pad - w.shape[3])))


# --------------------------- Pallas kernels ---------------------------------

def _conv3x3_gn_kernel(*refs, fuse_affine):
    """3x3 'SAME' conv of one row tile + GroupNorm statistics epilogue.

    grid = (N, H // TH), dimension_semantics = ("parallel", "arbitrary").

    refs (fuse_affine=True):
      x_ref    (1, H, W, Cin)    whole sample, resident across the row-tile axis
      a_ref    (1, 1, Cin)       prologue affine scale (previous GN + FiLM folded)
      b_ref    (1, 1, Cin)       prologue affine shift
      w_ref    (9*Cin, Cout)     tap-major flattened conv weights (resident)
      bias_ref (1, Cout)         f32 conv bias (resident)
      y_ref    (1, TH, W, Cout)  conv output tile
      s1_ref   (1, 1, Cout)      per-sample channel sums        (accumulated over tiles)
      s2_ref   (1, 1, Cout)      per-sample channel sums of sq. (accumulated over tiles)
      slab_ref (TH+2, W+2, Cin)  scratch: zero-padded, activated input slab
      patch_ref(TH*W, 9*Cin)     scratch: staged im2col patches for one MXU matmul
    """
    if fuse_affine:
        (x_ref, a_ref, b_ref, w_ref, bias_ref,
         y_ref, s1_ref, s2_ref, slab_ref, patch_ref) = refs
    else:
        (x_ref, w_ref, bias_ref,
         y_ref, s1_ref, s2_ref, slab_ref, patch_ref) = refs
        a_ref = b_ref = None

    i = pl.program_id(1)
    nh = pl.num_programs(1)
    _, th, w_out, cout = y_ref.shape
    cin = x_ref.shape[-1]
    h_full = x_ref.shape[1]
    m = th * w_out

    r0 = i * th
    if th % 8 == 0:
        r0 = pl.multiple_of(r0, 8)          # aligned sublane-window loads

    def prologue(rows):
        # rows: (..., W, Cin) raw upstream values; conv2 fuses GN1+FiLM+SiLU here.
        if not fuse_affine:
            return rows.astype(slab_ref.dtype)
        v = rows.astype(jnp.float32) * a_ref[...] + b_ref[...]
        v = v * jax.nn.sigmoid(v)            # SiLU, f32 element-wise math
        return v.astype(slab_ref.dtype)

    # --- build the zero-padded, activated (TH+2, W+2, Cin) input slab --------
    zero_col = jnp.zeros((th + 2, 1, cin), slab_ref.dtype)
    slab_ref[:, pl.ds(0, 1), :] = zero_col            # left border column
    slab_ref[:, pl.ds(w_out + 1, 1), :] = zero_col    # right border column

    mid = prologue(x_ref[0, pl.ds(r0, th), :, :])     # (TH, W, Cin)
    slab_ref[pl.ds(1, th), pl.ds(1, w_out), :] = mid

    top = prologue(x_ref[0, pl.ds(jnp.maximum(r0 - 1, 0), 1), :, :])   # (1, W, Cin)
    top = jnp.where(i > 0, top, jnp.zeros_like(top))  # image border -> zeros
    slab_ref[pl.ds(0, 1), pl.ds(1, w_out), :] = top

    bot = prologue(x_ref[0, pl.ds(jnp.minimum(r0 + th, h_full - 1), 1), :, :])
    bot = jnp.where(i < nh - 1, bot, jnp.zeros_like(bot))
    slab_ref[pl.ds(th + 1, 1), pl.ds(1, w_out), :] = bot

    # --- stage the 9 taps, then ONE (M,9Cin)x(9Cin,Cout) MXU matmul -----------
    for tap in range(9):
        dy, dx = tap // 3, tap % 3
        piece = slab_ref[pl.ds(dy, th), pl.ds(dx, w_out), :]           # (TH, W, Cin)
        patch_ref[:, pl.ds(tap * cin, cin)] = piece.reshape(m, cin)

    acc = jnp.dot(patch_ref[...], w_ref[...], preferred_element_type=jnp.float32)
    acc = acc + bias_ref[...]                                          # f32
    y_ref[...] = acc.reshape(1, th, w_out, cout).astype(y_ref.dtype)

    # --- GroupNorm statistics ride along while the tile is resident ----------
    # TODO(synk): E[x^2]-E[x]^2 is cancellation-prone if conv outputs ever get
    #             mean >> std; switch to a two-pass / Welford update if so.
    @pl.when(i == 0)
    def _():
        s1_ref[...] = jnp.zeros_like(s1_ref)
        s2_ref[...] = jnp.zeros_like(s2_ref)

    s1_ref[...] += jnp.sum(acc, axis=0).reshape(1, 1, cout)
    s2_ref[...] += jnp.sum(acc * acc, axis=0).reshape(1, 1, cout)


def _gn_silu_res_kernel(*refs, res_mode):
    """o = SiLU(h*A + B) (+ residual).  grid = (N, H // TH), all axes parallel.

    res_mode: "none" | "identity" (adds x tile) | "conv" (fused 1x1 res_conv matmul).
    """
    if res_mode == "conv":
        h_ref, a_ref, b_ref, x_ref, rw_ref, rb_ref, o_ref = refs
    elif res_mode == "identity":
        h_ref, a_ref, b_ref, x_ref, o_ref = refs
    else:
        h_ref, a_ref, b_ref, o_ref = refs

    _, th, w_out, c = h_ref.shape
    m = th * w_out
    y = h_ref[...].astype(jnp.float32).reshape(m, c)
    y = y * a_ref[0] + b_ref[0]                       # (1, C) broadcast
    y = y * jax.nn.sigmoid(y)                         # SiLU
    if res_mode == "conv":
        cin = x_ref.shape[-1]
        xr = x_ref[...].reshape(m, cin)
        y = y + (jnp.dot(xr, rw_ref[...], preferred_element_type=jnp.float32)
                 + rb_ref[...])
    elif res_mode == "identity":
        y = y + x_ref[...].astype(jnp.float32).reshape(m, c)
    o_ref[...] = y.reshape(1, th, w_out, c).astype(o_ref.dtype)


# --------------------------- pallas_call wrappers ----------------------------

def conv3x3_gn(x, wmat, bias, *, affine, tile_h, out_dtype):
    """3x3 SAME conv (padding handled in-kernel) + per-sample GN sum / sum-sq.

    If affine=(A, B) is given, SiLU(x*A + B) is applied to the input inside the
    kernel prologue (fuses the preceding GroupNorm+FiLM+SiLU, saving an HBM pass).
    """
    n, h, w, cin = x.shape
    cout = wmat.shape[-1]
    nh = h // tile_h
    fuse = affine is not None

    in_specs = [pl.BlockSpec((1, h, w, cin), lambda b, i: (b, 0, 0, 0))]
    args = [x]
    if fuse:
        a, bshift = affine
        in_specs += [pl.BlockSpec((1, 1, cin), lambda b, i: (b, 0, 0)),
                     pl.BlockSpec((1, 1, cin), lambda b, i: (b, 0, 0))]
        args += [a, bshift]
    in_specs += [pl.BlockSpec((9 * cin, cout), lambda b, i: (0, 0)),
                 pl.BlockSpec((1, cout), lambda b, i: (0, 0))]
    args += [wmat, bias]

    return pl.pallas_call(
        functools.partial(_conv3x3_gn_kernel, fuse_affine=fuse),
        grid=(n, nh),
        in_specs=in_specs,
        out_specs=(
            pl.BlockSpec((1, tile_h, w, cout), lambda b, i: (b, i, 0, 0)),
            pl.BlockSpec((1, 1, cout), lambda b, i: (b, 0, 0)),
            pl.BlockSpec((1, 1, cout), lambda b, i: (b, 0, 0)),
        ),
        out_shape=(
            jax.ShapeDtypeStruct((n, h, w, cout), out_dtype),
            jax.ShapeDtypeStruct((n, 1, cout), jnp.float32),
            jax.ShapeDtypeStruct((n, 1, cout), jnp.float32),
        ),
        scratch_shapes=[
            pltpu.VMEM((tile_h + 2, w + 2, cin), x.dtype),   # activated padded slab
            pltpu.VMEM((tile_h * w, 9 * cin), x.dtype),      # staged im2col patches
        ],
        compiler_params=pltpu.CompilerParams(
            dimension_semantics=("parallel", "arbitrary"),
            vmem_limit_bytes=_vmem_limit_bytes(),
        ),
    )(*args)


def gn_silu_residual(h_act, a, b, *, tile_h, out_dtype, res):
    """Tiled SiLU(h*A+B) + residual (identity or fused 1x1 res_conv)."""
    n, hh, ww, c = h_act.shape
    nh = hh // tile_h
    res_mode = res[0]
    in_specs = [pl.BlockSpec((1, tile_h, ww, c), lambda bb, i: (bb, i, 0, 0)),
                pl.BlockSpec((1, 1, c), lambda bb, i: (bb, 0, 0)),
                pl.BlockSpec((1, 1, c), lambda bb, i: (bb, 0, 0))]
    args = [h_act, a, b]
    if res_mode == "conv":
        _, x_res, rw, rb = res
        cin = x_res.shape[-1]
        in_specs += [pl.BlockSpec((1, tile_h, ww, cin), lambda bb, i: (bb, i, 0, 0)),
                     pl.BlockSpec((cin, c), lambda bb, i: (0, 0)),
                     pl.BlockSpec((1, c), lambda bb, i: (0, 0))]
        args += [x_res, rw, rb]
    elif res_mode == "identity":
        in_specs += [pl.BlockSpec((1, tile_h, ww, c), lambda bb, i: (bb, i, 0, 0))]
        args += [res[1]]

    return pl.pallas_call(
        functools.partial(_gn_silu_res_kernel, res_mode=res_mode),
        grid=(n, nh),
        in_specs=in_specs,
        out_specs=pl.BlockSpec((1, tile_h, ww, c), lambda bb, i: (bb, i, 0, 0)),
        out_shape=jax.ShapeDtypeStruct((n, hh, ww, c), out_dtype),
        compiler_params=pltpu.CompilerParams(
            dimension_semantics=("parallel", "parallel"),
            vmem_limit_bytes=_vmem_limit_bytes(),
        ),
    )(*args)


# --------------------------- tiny plain-JAX pieces ---------------------------
# O(N*C) work: kernel launch + HBM round-trips would dominate (per perf review).

def _gn_fold_affine(s1, s2, gamma, beta, *, groups, c_real, c_pad, count, eps,
                    scale=None, shift=None):
    """Fold GroupNorm (+ optional FiLM) into per-(n, c) affine A, B (channel-padded)."""
    n = s1.shape[0]
    cpg = c_real // groups
    sum1 = s1[:, 0, :c_real].reshape(n, groups, cpg).sum(-1)
    sum2 = s2[:, 0, :c_real].reshape(n, groups, cpg).sum(-1)
    mean_g = sum1 / count
    var_g = sum2 / count - mean_g * mean_g           # biased variance (PyTorch GN)
    inv_c = jnp.repeat(lax.rsqrt(var_g + eps), cpg, axis=-1)      # (N, C)
    mean_c = jnp.repeat(mean_g, cpg, axis=-1)
    a = inv_c * gamma[None, :]
    b = beta[None, :] - mean_c * a
    if scale is not None:
        a = a * (scale + 1.0)
        b = b * (scale + 1.0) + shift
    pad = c_pad - c_real
    a = jnp.pad(a, ((0, 0), (0, pad)))
    b = jnp.pad(b, ((0, 0), (0, pad)))
    return a[:, None, :].astype(jnp.float32), b[:, None, :].astype(jnp.float32)


# --------------------------- forward ------------------------------------------

def resnet_block_forward(params, x_nchw, t, *, compute_dtype=jnp.bfloat16):
    """ResnetBlock.forward(inputs, t); inputs NCHW, t (N, time_emb_dim).

    MXU operands in compute_dtype (f32 accumulation); normalization / activation
    math in f32; conv intermediates stored in compute_dtype.
    """
    groups = params["groups"]
    eps = 1e-5
    # TODO(synk): keep activations NHWC across a stack of blocks; these NCHW
    # transposes exist only for the PyTorch-style public interface.
    x = jnp.transpose(x_nchw, (0, 2, 3, 1))                   # NCHW -> NHWC
    n, h, w, cin = x.shape
    cout = params["conv1_w"].shape[-1]
    assert cout % groups == 0
    cin_p, cout_p = _round_up(cin, _LANE), _round_up(cout, _LANE)
    th = _pick_tile_h(h, w)
    count = h * w * (cout // groups)

    # lane-dense channel padding; zero-padded weights keep padded channels at 0.
    x_cd = jnp.pad(x.astype(compute_dtype),
                   ((0, 0), (0, 0), (0, 0), (0, cin_p - cin)))

    # conv1 (+ fused GroupNorm statistics); padding handled in-kernel.
    w1 = _pad_hwio(params["conv1_w"], cin_p, cout_p).reshape(9 * cin_p, cout_p)
    b1 = _pad_vec(params["conv1_b"], cout_p).reshape(1, cout_p).astype(jnp.float32)
    h1, s1a, s2a = conv3x3_gn(x_cd, w1.astype(compute_dtype), b1,
                              affine=None, tile_h=th, out_dtype=compute_dtype)

    # time_mlp: Linear(SiLU(t)) -> (scale, shift)   [plain JAX, O(N*C)]
    emb = (jnp.dot(jax.nn.silu(t).astype(compute_dtype),
                   params["time_w"].astype(compute_dtype),
                   preferred_element_type=jnp.float32) + params["time_b"])
    scale, shift = emb[:, :cout], emb[:, cout:]

    # GN1 + FiLM folded into per-(n, c) affine; applied inside conv2's prologue.
    a1, b1f = _gn_fold_affine(s1a, s2a, params["gn_gamma"], params["gn_beta"],
                              groups=groups, c_real=cout, c_pad=cout_p,
                              count=count, eps=eps, scale=scale, shift=shift)

    # conv2 with GN1-apply + FiLM + SiLU fused into its prologue.
    w2 = _pad_hwio(params["conv2_w"], cout_p, cout_p).reshape(9 * cout_p, cout_p)
    b2 = _pad_vec(params["conv2_b"], cout_p).reshape(1, cout_p).astype(jnp.float32)
    h2, s1b, s2b = conv3x3_gn(h1, w2.astype(compute_dtype), b2,
                              affine=(a1, b1f), tile_h=th, out_dtype=compute_dtype)

    # GN2 (the module reuses self.norm -> same gamma/beta) -> SiLU -> + residual.
    a2, b2f = _gn_fold_affine(s1b, s2b, params["gn_gamma"], params["gn_beta"],
                              groups=groups, c_real=cout, c_pad=cout_p,
                              count=count, eps=eps)

    if cin != cout:
        rw = _pad_mat(params["res_w"], cin_p, cout_p).astype(compute_dtype)
        rb = _pad_vec(params["res_b"], cout_p).reshape(1, cout_p).astype(jnp.float32)
        res = ("conv", x_cd, rw, rb)
    else:
        res = ("identity", x_cd)

    out_p = gn_silu_residual(h2, a2, b2f, tile_h=th, out_dtype=x.dtype, res=res)
    out = out_p[..., :cout]                                   # drop channel padding
    return jnp.transpose(out, (0, 3, 1, 2))                   # NHWC -> NCHW


# --------------------------- params & reference ------------------------------

def init_params(key, cin, cout, tdim, groups):
    ks = jax.random.split(key, 10)
    p = {"groups": groups}
    p["conv1_w"] = 0.1 * jax.random.normal(ks[0], (3, 3, cin, cout), jnp.float32)
    p["conv1_b"] = 0.05 * jax.random.normal(ks[1], (cout,), jnp.float32)
    p["conv2_w"] = 0.1 * jax.random.normal(ks[2], (3, 3, cout, cout), jnp.float32)
    p["conv2_b"] = 0.05 * jax.random.normal(ks[3], (cout,), jnp.float32)
    p["time_w"] = 0.1 * jax.random.normal(ks[4], (tdim, 2 * cout), jnp.float32)
    p["time_b"] = 0.05 * jax.random.normal(ks[5], (2 * cout,), jnp.float32)
    p["gn_gamma"] = 1.0 + 0.1 * jax.random.normal(ks[6], (cout,), jnp.float32)
    p["gn_beta"] = 0.05 * jax.random.normal(ks[7], (cout,), jnp.float32)
    p["res_w"] = 0.1 * jax.random.normal(ks[8], (cin, cout), jnp.float32)
    p["res_b"] = 0.05 * jax.random.normal(ks[9], (cout,), jnp.float32)
    return p


def _gn_affine_ref(h_f32, gamma, beta, groups, eps, scale=None, shift=None):
    n, hh, ww, c = h_f32.shape
    cpg = c // groups
    xg = h_f32.reshape(n, hh, ww, groups, cpg)
    mean_g = xg.mean(axis=(1, 2, 4))
    var_g = xg.var(axis=(1, 2, 4))
    inv_c = jnp.repeat(lax.rsqrt(var_g + eps), cpg, axis=-1)
    mean_c = jnp.repeat(mean_g, cpg, axis=-1)
    a = inv_c * gamma[None]
    b = beta[None] - mean_c * a
    if scale is not None:
        a = a * (scale + 1.0)
        b = b * (scale + 1.0) + shift
    return a, b


def reference_forward(params, x_nchw, t, compute_dtype=jnp.bfloat16):
    """Pure-JAX reference with the same precision policy as the Pallas path."""
    groups = params["groups"]
    eps = 1e-5
    x = jnp.transpose(x_nchw, (0, 2, 3, 1))
    n, h, w, cin = x.shape
    cout = params["conv1_w"].shape[-1]
    conv = functools.partial(
        lax.conv_general_dilated, window_strides=(1, 1), padding="SAME",
        dimension_numbers=("NHWC", "HWIO", "NHWC"),
        preferred_element_type=jnp.float32)
    x_cd = x.astype(compute_dtype)

    h1 = conv(x_cd, params["conv1_w"].astype(compute_dtype)) + params["conv1_b"]
    emb = (jnp.dot(jax.nn.silu(t).astype(compute_dtype),
                   params["time_w"].astype(compute_dtype),
                   preferred_element_type=jnp.float32) + params["time_b"])
    scale, shift = emb[:, :cout], emb[:, cout:]
    a1, b1 = _gn_affine_ref(h1, params["gn_gamma"], params["gn_beta"], groups, eps,
                            scale=scale, shift=shift)
    h1 = h1.astype(compute_dtype)                 # kernel stores h1 in compute_dtype
    act1 = jax.nn.silu(h1.astype(jnp.float32) * a1[:, None, None, :]
                       + b1[:, None, None, :]).astype(compute_dtype)

    h2 = conv(act1, params["conv2_w"].astype(compute_dtype)) + params["conv2_b"]
    a2, b2 = _gn_affine_ref(h2, params["gn_gamma"], params["gn_beta"], groups, eps)
    h2 = h2.astype(compute_dtype)                 # kernel stores h2 in compute_dtype
    y = jax.nn.silu(h2.astype(jnp.float32) * a2[:, None, None, :]
                    + b2[:, None, None, :])

    if cin != cout:
        res = (jnp.dot(x_cd.reshape(n * h * w, cin),
                       params["res_w"].astype(compute_dtype),
                       preferred_element_type=jnp.float32)
               + params["res_b"]).reshape(n, h, w, cout)
    else:
        res = x_cd.astype(jnp.float32)
    return jnp.transpose(y + res, (0, 3, 1, 2))


# --------------------------- main ---------------------------------------------

if __name__ == "__main__":
    key = jax.random.PRNGKey(0)
    kx, kt, kp = jax.random.split(key, 3)

    N, Cin, H, W = 2, 4, 16, 16
    Cout, Tdim, groups = 8, 32, 4

    x = jax.random.normal(kx, (N, Cin, H, W), jnp.float32)    # PyTorch NCHW layout
    t = jax.random.normal(kt, (N, Tdim), jnp.float32)
    params = init_params(kp, Cin, Cout, Tdim, groups)

    out = jax.block_until_ready(resnet_block_forward(params, x, t))
    ref = jax.block_until_ready(reference_forward(params, x, t))

    assert out.shape == (N, Cout, H, W), out.shape
    err = jnp.abs(out - ref)
    max_err = float(jnp.max(err))
    mean_err = float(jnp.mean(err))
    # bf16 intermediates can flip a few roundings vs. the reference; real bugs
    # produce O(0.1-1) errors, so these bounds still discriminate sharply.
    assert max_err < 2e-2, f"kernel/reference mismatch: max_err={max_err}"
    assert mean_err < 2e-3, f"kernel/reference mismatch: mean_err={mean_err}"
    print("KERNEL_OK")
</pallas_src>

<mosaic_0001>
module attributes {stable_mosaic.version = 11 : i64} {
  func.func @_conv3x3_gn_kernel(%arg0: i32, %arg1: i32, %arg2: memref<1x16x16x128xbf16, #tpu.memory_space<vmem>>, %arg3: memref<1152x128xbf16, #tpu.memory_space<vmem>>, %arg4: memref<1x128xf32, #tpu.memory_space<vmem>>, %arg5: memref<1x16x16x128xbf16, #tpu.memory_space<vmem>>, %arg6: memref<1x1x128xf32, #tpu.memory_space<vmem>>, %arg7: memref<1x1x128xf32, #tpu.memory_space<vmem>>, %arg8: memref<18x18x128xbf16, #tpu.memory_space<vmem>>, %arg9: memref<256x1152xbf16, #tpu.memory_space<vmem>>) attributes {dimension_semantics = [#tpu.dimension_semantics<parallel>, #tpu.dimension_semantics<arbitrary>], iteration_bounds = array<i64: 2, 1>, scalar_prefetch = 0 : i64, scratch_operands = 2 : i64, tpu.core_type = #tpu.core_type<tc>, window_params = [{transform_indices = @transform_0, window_bounds = array<i64: 1, 16, 16, 128>}, {pipeline_mode = #tpu.pipeline_mode<synchronous>, transform_indices = @transform_1, window_bounds = array<i64: 1152, 128>}, {pipeline_mode = #tpu.pipeline_mode<synchronous>, transform_indices = @transform_2, window_bounds = array<i64: 1, 128>}, {transform_indices = @transform_3, window_bounds = array<i64: 1, 16, 16, 128>}, {transform_indices = @transform_4, window_bounds = array<i64: 1, 1, 128>}, {transform_indices = @transform_5, window_bounds = array<i64: 1, 1, 128>}]} {
    %c16_i32 = arith.constant 16 : i32
    %0 = arith.muli %arg1, %c16_i32 : i32
    %1 = tpu.assume_multiple %0, 8 : i32
    %cst = arith.constant 0.000000e+00 : bf16
    %2 = vector.broadcast %cst : bf16 to vector<18x1x128xbf16>
    %c0 = arith.constant 0 : index
    %c0_0 = arith.constant 0 : index
    %c0_1 = arith.constant 0 : index
    %3 = vector.load %arg8[%c0, %c0_0, %c0_1] : memref<18x18x128xbf16, #tpu.memory_space<vmem>>, vector<18x1x128xbf16>
    tpu.vector_store %arg8[%c0, %c0_0, %c0_1], %2 {strides = array<i32>} : memref<18x18x128xbf16, #tpu.memory_space<vmem>>, vector<18x1x128xbf16>,
    %c0_2 = arith.constant 0 : index
    %c17 = arith.constant 17 : index
    %c0_3 = arith.constant 0 : index
    %4 = vector.load %arg8[%c0_2, %c17, %c0_3] : memref<18x18x128xbf16, #tpu.memory_space<vmem>>, vector<18x1x128xbf16>
    tpu.vector_store %arg8[%c0_2, %c17, %c0_3], %2 {strides = array<i32>} : memref<18x18x128xbf16, #tpu.memory_space<vmem>>, vector<18x1x128xbf16>,
    %c0_4 = arith.constant 0 : index
    %5 = arith.index_cast %1 : i32 to index
    %c0_5 = arith.constant 0 : index
    %c0_6 = arith.constant 0 : index
    %6 = vector.load %arg2[%c0_4, %5, %c0_5, %c0_6] : memref<1x16x16x128xbf16, #tpu.memory_space<vmem>>, vector<1x16x16x128xbf16>
    %7 = vector.shape_cast %6 : vector<1x16x16x128xbf16> to vector<16x16x128xbf16>
    %c1 = arith.constant 1 : index
    %c1_7 = arith.constant 1 : index
    %c0_8 = arith.constant 0 : index
    %8 = vector.load %arg8[%c1, %c1_7, %c0_8] : memref<18x18x128xbf16, #tpu.memory_space<vmem>>, vector<16x16x128xbf16>
    tpu.vector_store %arg8[%c1, %c1_7, %c0_8], %7 {strides = array<i32>} : memref<18x18x128xbf16, #tpu.memory_space<vmem>>, vector<16x16x128xbf16>,
    %c1_i32 = arith.constant 1 : i32
    %9 = arith.subi %1, %c1_i32 : i32
    %c0_i32 = arith.constant 0 : i32
    %10 = arith.maxsi %9, %c0_i32 : i32
    %c0_9 = arith.constant 0 : index
    %11 = arith.index_cast %10 : i32 to index
    %c0_10 = arith.constant 0 : index
    %c0_11 = arith.constant 0 : index
    %12 = vector.load %arg2[%c0_9, %11, %c0_10, %c0_11] : memref<1x16x16x128xbf16, #tpu.memory_space<vmem>>, vector<1x1x16x128xbf16>
    %13 = vector.shape_cast %12 : vector<1x1x16x128xbf16> to vector<1x16x128xbf16>
    %c0_i32_12 = arith.constant 0 : i32
    %14 = arith.cmpi sgt, %arg1, %c0_i32_12 : i32
    %cst_13 = arith.constant 0.000000e+00 : bf16
    %15 = vector.broadcast %cst_13 : bf16 to vector<1x16x128xbf16>
    %16 = arith.select %14, %13, %15 : vector<1x16x128xbf16>
    %c0_14 = arith.constant 0 : index
    %c1_15 = arith.constant 1 : index
    %c0_16 = arith.constant 0 : index
    %17 = vector.load %arg8[%c0_14, %c1_15, %c0_16] : memref<18x18x128xbf16, #tpu.memory_space<vmem>>, vector<1x16x128xbf16>
    tpu.vector_store %arg8[%c0_14, %c1_15, %c0_16], %16 {strides = array<i32>} : memref<18x18x128xbf16, #tpu.memory_space<vmem>>, vector<1x16x128xbf16>,
    %c16_i32_17 = arith.constant 16 : i32
    %18 = arith.addi %1, %c16_i32_17 : i32
    %c15_i32 = arith.constant 15 : i32
    %19 = arith.minsi %18, %c15_i32 : i32
    %c0_18 = arith.constant 0 : index
    %20 = arith.index_cast %19 : i32 to index
    %c0_19 = arith.constant 0 : index
    %c0_20 = arith.constant 0 : index
    %21 = vector.load %arg2[%c0_18, %20, %c0_19, %c0_20] : memref<1x16x16x128xbf16, #tpu.memory_space<vmem>>, vector<1x1x16x128xbf16>
    %22 = vector.shape_cast %21 : vector<1x1x16x128xbf16> to vector<1x16x128xbf16>
    %c0_i32_21 = arith.constant 0 : i32
    %23 = arith.cmpi slt, %arg1, %c0_i32_21 : i32
    %cst_22 = arith.constant 0.000000e+00 : bf16
    %24 = vector.broadcast %cst_22 : bf16 to vector<1x16x128xbf16>
    %25 = arith.select %23, %22, %24 : vector<1x16x128xbf16>
    %c17_23 = arith.constant 17 : index
    %c1_24 = arith.constant 1 : index
    %c0_25 = arith.constant 0 : index
    %26 = vector.load %arg8[%c17_23, %c1_24, %c0_25] : memref<18x18x128xbf16, #tpu.memory_space<vmem>>, vector<1x16x128xbf16>
    tpu.vector_store %arg8[%c17_23, %c1_24, %c0_25], %25 {strides = array<i32>} : memref<18x18x128xbf16, #tpu.memory_space<vmem>>, vector<1x16x128xbf16>,
    %c0_26 = arith.constant 0 : index
    %c0_27 = arith.constant 0 : index
    %c0_28 = arith.constant 0 : index
    %27 = vector.load %arg8[%c0_26, %c0_27, %c0_28] : memref<18x18x128xbf16, #tpu.memory_space<vmem>>, vector<16x16x128xbf16>
    %28 = vector.shape_cast %27 : vector<16x16x128xbf16> to vector<256x128xbf16>
    %c0_29 = arith.constant 0 : index
    %c0_30 = arith.constant 0 : index
    %29 = vector.load %arg9[%c0_29, %c0_30] : memref<256x1152xbf16, #tpu.memory_space<vmem>>, vector<256x128xbf16>
    tpu.vector_store %arg9[%c0_29, %c0_30], %28 {strides = array<i32>} : memref<256x1152xbf16, #tpu.memory_space<vmem>>, vector<256x128xbf16>,
    %c0_31 = arith.constant 0 : index
    %c1_32 = arith.constant 1 : index
    %c0_33 = arith.constant 0 : index
    %30 = vector.load %arg8[%c0_31, %c1_32, %c0_33] : memref<18x18x128xbf16, #tpu.memory_space<vmem>>, vector<16x16x128xbf16>
    %31 = vector.shape_cast %30 : vector<16x16x128xbf16> to vector<256x128xbf16>
    %c0_34 = arith.constant 0 : index
    %c128 = arith.constant 128 : index
    %32 = vector.load %arg9[%c0_34, %c128] : memref<256x1152xbf16, #tpu.memory_space<vmem>>, vector<256x128xbf16>
    tpu.vector_store %arg9[%c0_34, %c128], %31 {strides = array<i32>} : memref<256x1152xbf16, #tpu.memory_space<vmem>>, vector<256x128xbf16>,
    %c0_35 = arith.constant 0 : index
    %c2 = arith.constant 2 : index
    %c0_36 = arith.constant 0 : index
    %33 = vector.load %arg8[%c0_35, %c2, %c0_36] : memref<18x18x128xbf16, #tpu.memory_space<vmem>>, vector<16x16x128xbf16>
    %34 = vector.shape_cast %33 : vector<16x16x128xbf16> to vector<256x128xbf16>
    %c0_37 = arith.constant 0 : index
    %c256 = arith.constant 256 : index
    %35 = vector.load %arg9[%c0_37, %c256] : memref<256x1152xbf16, #tpu.memory_space<vmem>>, vector<256x128xbf16>
    tpu.vector_store %arg9[%c0_37, %c256], %34 {strides = array<i32>} : memref<256x1152xbf16, #tpu.memory_space<vmem>>, vector<256x128xbf16>,
    %c1_38 = arith.constant 1 : index
    %c0_39 = arith.constant 0 : index
    %c0_40 = arith.constant 0 : index
    %36 = vector.load %arg8[%c1_38, %c0_39, %c0_40] : memref<18x18x128xbf16, #tpu.memory_space<vmem>>, vector<16x16x128xbf16>
    %37 = vector.shape_cast %36 : vector<16x16x128xbf16> to vector<256x128xbf16>
    %c0_41 = arith.constant 0 : index
    %c384 = arith.constant 384 : index
    %38 = vector.load %arg9[%c0_41, %c384] : memref<256x1152xbf16, #tpu.memory_space<vmem>>, vector<256x128xbf16>
    tpu.vector_store %arg9[%c0_41, %c384], %37 {strides = array<i32>} : memref<256x1152xbf16, #tpu.memory_space<vmem>>, vector<256x128xbf16>,
    %c1_42 = arith.constant 1 : index
    %c1_43 = arith.constant 1 : index
    %c0_44 = arith.constant 0 : index
    %39 = vector.load %arg8[%c1_42, %c1_43, %c0_44] : memref<18x18x128xbf16, #tpu.memory_space<vmem>>, vector<16x16x128xbf16>
    %40 = vector.shape_cast %39 : vector<16x16x128xbf16> to vector<256x128xbf16>
    %c0_45 = arith.constant 0 : index
    %c512 = arith.constant 512 : index
    %41 = vector.load %arg9[%c0_45, %c512] : memref<256x1152xbf16, #tpu.memory_space<vmem>>, vector<256x128xbf16>
    tpu.vector_store %arg9[%c0_45, %c512], %40 {strides = array<i32>} : memref<256x1152xbf16, #tpu.memory_space<vmem>>, vector<256x128xbf16>,
    %c1_46 = arith.constant 1 : index
    %c2_47 = arith.constant 2 : index
    %c0_48 = arith.constant 0 : index
    %42 = vector.load %arg8[%c1_46, %c2_47, %c0_48] : memref<18x18x128xbf16, #tpu.memory_space<vmem>>, vector<16x16x128xbf16>
    %43 = vector.shape_cast %42 : vector<16x16x128xbf16> to vector<256x128xbf16>
    %c0_49 = arith.constant 0 : index
    %c640 = arith.constant 640 : index
    %44 = vector.load %arg9[%c0_49, %c640] : memref<256x1152xbf16, #tpu.memory_space<vmem>>, vector<256x128xbf16>
    tpu.vector_store %arg9[%c0_49, %c640], %43 {strides = array<i32>} : memref<256x1152xbf16, #tpu.memory_space<vmem>>, vector<256x128xbf16>,
    %c2_50 = arith.constant 2 : index
    %c0_51 = arith.constant 0 : index
    %c0_52 = arith.constant 0 : index
    %45 = vector.load %arg8[%c2_50, %c0_51, %c0_52] : memref<18x18x128xbf16, #tpu.memory_space<vmem>>, vector<16x16x128xbf16>
    %46 = vector.shape_cast %45 : vector<16x16x128xbf16> to vector<256x128xbf16>
    %c0_53 = arith.constant 0 : index
    %c768 = arith.constant 768 : index
    %47 = vector.load %arg9[%c0_53, %c768] : memref<256x1152xbf16, #tpu.memory_space<vmem>>, vector<256x128xbf16>
    tpu.vector_store %arg9[%c0_53, %c768], %46 {strides = array<i32>} : memref<256x1152xbf16, #tpu.memory_space<vmem>>, vector<256x128xbf16>,
    %c2_54 = arith.constant 2 : index
    %c1_55 = arith.constant 1 : index
    %c0_56 = arith.constant 0 : index
    %48 = vector.load %arg8[%c2_54, %c1_55, %c0_56] : memref<18x18x128xbf16, #tpu.memory_space<vmem>>, vector<16x16x128xbf16>
    %49 = vector.shape_cast %48 : vector<16x16x128xbf16> to vector<256x128xbf16>
    %c0_57 = arith.constant 0 : index
    %c896 = arith.constant 896 : index
    %50 = vector.load %arg9[%c0_57, %c896] : memref<256x1152xbf16, #tpu.memory_space<vmem>>, vector<256x128xbf16>
    tpu.vector_store %arg9[%c0_57, %c896], %49 {strides = array<i32>} : memref<256x1152xbf16, #tpu.memory_space<vmem>>, vector<256x128xbf16>,
    %c2_58 = arith.constant 2 : index
    %c2_59 = arith.constant 2 : index
    %c0_60 = arith.constant 0 : index
    %51 = vector.load %arg8[%c2_58, %c2_59, %c0_60] : memref<18x18x128xbf16, #tpu.memory_space<vmem>>, vector<16x16x128xbf16>
    %52 = vector.shape_cast %51 : vector<16x16x128xbf16> to vector<256x128xbf16>
    %c0_61 = arith.constant 0 : index
    %c1024 = arith.constant 1024 : index
    %53 = vector.load %arg9[%c0_61, %c1024] : memref<256x1152xbf16, #tpu.memory_space<vmem>>, vector<256x128xbf16>
    tpu.vector_store %arg9[%c0_61, %c1024], %52 {strides = array<i32>} : memref<256x1152xbf16, #tpu.memory_space<vmem>>, vector<256x128xbf16>,
    %c0_62 = arith.constant 0 : index
    %c0_63 = arith.constant 0 : index
    %54 = vector.load %arg9[%c0_62, %c0_63] : memref<256x1152xbf16, #tpu.memory_space<vmem>>, vector<256x1152xbf16>
    %c0_64 = arith.constant 0 : index
    %c0_65 = arith.constant 0 : index
    %55 = vector.load %arg3[%c0_64, %c0_65] : memref<1152x128xbf16, #tpu.memory_space<vmem>>, vector<1152x128xbf16>
    %cst_66 = arith.constant dense<0.000000e+00> : vector<256x128xf32>
    %56 = tpu.matmul %54, %55, %cst_66 {dimension_numbers = #tpu.dot_dimension_numbers<[1], [0], [0], [1], [0, 0, 1, 1], [], []>} : vector<256x1152xbf16>, vector<1152x128xbf16>, vector<256x128xf32> -> vector<256x128xf32>
    %c0_67 = arith.constant 0 : index
    %c0_68 = arith.constant 0 : index
    %57 = vector.load %arg4[%c0_67, %c0_68] : memref<1x128xf32, #tpu.memory_space<vmem>>, vector<1x128xf32>
    %58 = vector.broadcast %57 : vector<1x128xf32> to vector<256x128xf32>
    %59 = arith.addf %56, %58 : vector<256x128xf32>
    %60 = vector.shape_cast %59 : vector<256x128xf32> to vector<1x16x16x128xf32>
    %61 = arith.truncf %60 : vector<1x16x16x128xf32> to vector<1x16x16x128xbf16>
    %c0_69 = arith.constant 0 : index
    %c0_70 = arith.constant 0 : index
    %c0_71 = arith.constant 0 : index
    %c0_72 = arith.constant 0 : index
    %62 = vector.load %arg5[%c0_69, %c0_70, %c0_71, %c0_72] : memref<1x16x16x128xbf16, #tpu.memory_space<vmem>>, vector<1x16x16x128xbf16>
    tpu.vector_store %arg5[%c0_69, %c0_70, %c0_71, %c0_72], %61 {strides = array<i32>} : memref<1x16x16x128xbf16, #tpu.memory_space<vmem>>, vector<1x16x16x128xbf16>,
    %c0_i32_73 = arith.constant 0 : i32
    %63 = arith.cmpi eq, %arg1, %c0_i32_73 : i32
    %64 = arith.extui %63 : i1 to i32
    %c0_i32_74 = arith.constant 0 : i32
    %65 = arith.cmpi ne, %64, %c0_i32_74 : i32
    scf.if %65 {
      %cst_89 = arith.constant 0.000000e+00 : f32
      %77 = vector.broadcast %cst_89 : f32 to vector<1x1x128xf32>
      %c0_90 = arith.constant 0 : index
      %c0_91 = arith.constant 0 : index
      %c0_92 = arith.constant 0 : index
      %78 = vector.load %arg6[%c0_90, %c0_91, %c0_92] : memref<1x1x128xf32, #tpu.memory_space<vmem>>, vector<1x1x128xf32>
      tpu.vector_store %arg6[%c0_90, %c0_91, %c0_92], %77 {strides = array<i32>} : memref<1x1x128xf32, #tpu.memory_space<vmem>>, vector<1x1x128xf32>,
      %cst_93 = arith.constant 0.000000e+00 : f32
      %79 = vector.broadcast %cst_93 : f32 to vector<1x1x128xf32>
      %c0_94 = arith.constant 0 : index
      %c0_95 = arith.constant 0 : index
      %c0_96 = arith.constant 0 : index
      %80 = vector.load %arg7[%c0_94, %c0_95, %c0_96] : memref<1x1x128xf32, #tpu.memory_space<vmem>>, vector<1x1x128xf32>
      tpu.vector_store %arg7[%c0_94, %c0_95, %c0_96], %79 {strides = array<i32>} : memref<1x1x128xf32, #tpu.memory_space<vmem>>, vector<1x1x128xf32>,
    } else {
    }
    %c0_75 = arith.constant 0 : index
    %c0_76 = arith.constant 0 : index
    %c0_77 = arith.constant 0 : index
    %66 = vector.load %arg6[%c0_75, %c0_76, %c0_77] : memref<1x1x128xf32, #tpu.memory_space<vmem>>, vector<1x1x128xf32>
    %cst_78 = arith.constant dense<0.000000e+00> : vector<128xf32>
    %67 = vector.multi_reduction <add>, %59, %cst_78 [0] : vector<256x128xf32> to vector<128xf32>
    %68 = vector.shape_cast %67 : vector<128xf32> to vector<1x1x128xf32>
    %69 = arith.addf %66, %68 : vector<1x1x128xf32>
    %c0_79 = arith.constant 0 : index
    %c0_80 = arith.constant 0 : index
    %c0_81 = arith.constant 0 : index
    %70 = vector.load %arg6[%c0_79, %c0_80, %c0_81] : memref<1x1x128xf32, #tpu.memory_space<vmem>>, vector<1x1x128xf32>
    tpu.vector_store %arg6[%c0_79, %c0_80, %c0_81], %69 {strides = array<i32>} : memref<1x1x128xf32, #tpu.memory_space<vmem>>, vector<1x1x128xf32>,
    %c0_82 = arith.constant 0 : index
    %c0_83 = arith.constant 0 : index
    %c0_84 = arith.constant 0 : index
    %71 = vector.load %arg7[%c0_82, %c0_83, %c0_84] : memref<1x1x128xf32, #tpu.memory_space<vmem>>, vector<1x1x128xf32>
    %72 = arith.mulf %59, %59 : vector<256x128xf32>
    %cst_85 = arith.constant dense<0.000000e+00> : vector<128xf32>
    %73 = vector.multi_reduction <add>, %72, %cst_85 [0] : vector<256x128xf32> to vector<128xf32>
    %74 = vector.shape_cast %73 : vector<128xf32> to vector<1x1x128xf32>
    %75 = arith.addf %71, %74 : vector<1x1x128xf32>
    %c0_86 = arith.constant 0 : index
    %c0_87 = arith.constant 0 : index
    %c0_88 = arith.constant 0 : index
    %76 = vector.load %arg7[%c0_86, %c0_87, %c0_88] : memref<1x1x128xf32, #tpu.memory_space<vmem>>, vector<1x1x128xf32>
    tpu.vector_store %arg7[%c0_86, %c0_87, %c0_88], %75 {strides = array<i32>} : memref<1x1x128xf32, #tpu.memory_space<vmem>>, vector<1x1x128xf32>,
    return
  }
  func.func @transform_0(%arg0: i32, %arg1: i32) -> (i32, i32, i32, i32) {
    %c0_i32 = arith.constant 0 : i32
    %c0_i32_0 = arith.constant 0 : i32
    %c0_i32_1 = arith.constant 0 : i32
    %c0_i32_2 = arith.constant 0 : i32
    return %arg0, %c0_i32, %c0_i32_0, %c0_i32_1 : i32, i32, i32, i32
  }
  func.func @transform_1(%arg0: i32, %arg1: i32) -> (i32, i32) {
    %c0_i32 = arith.constant 0 : i32
    %c0_i32_0 = arith.constant 0 : i32
    %c0_i32_1 = arith.constant 0 : i32
    return %c0_i32, %c0_i32_0 : i32, i32
  }
  func.func @transform_2(%arg0: i32, %arg1: i32) -> (i32, i32) {
    %c0_i32 = arith.constant 0 : i32
    %c0_i32_0 = arith.constant 0 : i32
    %c0_i32_1 = arith.constant 0 : i32
    return %c0_i32, %c0_i32_0 : i32, i32
  }
  func.func @transform_3(%arg0: i32, %arg1: i32) -> (i32, i32, i32, i32) {
    %c0_i32 = arith.constant 0 : i32
    %c0_i32_0 = arith.constant 0 : i32
    %c0_i32_1 = arith.constant 0 : i32
    return %arg0, %arg1, %c0_i32, %c0_i32_0 : i32, i32, i32, i32
  }
  func.func @transform_4(%arg0: i32, %arg1: i32) -> (i32, i32, i32) {
    %c0_i32 = arith.constant 0 : i32
    %c0_i32_0 = arith.constant 0 : i32
    %c0_i32_1 = arith.constant 0 : i32
    return %arg0, %c0_i32, %c0_i32_0 : i32, i32, i32
  }
  func.func @transform_5(%arg0: i32, %arg1: i32) -> (i32, i32, i32) {
    %c0_i32 = arith.constant 0 : i32
    %c0_i32_0 = arith.constant 0 : i32
    %c0_i32_1 = arith.constant 0 : i32
    return %arg0, %c0_i32, %c0_i32_0 : i32, i32, i32
  }
}

</mosaic_0001>

<llo_original>
// kernel: tpu_custom_call.1
$region0: #{tpu_custom_call.1}
  #allocation0 [shape = 'u32[]', space=smem, size = 0x4, offset = 0x4, fixed_abs, tag = 'smem constant byte address 0x4 - core index']
  #allocation1 [shape = 'u32[144,128]{1,0:T(1,128)}', space=vmem, size = 0x12000, scoped, tag = 'internal scratch']
  #allocation2 [shape = 'bf16[18,18,128]{2,1,0:T(8,128)(2,1)}', space=vmem, size = 0x1b000, scoped, tag = 'scratch operand']
  #allocation3 [shape = 'bf16[256,1152]{1,0:T(16,128)(2,1)}', space=vmem, size = 0x90000, scoped, tag = 'scratch operand']
  %s0 = inlined_call_operand.hbm [shape: bf16[2,16,16,128], index: 0, kind: input, shape index: {}]
  %s1 = inlined_call_operand.hbm [shape: bf16[1152,128], index: 1, kind: input, shape index: {}]
  %s2 = inlined_call_operand.hbm [shape: f32[1,128], index: 2, kind: input, shape index: {}]
  %s3 = inlined_call_operand.hbm [shape: bf16[2,16,16,128], index: 3, kind: output, shape index: {0}]
  %s4 = inlined_call_operand.hbm [shape: f32[2,1,128], index: 4, kind: output, shape index: {1}]
  %s5 = inlined_call_operand.hbm [shape: f32[2,1,128], index: 5, kind: output, shape index: {2}]
  %6 = xla_tuple %s3, %s4, %s5
  %s7 = sld [smem:[#allocation0]]
  $region77: #{tpu_custom_call.1} parent=0
    _
  %s9 = ssub.s32 1, %s7
  %s10 = scalar_select 0, %s9, %s7
  $region1: #{tpu_custom_call.1} parent=0
    #allocation4 [shape = 'u8[131072]{0}', space=vmem, size = 0x20000, scoped, tag = 'input window, operand 0']
    #allocation5 [shape = 's32[2]{0}', space=sflag, size = 0x8, scoped, tag = 'scoped memory for tpu_custom_call.1']
    #allocation6 [shape = 's32[2]{0}', space=sflag, size = 0x8, scoped, tag = 'scoped memory for tpu_custom_call.1']
    #allocation7 [shape = 'u8[294912]{0}', space=vmem, size = 0x48000, scoped, tag = 'input window, operand 1, single buffered']
    #allocation8 [shape = 's32[1]{0}', space=sflag, size = 0x4, scoped, tag = 'scoped memory for tpu_custom_call.1']
    #allocation9 [shape = 'u8[512]{0}', space=vmem, size = 0x400, scoped, tag = 'input window, operand 2, single buffered']
    #allocation10 [shape = 'u8[131072]{0}', space=vmem, size = 0x20000, scoped, tag = 'output window, operand 0']
    #allocation11 [shape = 'u8[1024]{0}', space=vmem, size = 0x400, scoped, tag = 'output window, operand 1']
    #allocation12 [shape = 's32[2]{0}', space=sflag, size = 0x8, scoped, tag = 'scoped memory for tpu_custom_call.1']
    #allocation13 [shape = 'u8[1024]{0}', space=vmem, size = 0x400, scoped, tag = 'output window, operand 2']
    %11 = vsyncpa [#allocation5], 0
    %s12 = scalar_lea.sflag [#allocation5], 1
    %13 = vsyncpa %s12, 0
    %14 = vsyncpa [#allocation8], 0
    %15 = vsyncpa [#allocation6], 0
    %s16 = scalar_lea.sflag [#allocation6], 1
    %17 = vsyncpa %s16, 0
    %18 = vsyncpa [#allocation12], 0
    %s19 = scalar_lea.sflag [#allocation12], 1
    %20 = vsyncpa %s19, 0
    loop: start=0, step=1, limit=4
    $region2: #{tpu_custom_call.1} parent=1 // loop_pre_header
      _
    $region3: #{tpu_custom_call.1} parent=1 // loop_header
      %s22 = sphi 0, %s26
      %p23 = scmp.ge.s32.totalorder %s22, 4
      %s29 = sphi 0, %s41
      %s30 = sphi 0, %s37
      %s31 = sphi 0, %s29
      %s32 = sphi 0, %s30
      %s33 = sphi 0, %s31
      %s34 = sphi 0, %s32
      %s44 = sphi 0, %s46
      %s47 = sphi 0, %s44
      %s48 = sphi 0, %s47
      %s64 = sphi 0, %s48
      %s68 = sphi 0, %s68
      %s70 = sphi 0, %s68
      %s71 = sphi 0, %s70
      %s85 = sphi 0, %s71
      %s89 = sphi 0, %s89
      %s91 = sphi 0, %s89
      %s92 = sphi 0, %s91
      %s106 = sphi 0, %s92
      %s114 = sphi 0, %s116
      %s117 = sphi 0, %s114
      %s118 = sphi 0, %s117
      %s134 = sphi 0, %s118
      %s140 = sphi 0, %s142
      %s143 = sphi 0, %s140
      %s144 = sphi 0, %s143
      %s160 = sphi 0, %s144
      %s166 = sphi 0, %s168
      %s169 = sphi 0, %s166
      %s170 = sphi 0, %s169
      %s186 = sphi 0, %s170
    $region4: #{tpu_custom_call.1} parent=1 // loop_header_branch
      %25 = sbr.rel (%p23) target = $region8
    $region5: #{tpu_custom_call.1} parent=1 // loop_body
      %s27 = ssub.s32 %s22, 1
      %s28 = ssub.s32 %s22, 2
      %s35 = sadd.s32 1, %s30
      %p36 = scmp.ge.s32.totalorder %s35, 1
      %s37 = scalar_select %p36, 0, %s35
      %s38 = sadd.s32 1, %s29
      %s39 = scalar_select %p36, %s38, %s29
      %p40 = scmp.ge.s32.totalorder %s39, 2
      %s41 = scalar_select %p40, 0, %s39
      %s42 = ssub.s32 %s29, %s41
      %p43 = scmp.eq.s32.totalorder %s42, 0
      %s45 = sadd.s32 %s44, 1
      %s46 = scalar_select %p43, %s44, %s45
      %p49 = pneg %p43
      %p50 = scmp.eq.s32.totalorder %s22, 1
      %p51 = por %p49, %p50
      %p52 = scmp.ne.s32.totalorder %s44, %s47
      %p53 = scmp.eq.s32.totalorder %s22, 0
      %p54 = por %p52, %p53
      %p55 = scmp.ne.s32.totalorder %s44, %s47
      %p56 = scmp.eq.s32.totalorder %s27, 1
      %p57 = por %p55, %p56
      %p58 = scmp.ne.s32.totalorder %s47, %s48
      %p59 = scmp.eq.s32.totalorder %s27, 0
      %p60 = por %p58, %p59
      %p61 = scmp.ne.s32.totalorder %s47, %s48
      %p62 = scmp.eq.s32.totalorder %s28, 1
      %p63 = por %p61, %p62
      %p65 = scmp.ne.s32.totalorder %s48, %s64
      %p66 = scmp.eq.s32.totalorder %s28, 0
      %p67 = por %p65, %p66
      %s69 = sadd.s32 %s68, 1
      %p72 = scmp.eq.s32.totalorder %s22, 1
      %p73 = scmp.ne.s32.totalorder %s68, %s70
      %p74 = scmp.eq.s32.totalorder %s22, 0
      %p75 = por %p73, %p74
      %p76 = scmp.ne.s32.totalorder %s68, %s70
      %p77 = scmp.eq.s32.totalorder %s27, 1
      %p78 = por %p76, %p77
      %p79 = scmp.ne.s32.totalorder %s70, %s71
      %p80 = scmp.eq.s32.totalorder %s27, 0
      %p81 = por %p79, %p80
      %p82 = scmp.ne.s32.totalorder %s70, %s71
      %p83 = scmp.eq.s32.totalorder %s28, 1
      %p84 = por %p82, %p83
      %p86 = scmp.ne.s32.totalorder %s71, %s85
      %p87 = scmp.eq.s32.totalorder %s28, 0
      %p88 = por %p86, %p87
      %s90 = sadd.s32 %s89, 1
      %p93 = scmp.eq.s32.totalorder %s22, 1
      %p94 = scmp.ne.s32.totalorder %s89, %s91
      %p95 = scmp.eq.s32.totalorder %s22, 0
      %p96 = por %p94, %p95
      %p97 = scmp.ne.s32.totalorder %s89, %s91
      %p98 = scmp.eq.s32.totalorder %s27, 1
      %p99 = por %p97, %p98
      %p100 = scmp.ne.s32.totalorder %s91, %s92
      %p101 = scmp.eq.s32.totalorder %s27, 0
      %p102 = por %p100, %p101
      %p103 = scmp.ne.s32.totalorder %s91, %s92
      %p104 = scmp.eq.s32.totalorder %s28, 1
      %p105 = por %p103, %p104
      %p107 = scmp.ne.s32.totalorder %s92, %s106
      %p108 = scmp.eq.s32.totalorder %s28, 0
      %p109 = por %p107, %p108
      %s110 = ssub.s32 %s29, %s41
      %s111 = ssub.s32 %s30, %s37
      %s112 = sor.u32 %s110, %s111
      %p113 = scmp.eq.s32.totalorder %s112, 0
      %s115 = sadd.s32 %s114, 1
      %s116 = scalar_select %p113, %s114, %s115
      %p119 = pneg %p113
      %p120 = scmp.eq.s32.totalorder %s22, 1
      %p121 = por %p119, %p120
      %p122 = scmp.ne.s32.totalorder %s114, %s117
      %p123 = scmp.eq.s32.totalorder %s22, 0
      %p124 = por %p122, %p123
      %p125 = scmp.ne.s32.totalorder %s114, %s117
      %p126 = scmp.eq.s32.totalorder %s27, 1
      %p127 = por %p125, %p126
      %p128 = scmp.ne.s32.totalorder %s117, %s118
      %p129 = scmp.eq.s32.totalorder %s27, 0
      %p130 = por %p128, %p129
      %p131 = scmp.ne.s32.totalorder %s117, %s118
      %p132 = scmp.eq.s32.totalorder %s28, 1
      %p133 = por %p131, %p132
      %p135 = scmp.ne.s32.totalorder %s118, %s134
      %p136 = scmp.eq.s32.totalorder %s28, 0
      %p137 = por %p135, %p136
      %s138 = ssub.s32 %s29, %s41
      %p139 = scmp.eq.s32.totalorder %s138, 0
      %s141 = sadd.s32 %s140, 1
      %s142 = scalar_select %p139, %s140, %s141
      %p145 = pneg %p139
      %p146 = scmp.eq.s32.totalorder %s22, 1
      %p147 = por %p145, %p146
      %p148 = scmp.ne.s32.totalorder %s140, %s143
      %p149 = scmp.eq.s32.totalorder %s22, 0
      %p150 = por %p148, %p149
      %p151 = scmp.ne.s32.totalorder %s140, %s143
      %p152 = scmp.eq.s32.totalorder %s27, 1
      %p153 = por %p151, %p152
      %p154 = scmp.ne.s32.totalorder %s143, %s144
      %p155 = scmp.eq.s32.totalorder %s27, 0
      %p156 = por %p154, %p155
      %p157 = scmp.ne.s32.totalorder %s143, %s144
      %p158 = scmp.eq.s32.totalorder %s28, 1
      %p159 = por %p157, %p158
      %p161 = scmp.ne.s32.totalorder %s144, %s160
      %p162 = scmp.eq.s32.totalorder %s28, 0
      %p163 = por %p161, %p162
      %s164 = ssub.s32 %s29, %s41
      %p165 = scmp.eq.s32.totalorder %s164, 0
      %s167 = sadd.s32 %s166, 1
      %s168 = scalar_select %p165, %s166, %s167
      %p171 = pneg %p165
      %p172 = scmp.eq.s32.totalorder %s22, 1
      %p173 = por %p171, %p172
      %p174 = scmp.ne.s32.totalorder %s166, %s169
      %p175 = scmp.eq.s32.totalorder %s22, 0
      %p176 = por %p174, %p175
      %p177 = scmp.ne.s32.totalorder %s166, %s169
      %p178 = scmp.eq.s32.totalorder %s27, 1
      %p179 = por %p177, %p178
      %p180 = scmp.ne.s32.totalorder %s169, %s170
      %p181 = scmp.eq.s32.totalorder %s27, 0
      %p182 = por %p180, %p181
      %p183 = scmp.ne.s32.totalorder %s169, %s170
      %p184 = scmp.eq.s32.totalorder %s28, 1
      %p185 = por %p183, %p184
      %p187 = scmp.ne.s32.totalorder %s170, %s186
      %p188 = scmp.eq.s32.totalorder %s28, 0
      %p189 = por %p187, %p188
      %p190 = scmp.le.s32.totalorder 1, %s22
      %p191 = scmp.lt.s32.totalorder %s22, 3
      %p192 = pnand %p190, %p191
      %p193 = pneg %p192
      // Predicated region
      $region9: #{tpu_custom_call.1} parent=5 // pred_check
        _
      $region10: #{tpu_custom_call.1} parent=5 // pred_check_branch
        %195 = sbr.rel (%p192) target = $region12
      $region11: #{tpu_custom_call.1} parent=5 // pred_region
        %s196 = ssub.s32 %s22, 1
        // Predicated region
        $region13: #{tpu_custom_call.1} parent=11 // pred_check
          %p197 = pneg %p81
        $region14: #{tpu_custom_call.1} parent=11 // pred_check_branch
          %199 = sbr.rel (%p197) target = $region16
        $region15: #{tpu_custom_call.1} parent=11 // pred_region
          %s201 = ssub.s32 9216, 9216
          %202 = vsyncadd [#allocation8], %s201
          %s203 = sshll.u32 [#allocation7], 4
          %s204 = int_to_ptr.vmem [resolvable:$true] %s203
          %209 = dma.hbm_to_vmem [thread:$0]  %s1, 9216, %s204, [#allocation8], 64, 64, 4
        $region16: #{tpu_custom_call.1} parent=11 // pred_fallthru
          _
        // Predicated region
        $region17: #{tpu_custom_call.1} parent=11 // pred_check
          %p210 = pneg %p102
        $region18: #{tpu_custom_call.1} parent=11 // pred_check_branch
          %212 = sbr.rel (%p210) target = $region20
        $region19: #{tpu_custom_call.1} parent=11 // pred_region
          %s214 = ssub.s32 16, 16
          %215 = vsyncadd [#allocation8], %s214
          %s217 = sshll.u32 [#allocation9], 4
          %s218 = int_to_ptr.vmem [resolvable:$true] %s217
          %220 = dma.hbm_to_vmem [thread:$0]  %s2, 16, %s218, [#allocation8]
        $region20: #{tpu_custom_call.1} parent=11 // pred_fallthru
          _
      $region12: #{tpu_custom_call.1} parent=5 // pred_fallthru
        _
      %p221 = scmp.lt.s32.totalorder %s22, 2
      // Predicated region
      $region21: #{tpu_custom_call.1} parent=5 // pred_check
        %p222 = pneg %p221
      $region22: #{tpu_custom_call.1} parent=5 // pred_check_branch
        %224 = sbr.rel (%p222) target = $region24
      $region23: #{tpu_custom_call.1} parent=5 // pred_region
        // Predicated region
        $region25: #{tpu_custom_call.1} parent=23 // pred_check
          %p225 = pneg %p54
        $region26: #{tpu_custom_call.1} parent=23 // pred_check_branch
          %227 = sbr.rel (%p225) target = $region28
        $region27: #{tpu_custom_call.1} parent=23 // pred_region
          %s228 = sand.u32 %s44, 1
          %s229 = scalar_lea.sflag [#allocation5], %s228
          %s230 = sand.u32 %s44, 1
          %s231 = smul.addr %s230, 128
          %s232 = scalar_lea.vmem [#allocation4], %s231
          %s234 = ssub.s32 2048, 2048
          %235 = vsyncadd %s229, %s234
          %s236 = smul.addr %s29, 32
          %s237 = smul.addr %s236, 64
          %s238 = scalar_lea.hbm %s0, %s237
          %s239 = sshll.u32 %s232, 4
          %s240 = int_to_ptr.vmem [resolvable:$true] %s239
          %245 = dma.hbm_to_vmem [thread:$0]  %s238, 2048, %s240, %s229, 64, 64, 4
        $region28: #{tpu_custom_call.1} parent=23 // pred_fallthru
          _
      $region24: #{tpu_custom_call.1} parent=5 // pred_fallthru
        _
      %p246 = scmp.le.s32.totalorder 1, %s22
      %p247 = scmp.lt.s32.totalorder %s22, 3
      %p248 = pnand %p246, %p247
      %p249 = pneg %p248
      // Predicated region
      $region29: #{tpu_custom_call.1} parent=5 // pred_check
        _
      $region30: #{tpu_custom_call.1} parent=5 // pred_check_branch
        %251 = sbr.rel (%p248) target = $region32
      $region31: #{tpu_custom_call.1} parent=5 // pred_region
        %s252 = ssub.s32 %s22, 1
        %s253 = sand.u32 %s47, 1
        %s254 = scalar_lea.sflag [#allocation5], %s253
        %s255 = sand.u32 %s47, 1
        %s256 = smul.addr %s255, 128
        %s257 = scalar_lea.vmem [#allocation4], %s256
        // Predicated region
        $region33: #{tpu_custom_call.1} parent=31 // pred_check
          %p258 = pneg %p60
        $region34: #{tpu_custom_call.1} parent=31 // pred_check_branch
          %260 = sbr.rel (%p258) target = $region36
        $region35: #{tpu_custom_call.1} parent=31 // pred_region
          %261 = dma.done %s254, 2048
        $region36: #{tpu_custom_call.1} parent=31 // pred_fallthru
          _
        // Predicated region
        $region37: #{tpu_custom_call.1} parent=31 // pred_check
          %p262 = pneg %p81
        $region38: #{tpu_custom_call.1} parent=31 // pred_check_branch
          %264 = sbr.rel (%p262) target = $region40
        $region39: #{tpu_custom_call.1} parent=31 // pred_region
          %265 = dma.done [#allocation8], 9216
        $region40: #{tpu_custom_call.1} parent=31 // pred_fallthru
          _
        // Predicated region
        $region41: #{tpu_custom_call.1} parent=31 // pred_check
          %p266 = pneg %p102
        $region42: #{tpu_custom_call.1} parent=31 // pred_check_branch
          %268 = sbr.rel (%p266) target = $region44
        $region43: #{tpu_custom_call.1} parent=31 // pred_region
          %269 = dma.done [#allocation8], 16
        $region44: #{tpu_custom_call.1} parent=31 // pred_fallthru
          _
        %s270 = sand.u32 %s47, 1
        %s271 = scalar_lea.sflag [#allocation5], %s270
        %s272 = sand.u32 %s47, 1
        %s273 = smul.addr %s272, 128
        %s274 = scalar_lea.vmem [#allocation4], %s273
        %p275 = pneg %p60
        %p276 = pneg %p57
        %p277 = pneg %p81
        %p278 = pneg %p78
        %p279 = pneg %p102
        %p280 = pneg %p99
        %p281 = pneg %p130
        %p282 = pneg %p127
        %s283 = sand.u32 %s117, 1
        %s284 = scalar_lea.sflag [#allocation6], %s283
        %s285 = sand.u32 %s117, 1
        %s286 = smul.addr %s285, 128
        %s287 = scalar_lea.vmem [#allocation10], %s286
        %p288 = pneg %p156
        %p289 = pneg %p153
        %s290 = sand.u32 %s27, 1
        %s291 = scalar_lea.sflag [#allocation12], %s290
        %s292 = sand.u32 %s143, 1
        %s293 = scalar_lea.vmem [#allocation11], %s292
        %p294 = pneg %p182
        %p295 = pneg %p179
        %s296 = sand.u32 %s27, 1
        %s297 = scalar_lea.sflag [#allocation12], %s296
        %s298 = sand.u32 %s169, 1
        %s299 = scalar_lea.vmem [#allocation13], %s298
        %s300 = smul.u32 16, %s32
        %s302 = smul.u32 %s32, 16
        %vm303 = vcmask 1040384
        %vm304 = vsmask.f32 256
        %vm305 = vmand %vm303, %vm304
        %v306 = vld [vmem:[#allocation2] sm:$0x1]
        %v307 = vsel %vm305, 0, %v306
        %308 = vst [vmem:[#allocation2] sm:$0x1] %v307
        %v309 = vld [vmem:[#allocation2 + $0xc] sm:$0x1]
        %v310 = vsel %vm305, 0, %v309
        %311 = vst [vmem:[#allocation2 + $0xc] sm:$0x1] %v310
        %v312 = vld [vmem:[#allocation2 + $0x18] sm:$0x1]
        %v313 = vsel %vm305, 0, %v312
        %314 = vst [vmem:[#allocation2 + $0x18] sm:$0x1] %v313
        %v315 = vld [vmem:[#allocation2 + $0x24] sm:$0x1]
        %v316 = vsel %vm305, 0, %v315
        %317 = vst [vmem:[#allocation2 + $0x24] sm:$0x1] %v316
        %v318 = vld [vmem:[#allocation2 + $0x30] sm:$0x1]
        %v319 = vsel %vm305, 0, %v318
        %320 = vst [vmem:[#allocation2 + $0x30] sm:$0x1] %v319
        %v321 = vld [vmem:[#allocation2 + $0x3c] sm:$0x1]
        %v322 = vsel %vm305, 0, %v321
        %323 = vst [vmem:[#allocation2 + $0x3c] sm:$0x1] %v322
        %v324 = vld [vmem:[#allocation2 + $0x48] sm:$0x1]
        %v325 = vsel %vm305, 0, %v324
        %326 = vst [vmem:[#allocation2 + $0x48] sm:$0x1] %v325
        %v327 = vld [vmem:[#allocation2 + $0x54] sm:$0x1]
        %v328 = vsel %vm305, 0, %v327
        %329 = vst [vmem:[#allocation2 + $0x54] sm:$0x1] %v328
        %v330 = vld [vmem:[#allocation2 + $0x60] sm:$0x1]
        %v331 = vsel %vm305, 0, %v330
        %332 = vst [vmem:[#allocation2 + $0x60] sm:$0x1] %v331
        %v333 = vld [vmem:[#allocation2 + $0x6c] sm:$0x1]
        %v334 = vsel %vm305, 0, %v333
        %335 = vst [vmem:[#allocation2 + $0x6c] sm:$0x1] %v334
        %v336 = vld [vmem:[#allocation2 + $0x78] sm:$0x1]
        %v337 = vsel %vm305, 0, %v336
        %338 = vst [vmem:[#allocation2 + $0x78] sm:$0x1] %v337
        %v339 = vld [vmem:[#allocation2 + $0x84] sm:$0x1]
        %v340 = vsel %vm305, 0, %v339
        %341 = vst [vmem:[#allocation2 + $0x84] sm:$0x1] %v340
        %v342 = vld [vmem:[#allocation2 + $0x90] sm:$0x1]
        %v343 = vsel %vm305, 0, %v342
        %344 = vst [vmem:[#allocation2 + $0x90] sm:$0x1] %v343
        %v345 = vld [vmem:[#allocation2 + $0x9c] sm:$0x1]
        %v346 = vsel %vm305, 0, %v345
        %347 = vst [vmem:[#allocation2 + $0x9c] sm:$0x1] %v346
        %v348 = vld [vmem:[#allocation2 + $0xa8] sm:$0x1]
        %v349 = vsel %vm305, 0, %v348
        %350 = vst [vmem:[#allocation2 + $0xa8] sm:$0x1] %v349
        %v351 = vld [vmem:[#allocation2 + $0xb4] sm:$0x1]
        %v352 = vsel %vm305, 0, %v351
        %353 = vst [vmem:[#allocation2 + $0xb4] sm:$0x1] %v352
        %v354 = vld [vmem:[#allocation2 + $0xc0] sm:$0x1]
        %v355 = vsel %vm305, 0, %v354
        %356 = vst [vmem:[#allocation2 + $0xc0] sm:$0x1] %v355
        %v357 = vld [vmem:[#allocation2 + $0xcc] sm:$0x1]
        %v358 = vsel %vm305, 0, %v357
        %359 = vst [vmem:[#allocation2 + $0xcc] sm:$0x1] %v358
        %vm360 = vsmask.f32 7938
        %vm361 = vmand %vm303, %vm360
        %v362 = vld [vmem:[#allocation2 + $0x8] sm:$0x1]
        %v363 = vsel %vm361, 0, %v362
        %364 = vst [vmem:[#allocation2 + $0x8] sm:$0x1] %v363
        %v365 = vld [vmem:[#allocation2 + $0x14] sm:$0x1]
        %v366 = vsel %vm361, 0, %v365
        %367 = vst [vmem:[#allocation2 + $0x14] sm:$0x1] %v366
        %v368 = vld [vmem:[#allocation2 + $0x20] sm:$0x1]
        %v369 = vsel %vm361, 0, %v368
        %370 = vst [vmem:[#allocation2 + $0x20] sm:$0x1] %v369
        %v371 = vld [vmem:[#allocation2 + $0x2c] sm:$0x1]
        %v372 = vsel %vm361, 0, %v371
        %373 = vst [vmem:[#allocation2 + $0x2c] sm:$0x1] %v372
        %v374 = vld [vmem:[#allocation2 + $0x38] sm:$0x1]
        %v375 = vsel %vm361, 0, %v374
        %376 = vst [vmem:[#allocation2 + $0x38] sm:$0x1] %v375
        %v377 = vld [vmem:[#allocation2 + $0x44] sm:$0x1]
        %v378 = vsel %vm361, 0, %v377
        %379 = vst [vmem:[#allocation2 + $0x44] sm:$0x1] %v378
        %v380 = vld [vmem:[#allocation2 + $0x50] sm:$0x1]
        %v381 = vsel %vm361, 0, %v380
        %382 = vst [vmem:[#allocation2 + $0x50] sm:$0x1] %v381
        %v383 = vld [vmem:[#allocation2 + $0x5c] sm:$0x1]
        %v384 = vsel %vm361, 0, %v383
        %385 = vst [vmem:[#allocation2 + $0x5c] sm:$0x1] %v384
        %v386 = vld [vmem:[#allocation2 + $0x68] sm:$0x1]
        %v387 = vsel %vm361, 0, %v386
        %388 = vst [vmem:[#allocation2 + $0x68] sm:$0x1] %v387
        %v389 = vld [vmem:[#allocation2 + $0x74] sm:$0x1]
        %v390 = vsel %vm361, 0, %v389
        %391 = vst [vmem:[#allocation2 + $0x74] sm:$0x1] %v390
        %v392 = vld [vmem:[#allocation2 + $0x80] sm:$0x1]
        %v393 = vsel %vm361, 0, %v392
        %394 = vst [vmem:[#allocation2 + $0x80] sm:$0x1] %v393
        %v395 = vld [vmem:[#allocation2 + $0x8c] sm:$0x1]
        %v396 = vsel %vm361, 0, %v395
        %397 = vst [vmem:[#allocation2 + $0x8c] sm:$0x1] %v396
        %v398 = vld [vmem:[#allocation2 + $0x98] sm:$0x1]
        %v399 = vsel %vm361, 0, %v398
        %400 = vst [vmem:[#allocation2 + $0x98] sm:$0x1] %v399
        %v401 = vld [vmem:[#allocation2 + $0xa4] sm:$0x1]
        %v402 = vsel %vm361, 0, %v401
        %403 = vst [vmem:[#allocation2 + $0xa4] sm:$0x1] %v402
        %v404 = vld [vmem:[#allocation2 + $0xb0] sm:$0x1]
        %v405 = vsel %vm361, 0, %v404
        %406 = vst [vmem:[#allocation2 + $0xb0] sm:$0x1] %v405
        %v407 = vld [vmem:[#allocation2 + $0xbc] sm:$0x1]
        %v408 = vsel %vm361, 0, %v407
        %409 = vst [vmem:[#allocation2 + $0xbc] sm:$0x1] %v408
        %v410 = vld [vmem:[#allocation2 + $0xc8] sm:$0x1]
        %v411 = vsel %vm361, 0, %v410
        %412 = vst [vmem:[#allocation2 + $0xc8] sm:$0x1] %v411
        %v413 = vld [vmem:[#allocation2 + $0xd4] sm:$0x1]
        %v414 = vsel %vm361, 0, %v413
        %415 = vst [vmem:[#allocation2 + $0xd4] sm:$0x1] %v414
        %s416 = smul.u32 %s302, 2
        %s417 = smul.addr %s416, 4
        %s418 = scalar_lea.vmem %s257, %s417 [#allocation4]
        %v419 = vld [vmem:[%s418] sm:$0xf]
        %v420 = vld [vmem:[%s418 + $0x4] sm:$0xf]
        %v421 = vld [vmem:[%s418 + $0x8] sm:$0xf]
        %v422 = vld [vmem:[%s418 + $0xc] sm:$0xf]
        %v423 = vld [vmem:[%s418 + $0x10] sm:$0xf]
        %v424 = vld [vmem:[%s418 + $0x14] sm:$0xf]
        %v425 = vld [vmem:[%s418 + $0x18] sm:$0xf]
        %v426 = vld [vmem:[%s418 + $0x1c] sm:$0xf]
        %v427 = vld [vmem:[%s418 + $0x20] sm:$0xf]
        %v428 = vld [vmem:[%s418 + $0x24] sm:$0xf]
        %v429 = vld [vmem:[%s418 + $0x28] sm:$0xf]
        %v430 = vld [vmem:[%s418 + $0x2c] sm:$0xf]
        %v431 = vld [vmem:[%s418 + $0x30] sm:$0xf]
        %v432 = vld [vmem:[%s418 + $0x34] sm:$0xf]
        %v433 = vld [vmem:[%s418 + $0x38] sm:$0xf]
        %v434 = vld [vmem:[%s418 + $0x3c] sm:$0xf]
        %v435 = vld [vmem:[%s418 + $0x40] sm:$0xf]
        %v436 = vld [vmem:[%s418 + $0x44] sm:$0xf]
        %v437 = vld [vmem:[%s418 + $0x48] sm:$0xf]
        %v438 = vld [vmem:[%s418 + $0x4c] sm:$0xf]
        %v439 = vld [vmem:[%s418 + $0x50] sm:$0xf]
        %v440 = vld [vmem:[%s418 + $0x54] sm:$0xf]
        %v441 = vld [vmem:[%s418 + $0x58] sm:$0xf]
        %v442 = vld [vmem:[%s418 + $0x5c] sm:$0xf]
        %v443 = vld [vmem:[%s418 + $0x60] sm:$0xf]
        %v444 = vld [vmem:[%s418 + $0x64] sm:$0xf]
        %v445 = vld [vmem:[%s418 + $0x68] sm:$0xf]
        %v446 = vld [vmem:[%s418 + $0x6c] sm:$0xf]
        %v447 = vld [vmem:[%s418 + $0x70] sm:$0xf]
        %v448 = vld [vmem:[%s418 + $0x74] sm:$0xf]
        %v449 = vld [vmem:[%s418 + $0x78] sm:$0xf]
        %v450 = vld [vmem:[%s418 + $0x7c] sm:$0xf]
        %vm451 = vsmask.f32 4368
        %vm452 = vmor %vm304, %vm451
        %v454 = vshrl.u32 %v419, 16
        %v456 = vrot.slane %v454, 7
        %v457 = vshll.u32 %v419, 16
        %v459 = vor.u32 %v456, %v457
        %v460 = vrot.slane %v456, 4
        %v462 = vshrl.u32 %v420, 16
        %v464 = vrot.slane %v462, 7
        %v465 = vshll.u32 %v420, 16
        %v467 = vor.u32 %v464, %v465
        %v468 = vsel %vm452, %v460, %v467
        %v469 = vrot.slane %v464, 4
        %v471 = vshrl.u32 %v421, 16
        %v473 = vrot.slane %v471, 7
        %v474 = vshll.u32 %v421, 16
        %v476 = vor.u32 %v473, %v474
        %v477 = vrot.slane %v473, 4
        %v479 = vshrl.u32 %v422, 16
        %v481 = vrot.slane %v479, 7
        %v482 = vshll.u32 %v422, 16
        %v484 = vor.u32 %v481, %v482
        %v485 = vsel %vm452, %v477, %v484
        %v486 = vrot.slane %v481, 4
        %v488 = vshrl.u32 %v423, 16
        %v490 = vrot.slane %v488, 7
        %v491 = vshll.u32 %v423, 16
        %v493 = vor.u32 %v490, %v491
        %v494 = vrot.slane %v490, 4
        %v496 = vshrl.u32 %v424, 16
        %v498 = vrot.slane %v496, 7
        %v499 = vshll.u32 %v424, 16
        %v501 = vor.u32 %v498, %v499
        %v502 = vsel %vm452, %v494, %v501
        %v503 = vrot.slane %v498, 4
        %v505 = vshrl.u32 %v425, 16
        %v507 = vrot.slane %v505, 7
        %v508 = vshll.u32 %v425, 16
        %v510 = vor.u32 %v507, %v508
        %v511 = vrot.slane %v507, 4
        %v513 = vshrl.u32 %v426, 16
        %v515 = vrot.slane %v513, 7
        %v516 = vshll.u32 %v426, 16
        %v518 = vor.u32 %v515, %v516
        %v519 = vsel %vm452, %v511, %v518
        %v520 = vrot.slane %v515, 4
        %v522 = vshrl.u32 %v427, 16
        %v524 = vrot.slane %v522, 7
        %v525 = vshll.u32 %v427, 16
        %v527 = vor.u32 %v524, %v525
        %v528 = vrot.slane %v524, 4
        %v530 = vshrl.u32 %v428, 16
        %v532 = vrot.slane %v530, 7
        %v533 = vshll.u32 %v428, 16
        %v535 = vor.u32 %v532, %v533
        %v536 = vsel %vm452, %v528, %v535
        %v537 = vrot.slane %v532, 4
        %v539 = vshrl.u32 %v429, 16
        %v541 = vrot.slane %v539, 7
        %v542 = vshll.u32 %v429, 16
        %v544 = vor.u32 %v541, %v542
        %v545 = vrot.slane %v541, 4
        %v547 = vshrl.u32 %v430, 16
        %v549 = vrot.slane %v547, 7
        %v550 = vshll.u32 %v430, 16
        %v552 = vor.u32 %v549, %v550
        %v553 = vsel %vm452, %v545, %v552
        %v554 = vrot.slane %v549, 4
        %v556 = vshrl.u32 %v431, 16
        %v558 = vrot.slane %v556, 7
        %v559 = vshll.u32 %v431, 16
        %v561 = vor.u32 %v558, %v559
        %v562 = vrot.slane %v558, 4
        %v564 = vshrl.u32 %v432, 16
        %v566 = vrot.slane %v564, 7
        %v567 = vshll.u32 %v432, 16
        %v569 = vor.u32 %v566, %v567
        %v570 = vsel %vm452, %v562, %v569
        %v571 = vrot.slane %v566, 4
        %v573 = vshrl.u32 %v433, 16
        %v575 = vrot.slane %v573, 7
        %v576 = vshll.u32 %v433, 16
        %v578 = vor.u32 %v575, %v576
        %v579 = vrot.slane %v575, 4
        %v581 = vshrl.u32 %v434, 16
        %v583 = vrot.slane %v581, 7
        %v584 = vshll.u32 %v434, 16
        %v586 = vor.u32 %v583, %v584
        %v587 = vsel %vm452, %v579, %v586
        %v588 = vrot.slane %v583, 4
        %v590 = vshrl.u32 %v435, 16
        %v592 = vrot.slane %v590, 7
        %v593 = vshll.u32 %v435, 16
        %v595 = vor.u32 %v592, %v593
        %v596 = vrot.slane %v592, 4
        %v598 = vshrl.u32 %v436, 16
        %v600 = vrot.slane %v598, 7
        %v601 = vshll.u32 %v436, 16
        %v603 = vor.u32 %v600, %v601
        %v604 = vsel %vm452, %v596, %v603
        %v605 = vrot.slane %v600, 4
        %v607 = vshrl.u32 %v437, 16
        %v609 = vrot.slane %v607, 7
        %v610 = vshll.u32 %v437, 16
        %v612 = vor.u32 %v609, %v610
        %v613 = vrot.slane %v609, 4
        %v615 = vshrl.u32 %v438, 16
        %v617 = vrot.slane %v615, 7
        %v618 = vshll.u32 %v438, 16
        %v620 = vor.u32 %v617, %v618
        %v621 = vsel %vm452, %v613, %v620
        %v622 = vrot.slane %v617, 4
        %v624 = vshrl.u32 %v439, 16
        %v626 = vrot.slane %v624, 7
        %v627 = vshll.u32 %v439, 16
        %v629 = vor.u32 %v626, %v627
        %v630 = vrot.slane %v626, 4
        %v632 = vshrl.u32 %v440, 16
        %v634 = vrot.slane %v632, 7
        %v635 = vshll.u32 %v440, 16
        %v637 = vor.u32 %v634, %v635
        %v638 = vsel %vm452, %v630, %v637
        %v639 = vrot.slane %v634, 4
        %v641 = vshrl.u32 %v441, 16
        %v643 = vrot.slane %v641, 7
        %v644 = vshll.u32 %v441, 16
        %v646 = vor.u32 %v643, %v644
        %v647 = vrot.slane %v643, 4
        %v649 = vshrl.u32 %v442, 16
        %v651 = vrot.slane %v649, 7
        %v652 = vshll.u32 %v442, 16
        %v654 = vor.u32 %v651, %v652
        %v655 = vsel %vm452, %v647, %v654
        %v656 = vrot.slane %v651, 4
        %v658 = vshrl.u32 %v443, 16
        %v660 = vrot.slane %v658, 7
        %v661 = vshll.u32 %v443, 16
        %v663 = vor.u32 %v660, %v661
        %v664 = vrot.slane %v660, 4
        %v666 = vshrl.u32 %v444, 16
        %v668 = vrot.slane %v666, 7
        %v669 = vshll.u32 %v444, 16
        %v671 = vor.u32 %v668, %v669
        %v672 = vsel %vm452, %v664, %v671
        %v673 = vrot.slane %v668, 4
        %v675 = vshrl.u32 %v445, 16
        %v677 = vrot.slane %v675, 7
        %v678 = vshll.u32 %v445, 16
        %v680 = vor.u32 %v677, %v678
        %v681 = vrot.slane %v677, 4
        %v683 = vshrl.u32 %v446, 16
        %v685 = vrot.slane %v683, 7
        %v686 = vshll.u32 %v446, 16
        %v688 = vor.u32 %v685, %v686
        %v689 = vsel %vm452, %v681, %v688
        %v690 = vrot.slane %v685, 4
        %v692 = vshrl.u32 %v447, 16
        %v694 = vrot.slane %v692, 7
        %v695 = vshll.u32 %v447, 16
        %v697 = vor.u32 %v694, %v695
        %v698 = vrot.slane %v694, 4
        %v700 = vshrl.u32 %v448, 16
        %v702 = vrot.slane %v700, 7
        %v703 = vshll.u32 %v448, 16
        %v705 = vor.u32 %v702, %v703
        %v706 = vsel %vm452, %v698, %v705
        %v707 = vrot.slane %v702, 4
        %v709 = vshrl.u32 %v449, 16
        %v711 = vrot.slane %v709, 7
        %v712 = vshll.u32 %v449, 16
        %v714 = vor.u32 %v711, %v712
        %v715 = vrot.slane %v711, 4
        %v717 = vshrl.u32 %v450, 16
        %v719 = vrot.slane %v717, 7
        %v720 = vshll.u32 %v450, 16
        %v722 = vor.u32 %v719, %v720
        %v723 = vsel %vm452, %v715, %v722
        %v724 = vrot.slane %v719, 4
        %s773 = scalar_lea.vmem [#allocation2], 12
        %vm774 = vcmask 1043456
        %vm775 = vmand %vm774, %vm360
        %v776 = vld [vmem:[%s773] sm:$0xf]
        %v777 = vsel %vm775, %v459, %v776
        %778 = vst [vmem:[%s773] sm:$0xf] %v777
        %779 = vst [vmem:[%s773 + $0x4] sm:$0xf] %v468
        %v780 = vld [vmem:[%s773 + $0x8] sm:$0x1]
        %v781 = vsel %vm305, %v469, %v780
        %782 = vst [vmem:[%s773 + $0x8] sm:$0x1] %v781
        %v783 = vld [vmem:[%s773 + $0xc] sm:$0xf]
        %v784 = vsel %vm775, %v476, %v783
        %785 = vst [vmem:[%s773 + $0xc] sm:$0xf] %v784
        %786 = vst [vmem:[%s773 + $0x10] sm:$0xf] %v485
        %v787 = vld [vmem:[%s773 + $0x14] sm:$0x1]
        %v788 = vsel %vm305, %v486, %v787
        %789 = vst [vmem:[%s773 + $0x14] sm:$0x1] %v788
        %v790 = vld [vmem:[%s773 + $0x18] sm:$0xf]
        %v791 = vsel %vm775, %v493, %v790
        %792 = vst [vmem:[%s773 + $0x18] sm:$0xf] %v791
        %793 = vst [vmem:[%s773 + $0x1c] sm:$0xf] %v502
        %v794 = vld [vmem:[%s773 + $0x20] sm:$0x1]
        %v795 = vsel %vm305, %v503, %v794
        %796 = vst [vmem:[%s773 + $0x20] sm:$0x1] %v795
        %v797 = vld [vmem:[%s773 + $0x24] sm:$0xf]
        %v798 = vsel %vm775, %v510, %v797
        %799 = vst [vmem:[%s773 + $0x24] sm:$0xf] %v798
        %800 = vst [vmem:[%s773 + $0x28] sm:$0xf] %v519
        %v801 = vld [vmem:[%s773 + $0x2c] sm:$0x1]
        %v802 = vsel %vm305, %v520, %v801
        %803 = vst [vmem:[%s773 + $0x2c] sm:$0x1] %v802
        %v804 = vld [vmem:[%s773 + $0x30] sm:$0xf]
        %v805 = vsel %vm775, %v527, %v804
        %806 = vst [vmem:[%s773 + $0x30] sm:$0xf] %v805
        %807 = vst [vmem:[%s773 + $0x34] sm:$0xf] %v536
        %v808 = vld [vmem:[%s773 + $0x38] sm:$0x1]
        %v809 = vsel %vm305, %v537, %v808
        %810 = vst [vmem:[%s773 + $0x38] sm:$0x1] %v809
        %v811 = vld [vmem:[%s773 + $0x3c] sm:$0xf]
        %v812 = vsel %vm775, %v544, %v811
        %813 = vst [vmem:[%s773 + $0x3c] sm:$0xf] %v812
        %814 = vst [vmem:[%s773 + $0x40] sm:$0xf] %v553
        %v815 = vld [vmem:[%s773 + $0x44] sm:$0x1]
        %v816 = vsel %vm305, %v554, %v815
        %817 = vst [vmem:[%s773 + $0x44] sm:$0x1] %v816
        %v818 = vld [vmem:[%s773 + $0x48] sm:$0xf]
        %v819 = vsel %vm775, %v561, %v818
        %820 = vst [vmem:[%s773 + $0x48] sm:$0xf] %v819
        %821 = vst [vmem:[%s773 + $0x4c] sm:$0xf] %v570
        %v822 = vld [vmem:[%s773 + $0x50] sm:$0x1]
        %v823 = vsel %vm305, %v571, %v822
        %824 = vst [vmem:[%s773 + $0x50] sm:$0x1] %v823
        %v825 = vld [vmem:[%s773 + $0x54] sm:$0xf]
        %v826 = vsel %vm775, %v578, %v825
        %827 = vst [vmem:[%s773 + $0x54] sm:$0xf] %v826
        %828 = vst [vmem:[%s773 + $0x58] sm:$0xf] %v587
        %v829 = vld [vmem:[%s773 + $0x5c] sm:$0x1]
        %v830 = vsel %vm305, %v588, %v829
        %831 = vst [vmem:[%s773 + $0x5c] sm:$0x1] %v830
        %v832 = vld [vmem:[%s773 + $0x60] sm:$0xf]
        %v833 = vsel %vm775, %v595, %v832
        %834 = vst [vmem:[%s773 + $0x60] sm:$0xf] %v833
        %835 = vst [vmem:[%s773 + $0x64] sm:$0xf] %v604
        %v836 = vld [vmem:[%s773 + $0x68] sm:$0x1]
        %v837 = vsel %vm305, %v605, %v836
        %838 = vst [vmem:[%s773 + $0x68] sm:$0x1] %v837
        %v839 = vld [vmem:[%s773 + $0x6c] sm:$0xf]
        %v840 = vsel %vm775, %v612, %v839
        %841 = vst [vmem:[%s773 + $0x6c] sm:$0xf] %v840
        %842 = vst [vmem:[%s773 + $0x70] sm:$0xf] %v621
        %v843 = vld [vmem:[%s773 + $0x74] sm:$0x1]
        %v844 = vsel %vm305, %v622, %v843
        %845 = vst [vmem:[%s773 + $0x74] sm:$0x1] %v844
        %v846 = vld [vmem:[%s773 + $0x78] sm:$0xf]
        %v847 = vsel %vm775, %v629, %v846
        %848 = vst [vmem:[%s773 + $0x78] sm:$0xf] %v847
        %849 = vst [vmem:[%s773 + $0x7c] sm:$0xf] %v638
        %v850 = vld [vmem:[%s773 + $0x80] sm:$0x1]
        %v851 = vsel %vm305, %v639, %v850
        %852 = vst [vmem:[%s773 + $0x80] sm:$0x1] %v851
        %v853 = vld [vmem:[%s773 + $0x84] sm:$0xf]
        %v854 = vsel %vm775, %v646, %v853
        %855 = vst [vmem:[%s773 + $0x84] sm:$0xf] %v854
        %856 = vst [vmem:[%s773 + $0x88] sm:$0xf] %v655
        %v857 = vld [vmem:[%s773 + $0x8c] sm:$0x1]
        %v858 = vsel %vm305, %v656, %v857
        %859 = vst [vmem:[%s773 + $0x8c] sm:$0x1] %v858
        %v860 = vld [vmem:[%s773 + $0x90] sm:$0xf]
        %v861 = vsel %vm775, %v663, %v860
        %862 = vst [vmem:[%s773 + $0x90] sm:$0xf] %v861
        %863 = vst [vmem:[%s773 + $0x94] sm:$0xf] %v672
        %v864 = vld [vmem:[%s773 + $0x98] sm:$0x1]
        %v865 = vsel %vm305, %v673, %v864
        %866 = vst [vmem:[%s773 + $0x98] sm:$0x1] %v865
        %v867 = vld [vmem:[%s773 + $0x9c] sm:$0xf]
        %v868 = vsel %vm775, %v680, %v867
        %869 = vst [vmem:[%s773 + $0x9c] sm:$0xf] %v868
        %870 = vst [vmem:[%s773 + $0xa0] sm:$0xf] %v689
        %v871 = vld [vmem:[%s773 + $0xa4] sm:$0x1]
        %v872 = vsel %vm305, %v690, %v871
        %873 = vst [vmem:[%s773 + $0xa4] sm:$0x1] %v872
        %v874 = vld [vmem:[%s773 + $0xa8] sm:$0xf]
        %v875 = vsel %vm775, %v697, %v874
        %876 = vst [vmem:[%s773 + $0xa8] sm:$0xf] %v875
        %877 = vst [vmem:[%s773 + $0xac] sm:$0xf] %v706
        %v878 = vld [vmem:[%s773 + $0xb0] sm:$0x1]
        %v879 = vsel %vm305, %v707, %v878
        %880 = vst [vmem:[%s773 + $0xb0] sm:$0x1] %v879
        %v881 = vld [vmem:[%s773 + $0xb4] sm:$0xf]
        %v882 = vsel %vm775, %v714, %v881
        %883 = vst [vmem:[%s773 + $0xb4] sm:$0xf] %v882
        %884 = vst [vmem:[%s773 + $0xb8] sm:$0xf] %v723
        %v885 = vld [vmem:[%s773 + $0xbc] sm:$0x1]
        %v886 = vsel %vm305, %v724, %v885
        %887 = vst [vmem:[%s773 + $0xbc] sm:$0x1] %v886
        %s888 = ssub.s32 %s302, 1
        %p889 = scmp.gt.s32.totalorder %s888, 0
        %s890 = scalar_select %p889, %s888, 0
        %s891 = smul.u32 %s890, 2
        %s892 = smul.addr %s891, 4
        %s893 = scalar_lea.vmem %s257, %s892 [#allocation4]
        %v894 = vld [vmem:[%s893] sm:$0xf]
        %v895 = vld [vmem:[%s893 + $0x4] sm:$0xf]
        %p896 = scmp.gt.s32.totalorder %s32, 0
        %s897 = scalar_select %p896, 1, 0
        %v898 = vstv %s897
        %vm899 = vcmp.eq.s32.totalorder %v898, 1
        %v900 = vsel %vm899, %v894, 0
        %v901 = vsel %vm899, %v895, 0
        %v903 = vshrl.u32 %v900, 16
        %v905 = vrot.slane %v903, 7
        %v906 = vshll.u32 %v900, 16
        %v908 = vor.u32 %v905, %v906
        %v909 = vrot.slane %v905, 4
        %v911 = vshrl.u32 %v901, 16
        %v913 = vrot.slane %v911, 7
        %v914 = vshll.u32 %v901, 16
        %v916 = vor.u32 %v913, %v914
        %v917 = vsel %vm452, %v909, %v916
        %v918 = vrot.slane %v913, 4
        %v922 = vld [vmem:[#allocation2] sm:$0xf]
        %v923 = vsel %vm775, %v908, %v922
        %924 = vst [vmem:[#allocation2] sm:$0xf] %v923
        %925 = vst [vmem:[#allocation2 + $0x4] sm:$0xf] %v917
        %v926 = vld [vmem:[#allocation2 + $0x8] sm:$0x1]
        %v927 = vsel %vm305, %v918, %v926
        %928 = vst [vmem:[#allocation2 + $0x8] sm:$0x1] %v927
        %s929 = sadd.s32 %s302, 16
        %p930 = scmp.lt.s32.totalorder %s929, 15
        %s931 = scalar_select %p930, %s929, 15
        %s932 = smul.u32 %s931, 2
        %s933 = smul.addr %s932, 4
        %s934 = scalar_lea.vmem %s257, %s933 [#allocation4]
        %v935 = vld [vmem:[%s934] sm:$0xf]
        %v936 = vld [vmem:[%s934 + $0x4] sm:$0xf]
        %p937 = scmp.lt.s32.totalorder %s32, 0
        %s938 = scalar_select %p937, 1, 0
        %v939 = vstv %s938
        %vm940 = vcmp.eq.s32.totalorder %v939, 1
        %v941 = vsel %vm940, %v935, 0
        %v942 = vsel %vm940, %v936, 0
        %v944 = vshrl.u32 %v941, 16
        %v946 = vrot.slane %v944, 7
        %v947 = vshll.u32 %v941, 16
        %v949 = vor.u32 %v946, %v947
        %v950 = vrot.slane %v946, 4
        %v952 = vshrl.u32 %v942, 16
        %v954 = vrot.slane %v952, 7
        %v955 = vshll.u32 %v942, 16
        %v957 = vor.u32 %v954, %v955
        %v958 = vsel %vm452, %v950, %v957
        %v959 = vrot.slane %v954, 4
        %s963 = scalar_lea.vmem [#allocation2], 204
        %v964 = vld [vmem:[%s963] sm:$0xf]
        %v965 = vsel %vm775, %v949, %v964
        %966 = vst [vmem:[%s963] sm:$0xf] %v965
        %967 = vst [vmem:[%s963 + $0x4] sm:$0xf] %v958
        %v968 = vld [vmem:[%s963 + $0x8] sm:$0x1]
        %v969 = vsel %vm305, %v959, %v968
        %970 = vst [vmem:[%s963 + $0x8] sm:$0x1] %v969
        %v971 = vld [vmem:[#allocation2] sm:$0xf]
        %v972 = vld [vmem:[#allocation2 + $0x4] sm:$0xf]
        %v973 = vld [vmem:[#allocation2 + $0xc] sm:$0xf]
        %v974 = vld [vmem:[#allocation2 + $0x10] sm:$0xf]
        %v975 = vld [vmem:[#allocation2 + $0x18] sm:$0xf]
        %v976 = vld [vmem:[#allocation2 + $0x1c] sm:$0xf]
        %v977 = vld [vmem:[#allocation2 + $0x24] sm:$0xf]
        %v978 = vld [vmem:[#allocation2 + $0x28] sm:$0xf]
        %v979 = vld [vmem:[#allocation2 + $0x30] sm:$0xf]
        %v980 = vld [vmem:[#allocation2 + $0x34] sm:$0xf]
        %v981 = vld [vmem:[#allocation2 + $0x3c] sm:$0xf]
        %v982 = vld [vmem:[#allocation2 + $0x40] sm:$0xf]
        %v983 = vld [vmem:[#allocation2 + $0x48] sm:$0xf]
        %v984 = vld [vmem:[#allocation2 + $0x4c] sm:$0xf]
        %v985 = vld [vmem:[#allocation2 + $0x54] sm:$0xf]
        %v986 = vld [vmem:[#allocation2 + $0x58] sm:$0xf]
        %v987 = vld [vmem:[#allocation2 + $0x60] sm:$0xf]
        %v988 = vld [vmem:[#allocation2 + $0x64] sm:$0xf]
        %v989 = vld [vmem:[#allocation2 + $0x6c] sm:$0xf]
        %v990 = vld [vmem:[#allocation2 + $0x70] sm:$0xf]
        %v991 = vld [vmem:[#allocation2 + $0x78] sm:$0xf]
        %v992 = vld [vmem:[#allocation2 + $0x7c] sm:$0xf]
        %v993 = vld [vmem:[#allocation2 + $0x84] sm:$0xf]
        %v994 = vld [vmem:[#allocation2 + $0x88] sm:$0xf]
        %v995 = vld [vmem:[#allocation2 + $0x90] sm:$0xf]
        %v996 = vld [vmem:[#allocation2 + $0x94] sm:$0xf]
        %v997 = vld [vmem:[#allocation2 + $0x9c] sm:$0xf]
        %v998 = vld [vmem:[#allocation2 + $0xa0] sm:$0xf]
        %v999 = vld [vmem:[#allocation2 + $0xa8] sm:$0xf]
        %v1000 = vld [vmem:[#allocation2 + $0xac] sm:$0xf]
        %v1001 = vld [vmem:[#allocation2 + $0xb4] sm:$0xf]
        %v1002 = vld [vmem:[#allocation2 + $0xb8] sm:$0xf]
        %v1035 = vunpack.c.l.b16 %v971
        %v1036 = vunpack.c.l.b16 %v972
        %v1037 = vunpack.c.l.b16 %v973
        %v1038 = vunpack.c.l.b16 %v974
        %v1039 = vunpack.c.l.b16 %v975
        %v1040 = vunpack.c.l.b16 %v976
        %v1041 = vunpack.c.l.b16 %v977
        %v1042 = vunpack.c.l.b16 %v978
        %v1043 = vunpack.c.l.b16 %v979
        %v1044 = vunpack.c.l.b16 %v980
        %v1045 = vunpack.c.l.b16 %v981
        %v1046 = vunpack.c.l.b16 %v982
        %v1047 = vunpack.c.l.b16 %v983
        %v1048 = vunpack.c.l.b16 %v984
        %v1049 = vunpack.c.l.b16 %v985
        %v1050 = vunpack.c.l.b16 %v986
        %v1051 = vunpack.c.l.b16 %v987
        %v1052 = vunpack.c.l.b16 %v988
        %v1053 = vunpack.c.l.b16 %v989
        %v1054 = vunpack.c.l.b16 %v990
        %v1055 = vunpack.c.l.b16 %v991
        %v1056 = vunpack.c.l.b16 %v992
        %v1057 = vunpack.c.l.b16 %v993
        %v1058 = vunpack.c.l.b16 %v994
        %v1059 = vunpack.c.l.b16 %v995
        %v1060 = vunpack.c.l.b16 %v996
        %v1061 = vunpack.c.l.b16 %v997
        %v1062 = vunpack.c.l.b16 %v998
        %v1063 = vunpack.c.l.b16 %v999
        %v1064 = vunpack.c.l.b16 %v1000
        %v1065 = vunpack.c.l.b16 %v1001
        %v1066 = vunpack.c.l.b16 %v1002
        %v1067 = vpack.c.b16 %v1036, %v1035
        %v1068 = vpack.c.b16 %v1038, %v1037
        %v1069 = vpack.c.b16 %v1040, %v1039
        %v1070 = vpack.c.b16 %v1042, %v1041
        %v1071 = vpack.c.b16 %v1044, %v1043
        %v1072 = vpack.c.b16 %v1046, %v1045
        %v1073 = vpack.c.b16 %v1048, %v1047
        %v1074 = vpack.c.b16 %v1050, %v1049
        %v1075 = vpack.c.b16 %v1052, %v1051
        %v1076 = vpack.c.b16 %v1054, %v1053
        %v1077 = vpack.c.b16 %v1056, %v1055
        %v1078 = vpack.c.b16 %v1058, %v1057
        %v1079 = vpack.c.b16 %v1060, %v1059
        %v1080 = vpack.c.b16 %v1062, %v1061
        %v1081 = vpack.c.b16 %v1064, %v1063
        %v1082 = vpack.c.b16 %v1066, %v1065
        %1099 = vst [vmem:[#allocation3] sm:$0xff] %v1067
        %1100 = vst [vmem:[#allocation3 + $0x48] sm:$0xff] %v1068
        %1101 = vst [vmem:[#allocation3 + $0x90] sm:$0xff] %v1069
        %1102 = vst [vmem:[#allocation3 + $0xd8] sm:$0xff] %v1070
        %1103 = vst [vmem:[#allocation3 + $0x120] sm:$0xff] %v1071
        %1104 = vst [vmem:[#allocation3 + $0x168] sm:$0xff] %v1072
        %1105 = vst [vmem:[#allocation3 + $0x1b0] sm:$0xff] %v1073
        %1106 = vst [vmem:[#allocation3 + $0x1f8] sm:$0xff] %v1074
        %1107 = vst [vmem:[#allocation3 + $0x240] sm:$0xff] %v1075
        %1108 = vst [vmem:[#allocation3 + $0x288] sm:$0xff] %v1076
        %1109 = vst [vmem:[#allocation3 + $0x2d0] sm:$0xff] %v1077
        %1110 = vst [vmem:[#allocation3 + $0x318] sm:$0xff] %v1078
        %1111 = vst [vmem:[#allocation3 + $0x360] sm:$0xff] %v1079
        %1112 = vst [vmem:[#allocation3 + $0x3a8] sm:$0xff] %v1080
        %1113 = vst [vmem:[#allocation3 + $0x3f0] sm:$0xff] %v1081
        %1114 = vst [vmem:[#allocation3 + $0x438] sm:$0xff] %v1082
        %v1115 = vld [vmem:[#allocation2] sm:$0xf]
        %v1116 = vld [vmem:[#allocation2 + $0x4] sm:$0xf]
        %v1117 = vld [vmem:[#allocation2 + $0x8] sm:$0x1]
        %v1118 = vld [vmem:[#allocation2 + $0xc] sm:$0xf]
        %v1119 = vld [vmem:[#allocation2 + $0x10] sm:$0xf]
        %v1120 = vld [vmem:[#allocation2 + $0x14] sm:$0x1]
        %v1121 = vld [vmem:[#allocation2 + $0x18] sm:$0xf]
        %v1122 = vld [vmem:[#allocation2 + $0x1c] sm:$0xf]
        %v1123 = vld [vmem:[#allocation2 + $0x20] sm:$0x1]
        %v1124 = vld [vmem:[#allocation2 + $0x24] sm:$0xf]
        %v1125 = vld [vmem:[#allocation2 + $0x28] sm:$0xf]
        %v1126 = vld [vmem:[#allocation2 + $0x2c] sm:$0x1]
        %v1127 = vld [vmem:[#allocation2 + $0x30] sm:$0xf]
        %v1128 = vld [vmem:[#allocation2 + $0x34] sm:$0xf]
        %v1129 = vld [vmem:[#allocation2 + $0x38] sm:$0x1]
        %v1130 = vld [vmem:[#allocation2 + $0x3c] sm:$0xf]
        %v1131 = vld [vmem:[#allocation2 + $0x40] sm:$0xf]
        %v1132 = vld [vmem:[#allocation2 + $0x44] sm:$0x1]
        %v1133 = vld [vmem:[#allocation2 + $0x48] sm:$0xf]
        %v1134 = vld [vmem:[#allocation2 + $0x4c] sm:$0xf]
        %v1135 = vld [vmem:[#allocation2 + $0x50] sm:$0x1]
        %v1136 = vld [vmem:[#allocation2 + $0x54] sm:$0xf]
        %v1137 = vld [vmem:[#allocation2 + $0x58] sm:$0xf]
        %v1138 = vld [vmem:[#allocation2 + $0x5c] sm:$0x1]
        %v1139 = vld [vmem:[#allocation2 + $0x60] sm:$0xf]
        %v1140 = vld [vmem:[#allocation2 + $0x64] sm:$0xf]
        %v1141 = vld [vmem:[#allocation2 + $0x68] sm:$0x1]
        %v1142 = vld [vmem:[#allocation2 + $0x6c] sm:$0xf]
        %v1143 = vld [vmem:[#allocation2 + $0x70] sm:$0xf]
        %v1144 = vld [vmem:[#allocation2 + $0x74] sm:$0x1]
        %v1145 = vld [vmem:[#allocation2 + $0x78] sm:$0xf]
        %v1146 = vld [vmem:[#allocation2 + $0x7c] sm:$0xf]
        %v1147 = vld [vmem:[#allocation2 + $0x80] sm:$0x1]
        %v1148 = vld [vmem:[#allocation2 + $0x84] sm:$0xf]
        %v1149 = vld [vmem:[#allocation2 + $0x88] sm:$0xf]
        %v1150 = vld [vmem:[#allocation2 + $0x8c] sm:$0x1]
        %v1151 = vld [vmem:[#allocation2 + $0x90] sm:$0xf]
        %v1152 = vld [vmem:[#allocation2 + $0x94] sm:$0xf]
        %v1153 = vld [vmem:[#allocation2 + $0x98] sm:$0x1]
        %v1154 = vld [vmem:[#allocation2 + $0x9c] sm:$0xf]
        %v1155 = vld [vmem:[#allocation2 + $0xa0] sm:$0xf]
        %v1156 = vld [vmem:[#allocation2 + $0xa4] sm:$0x1]
        %v1157 = vld [vmem:[#allocation2 + $0xa8] sm:$0xf]
        %v1158 = vld [vmem:[#allocation2 + $0xac] sm:$0xf]
        %v1159 = vld [vmem:[#allocation2 + $0xb0] sm:$0x1]
        %v1160 = vld [vmem:[#allocation2 + $0xb4] sm:$0xf]
        %v1161 = vld [vmem:[#allocation2 + $0xb8] sm:$0xf]
        %v1162 = vld [vmem:[#allocation2 + $0xbc] sm:$0x1]
        %vm1163 = vsmask.f32 3328
        %vm1164 = vsmask.f32 7440
        %vm1165 = vmor %vm1163, %vm1164
        %v1167 = vshrl.u32 %v1115, 16
        %v1169 = vrot.slane %v1167, 4
        %v1170 = vshll.u32 %v1115, 16
        %v1172 = vrot.slane %v1170, 5
        %v1173 = vor.u32 %v1169, %v1172
        %v1174 = vrot.slane %v1173, 4
        %v1176 = vshll.u32 %v1116, 16
        %v1178 = vrot.slane %v1176, 5
        %v1179 = vsel %vm1165, %v1174, %v1178
        %v1180 = vshrl.u32 %v1116, 16
        %v1182 = vrot.slane %v1180, 4
        %v1183 = vor.u32 %v1182, %v1178
        %v1184 = vrot.slane %v1183, 4
        %v1186 = vshll.u32 %v1117, 16
        %v1188 = vrot.slane %v1186, 5
        %v1189 = vsel %vm1165, %v1184, %v1188
        %v1191 = vshrl.u32 %v1118, 16
        %v1193 = vrot.slane %v1191, 4
        %v1194 = vshll.u32 %v1118, 16
        %v1196 = vrot.slane %v1194, 5
        %v1197 = vor.u32 %v1193, %v1196
        %v1198 = vrot.slane %v1197, 4
        %v1200 = vshll.u32 %v1119, 16
        %v1202 = vrot.slane %v1200, 5
        %v1203 = vsel %vm1165, %v1198, %v1202
        %v1204 = vshrl.u32 %v1119, 16
        %v1206 = vrot.slane %v1204, 4
        %v1207 = vor.u32 %v1206, %v1202
        %v1208 = vrot.slane %v1207, 4
        %v1210 = vshll.u32 %v1120, 16
        %v1212 = vrot.slane %v1210, 5
        %v1213 = vsel %vm1165, %v1208, %v1212
        %v1215 = vshrl.u32 %v1121, 16
        %v1217 = vrot.slane %v1215, 4
        %v1218 = vshll.u32 %v1121, 16
        %v1220 = vrot.slane %v1218, 5
        %v1221 = vor.u32 %v1217, %v1220
        %v1222 = vrot.slane %v1221, 4
        %v1224 = vshll.u32 %v1122, 16
        %v1226 = vrot.slane %v1224, 5
        %v1227 = vsel %vm1165, %v1222, %v1226
        %v1228 = vshrl.u32 %v1122, 16
        %v1230 = vrot.slane %v1228, 4
        %v1231 = vor.u32 %v1230, %v1226
        %v1232 = vrot.slane %v1231, 4
        %v1234 = vshll.u32 %v1123, 16
        %v1236 = vrot.slane %v1234, 5
        %v1237 = vsel %vm1165, %v1232, %v1236
        %v1239 = vshrl.u32 %v1124, 16
        %v1241 = vrot.slane %v1239, 4
        %v1242 = vshll.u32 %v1124, 16
        %v1244 = vrot.slane %v1242, 5
        %v1245 = vor.u32 %v1241, %v1244
        %v1246 = vrot.slane %v1245, 4
        %v1248 = vshll.u32 %v1125, 16
        %v1250 = vrot.slane %v1248, 5
        %v1251 = vsel %vm1165, %v1246, %v1250
        %v1252 = vshrl.u32 %v1125, 16
        %v1254 = vrot.slane %v1252, 4
        %v1255 = vor.u32 %v1254, %v1250
        %v1256 = vrot.slane %v1255, 4
        %v1258 = vshll.u32 %v1126, 16
        %v1260 = vrot.slane %v1258, 5
        %v1261 = vsel %vm1165, %v1256, %v1260
        %v1263 = vshrl.u32 %v1127, 16
        %v1265 = vrot.slane %v1263, 4
        %v1266 = vshll.u32 %v1127, 16
        %v1268 = vrot.slane %v1266, 5
        %v1269 = vor.u32 %v1265, %v1268
        %v1270 = vrot.slane %v1269, 4
        %v1272 = vshll.u32 %v1128, 16
        %v1274 = vrot.slane %v1272, 5
        %v1275 = vsel %vm1165, %v1270, %v1274
        %v1276 = vshrl.u32 %v1128, 16
        %v1278 = vrot.slane %v1276, 4
        %v1279 = vor.u32 %v1278, %v1274
        %v1280 = vrot.slane %v1279, 4
        %v1282 = vshll.u32 %v1129, 16
        %v1284 = vrot.slane %v1282, 5
        %v1285 = vsel %vm1165, %v1280, %v1284
        %v1287 = vshrl.u32 %v1130, 16
        %v1289 = vrot.slane %v1287, 4
        %v1290 = vshll.u32 %v1130, 16
        %v1292 = vrot.slane %v1290, 5
        %v1293 = vor.u32 %v1289, %v1292
        %v1294 = vrot.slane %v1293, 4
        %v1296 = vshll.u32 %v1131, 16
        %v1298 = vrot.slane %v1296, 5
        %v1299 = vsel %vm1165, %v1294, %v1298
        %v1300 = vshrl.u32 %v1131, 16
        %v1302 = vrot.slane %v1300, 4
        %v1303 = vor.u32 %v1302, %v1298
        %v1304 = vrot.slane %v1303, 4
        %v1306 = vshll.u32 %v1132, 16
        %v1308 = vrot.slane %v1306, 5
        %v1309 = vsel %vm1165, %v1304, %v1308
        %v1311 = vshrl.u32 %v1133, 16
        %v1313 = vrot.slane %v1311, 4
        %v1314 = vshll.u32 %v1133, 16
        %v1316 = vrot.slane %v1314, 5
        %v1317 = vor.u32 %v1313, %v1316
        %v1318 = vrot.slane %v1317, 4
        %v1320 = vshll.u32 %v1134, 16
        %v1322 = vrot.slane %v1320, 5
        %v1323 = vsel %vm1165, %v1318, %v1322
        %v1324 = vshrl.u32 %v1134, 16
        %v1326 = vrot.slane %v1324, 4
        %v1327 = vor.u32 %v1326, %v1322
        %v1328 = vrot.slane %v1327, 4
        %v1330 = vshll.u32 %v1135, 16
        %v1332 = vrot.slane %v1330, 5
        %v1333 = vsel %vm1165, %v1328, %v1332
        %v1335 = vshrl.u32 %v1136, 16
        %v1337 = vrot.slane %v1335, 4
        %v1338 = vshll.u32 %v1136, 16
        %v1340 = vrot.slane %v1338, 5
        %v1341 = vor.u32 %v1337, %v1340
        %v1342 = vrot.slane %v1341, 4
        %v1344 = vshll.u32 %v1137, 16
        %v1346 = vrot.slane %v1344, 5
        %v1347 = vsel %vm1165, %v1342, %v1346
        %v1348 = vshrl.u32 %v1137, 16
        %v1350 = vrot.slane %v1348, 4
        %v1351 = vor.u32 %v1350, %v1346
        %v1352 = vrot.slane %v1351, 4
        %v1354 = vshll.u32 %v1138, 16
        %v1356 = vrot.slane %v1354, 5
        %v1357 = vsel %vm1165, %v1352, %v1356
        %v1359 = vshrl.u32 %v1139, 16
        %v1361 = vrot.slane %v1359, 4
        %v1362 = vshll.u32 %v1139, 16
        %v1364 = vrot.slane %v1362, 5
        %v1365 = vor.u32 %v1361, %v1364
        %v1366 = vrot.slane %v1365, 4
        %v1368 = vshll.u32 %v1140, 16
        %v1370 = vrot.slane %v1368, 5
        %v1371 = vsel %vm1165, %v1366, %v1370
        %v1372 = vshrl.u32 %v1140, 16
        %v1374 = vrot.slane %v1372, 4
        %v1375 = vor.u32 %v1374, %v1370
        %v1376 = vrot.slane %v1375, 4
        %v1378 = vshll.u32 %v1141, 16
        %v1380 = vrot.slane %v1378, 5
        %v1381 = vsel %vm1165, %v1376, %v1380
        %v1383 = vshrl.u32 %v1142, 16
        %v1385 = vrot.slane %v1383, 4
        %v1386 = vshll.u32 %v1142, 16
        %v1388 = vrot.slane %v1386, 5
        %v1389 = vor.u32 %v1385, %v1388
        %v1390 = vrot.slane %v1389, 4
        %v1392 = vshll.u32 %v1143, 16
        %v1394 = vrot.slane %v1392, 5
        %v1395 = vsel %vm1165, %v1390, %v1394
        %v1396 = vshrl.u32 %v1143, 16
        %v1398 = vrot.slane %v1396, 4
        %v1399 = vor.u32 %v1398, %v1394
        %v1400 = vrot.slane %v1399, 4
        %v1402 = vshll.u32 %v1144, 16
        %v1404 = vrot.slane %v1402, 5
        %v1405 = vsel %vm1165, %v1400, %v1404
        %v1407 = vshrl.u32 %v1145, 16
        %v1409 = vrot.slane %v1407, 4
        %v1410 = vshll.u32 %v1145, 16
        %v1412 = vrot.slane %v1410, 5
        %v1413 = vor.u32 %v1409, %v1412
        %v1414 = vrot.slane %v1413, 4
        %v1416 = vshll.u32 %v1146, 16
        %v1418 = vrot.slane %v1416, 5
        %v1419 = vsel %vm1165, %v1414, %v1418
        %v1420 = vshrl.u32 %v1146, 16
        %v1422 = vrot.slane %v1420, 4
        %v1423 = vor.u32 %v1422, %v1418
        %v1424 = vrot.slane %v1423, 4
        %v1426 = vshll.u32 %v1147, 16
        %v1428 = vrot.slane %v1426, 5
        %v1429 = vsel %vm1165, %v1424, %v1428
        %v1431 = vshrl.u32 %v1148, 16
        %v1433 = vrot.slane %v1431, 4
        %v1434 = vshll.u32 %v1148, 16
        %v1436 = vrot.slane %v1434, 5
        %v1437 = vor.u32 %v1433, %v1436
        %v1438 = vrot.slane %v1437, 4
        %v1440 = vshll.u32 %v1149, 16
        %v1442 = vrot.slane %v1440, 5
        %v1443 = vsel %vm1165, %v1438, %v1442
        %v1444 = vshrl.u32 %v1149, 16
        %v1446 = vrot.slane %v1444, 4
        %v1447 = vor.u32 %v1446, %v1442
        %v1448 = vrot.slane %v1447, 4
        %v1450 = vshll.u32 %v1150, 16
        %v1452 = vrot.slane %v1450, 5
        %v1453 = vsel %vm1165, %v1448, %v1452
        %v1455 = vshrl.u32 %v1151, 16
        %v1457 = vrot.slane %v1455, 4
        %v1458 = vshll.u32 %v1151, 16
        %v1460 = vrot.slane %v1458, 5
        %v1461 = vor.u32 %v1457, %v1460
        %v1462 = vrot.slane %v1461, 4
        %v1464 = vshll.u32 %v1152, 16
        %v1466 = vrot.slane %v1464, 5
        %v1467 = vsel %vm1165, %v1462, %v1466
        %v1468 = vshrl.u32 %v1152, 16
        %v1470 = vrot.slane %v1468, 4
        %v1471 = vor.u32 %v1470, %v1466
        %v1472 = vrot.slane %v1471, 4
        %v1474 = vshll.u32 %v1153, 16
        %v1476 = vrot.slane %v1474, 5
        %v1477 = vsel %vm1165, %v1472, %v1476
        %v1479 = vshrl.u32 %v1154, 16
        %v1481 = vrot.slane %v1479, 4
        %v1482 = vshll.u32 %v1154, 16
        %v1484 = vrot.slane %v1482, 5
        %v1485 = vor.u32 %v1481, %v1484
        %v1486 = vrot.slane %v1485, 4
        %v1488 = vshll.u32 %v1155, 16
        %v1490 = vrot.slane %v1488, 5
        %v1491 = vsel %vm1165, %v1486, %v1490
        %v1492 = vshrl.u32 %v1155, 16
        %v1494 = vrot.slane %v1492, 4
        %v1495 = vor.u32 %v1494, %v1490
        %v1496 = vrot.slane %v1495, 4
        %v1498 = vshll.u32 %v1156, 16
        %v1500 = vrot.slane %v1498, 5
        %v1501 = vsel %vm1165, %v1496, %v1500
        %v1503 = vshrl.u32 %v1157, 16
        %v1505 = vrot.slane %v1503, 4
        %v1506 = vshll.u32 %v1157, 16
        %v1508 = vrot.slane %v1506, 5
        %v1509 = vor.u32 %v1505, %v1508
        %v1510 = vrot.slane %v1509, 4
        %v1512 = vshll.u32 %v1158, 16
        %v1514 = vrot.slane %v1512, 5
        %v1515 = vsel %vm1165, %v1510, %v1514
        %v1516 = vshrl.u32 %v1158, 16
        %v1518 = vrot.slane %v1516, 4
        %v1519 = vor.u32 %v1518, %v1514
        %v1520 = vrot.slane %v1519, 4
        %v1522 = vshll.u32 %v1159, 16
        %v1524 = vrot.slane %v1522, 5
        %v1525 = vsel %vm1165, %v1520, %v1524
        %v1527 = vshrl.u32 %v1160, 16
        %v1529 = vrot.slane %v1527, 4
        %v1530 = vshll.u32 %v1160, 16
        %v1532 = vrot.slane %v1530, 5
        %v1533 = vor.u32 %v1529, %v1532
        %v1534 = vrot.slane %v1533, 4
        %v1536 = vshll.u32 %v1161, 16
        %v1538 = vrot.slane %v1536, 5
        %v1539 = vsel %vm1165, %v1534, %v1538
        %v1540 = vshrl.u32 %v1161, 16
        %v1542 = vrot.slane %v1540, 4
        %v1543 = vor.u32 %v1542, %v1538
        %v1544 = vrot.slane %v1543, 4
        %v1546 = vshll.u32 %v1162, 16
        %v1548 = vrot.slane %v1546, 5
        %v1549 = vsel %vm1165, %v1544, %v1548
        %v1550 = vunpack.c.l.b16 %v1179
        %v1551 = vunpack.c.l.b16 %v1189
        %v1552 = vunpack.c.l.b16 %v1203
        %v1553 = vunpack.c.l.b16 %v1213
        %v1554 = vunpack.c.l.b16 %v1227
        %v1555 = vunpack.c.l.b16 %v1237
        %v1556 = vunpack.c.l.b16 %v1251
        %v1557 = vunpack.c.l.b16 %v1261
        %v1558 = vunpack.c.l.b16 %v1275
        %v1559 = vunpack.c.l.b16 %v1285
        %v1560 = vunpack.c.l.b16 %v1299
        %v1561 = vunpack.c.l.b16 %v1309
        %v1562 = vunpack.c.l.b16 %v1323
        %v1563 = vunpack.c.l.b16 %v1333
        %v1564 = vunpack.c.l.b16 %v1347
        %v1565 = vunpack.c.l.b16 %v1357
        %v1566 = vunpack.c.l.b16 %v1371
        %v1567 = vunpack.c.l.b16 %v1381
        %v1568 = vunpack.c.l.b16 %v1395
        %v1569 = vunpack.c.l.b16 %v1405
        %v1570 = vunpack.c.l.b16 %v1419
        %v1571 = vunpack.c.l.b16 %v1429
        %v1572 = vunpack.c.l.b16 %v1443
        %v1573 = vunpack.c.l.b16 %v1453
        %v1574 = vunpack.c.l.b16 %v1467
        %v1575 = vunpack.c.l.b16 %v1477
        %v1576 = vunpack.c.l.b16 %v1491
        %v1577 = vunpack.c.l.b16 %v1501
        %v1578 = vunpack.c.l.b16 %v1515
        %v1579 = vunpack.c.l.b16 %v1525
        %v1580 = vunpack.c.l.b16 %v1539
        %v1581 = vunpack.c.l.b16 %v1549
        %v1582 = vpack.c.b16 %v1551, %v1550
        %v1583 = vpack.c.b16 %v1553, %v1552
        %v1584 = vpack.c.b16 %v1555, %v1554
        %v1585 = vpack.c.b16 %v1557, %v1556
        %v1586 = vpack.c.b16 %v1559, %v1558
        %v1587 = vpack.c.b16 %v1561, %v1560
        %v1588 = vpack.c.b16 %v1563, %v1562
        %v1589 = vpack.c.b16 %v1565, %v1564
        %v1590 = vpack.c.b16 %v1567, %v1566
        %v1591 = vpack.c.b16 %v1569, %v1568
        %v1592 = vpack.c.b16 %v1571, %v1570
        %v1593 = vpack.c.b16 %v1573, %v1572
        %v1594 = vpack.c.b16 %v1575, %v1574
        %v1595 = vpack.c.b16 %v1577, %v1576
        %v1596 = vpack.c.b16 %v1579, %v1578
        %v1597 = vpack.c.b16 %v1581, %v1580
        %1614 = vst [vmem:[#allocation3 + $0x8] sm:$0xff] %v1582
        %1615 = vst [vmem:[#allocation3 + $0x50] sm:$0xff] %v1583
        %1616 = vst [vmem:[#allocation3 + $0x98] sm:$0xff] %v1584
        %1617 = vst [vmem:[#allocation3 + $0xe0] sm:$0xff] %v1585
        %1618 = vst [vmem:[#allocation3 + $0x128] sm:$0xff] %v1586
        %1619 = vst [vmem:[#allocation3 + $0x170] sm:$0xff] %v1587
        %1620 = vst [vmem:[#allocation3 + $0x1b8] sm:$0xff] %v1588
        %1621 = vst [vmem:[#allocation3 + $0x200] sm:$0xff] %v1589
        %1622 = vst [vmem:[#allocation3 + $0x248] sm:$0xff] %v1590
        %1623 = vst [vmem:[#allocation3 + $0x290] sm:$0xff] %v1591
        %1624 = vst [vmem:[#allocation3 + $0x2d8] sm:$0xff] %v1592
        %1625 = vst [vmem:[#allocation3 + $0x320] sm:$0xff] %v1593
        %1626 = vst [vmem:[#allocation3 + $0x368] sm:$0xff] %v1594
        %1627 = vst [vmem:[#allocation3 + $0x3b0] sm:$0xff] %v1595
        %1628 = vst [vmem:[#allocation3 + $0x3f8] sm:$0xff] %v1596
        %1629 = vst [vmem:[#allocation3 + $0x440] sm:$0xff] %v1597
        %v1630 = vld [vmem:[#allocation2] sm:$0xe]
        %v1631 = vld [vmem:[#allocation2 + $0x4] sm:$0xf]
        %v1632 = vld [vmem:[#allocation2 + $0x8] sm:$0x1]
        %v1633 = vld [vmem:[#allocation2 + $0xc] sm:$0xe]
        %v1634 = vld [vmem:[#allocation2 + $0x10] sm:$0xf]
        %v1635 = vld [vmem:[#allocation2 + $0x14] sm:$0x1]
        %v1636 = vld [vmem:[#allocation2 + $0x18] sm:$0xe]
        %v1637 = vld [vmem:[#allocation2 + $0x1c] sm:$0xf]
        %v1638 = vld [vmem:[#allocation2 + $0x20] sm:$0x1]
        %v1639 = vld [vmem:[#allocation2 + $0x24] sm:$0xe]
        %v1640 = vld [vmem:[#allocation2 + $0x28] sm:$0xf]
        %v1641 = vld [vmem:[#allocation2 + $0x2c] sm:$0x1]
        %v1642 = vld [vmem:[#allocation2 + $0x30] sm:$0xe]
        %v1643 = vld [vmem:[#allocation2 + $0x34] sm:$0xf]
        %v1644 = vld [vmem:[#allocation2 + $0x38] sm:$0x1]
        %v1645 = vld [vmem:[#allocation2 + $0x3c] sm:$0xe]
        %v1646 = vld [vmem:[#allocation2 + $0x40] sm:$0xf]
        %v1647 = vld [vmem:[#allocation2 + $0x44] sm:$0x1]
        %v1648 = vld [vmem:[#allocation2 + $0x48] sm:$0xe]
        %v1649 = vld [vmem:[#allocation2 + $0x4c] sm:$0xf]
        %v1650 = vld [vmem:[#allocation2 + $0x50] sm:$0x1]
        %v1651 = vld [vmem:[#allocation2 + $0x54] sm:$0xe]
        %v1652 = vld [vmem:[#allocation2 + $0x58] sm:$0xf]
        %v1653 = vld [vmem:[#allocation2 + $0x5c] sm:$0x1]
        %v1654 = vld [vmem:[#allocation2 + $0x60] sm:$0xe]
        %v1655 = vld [vmem:[#allocation2 + $0x64] sm:$0xf]
        %v1656 = vld [vmem:[#allocation2 + $0x68] sm:$0x1]
        %v1657 = vld [vmem:[#allocation2 + $0x6c] sm:$0xe]
        %v1658 = vld [vmem:[#allocation2 + $0x70] sm:$0xf]
        %v1659 = vld [vmem:[#allocation2 + $0x74] sm:$0x1]
        %v1660 = vld [vmem:[#allocation2 + $0x78] sm:$0xe]
        %v1661 = vld [vmem:[#allocation2 + $0x7c] sm:$0xf]
        %v1662 = vld [vmem:[#allocation2 + $0x80] sm:$0x1]
        %v1663 = vld [vmem:[#allocation2 + $0x84] sm:$0xe]
        %v1664 = vld [vmem:[#allocation2 + $0x88] sm:$0xf]
        %v1665 = vld [vmem:[#allocation2 + $0x8c] sm:$0x1]
        %v1666 = vld [vmem:[#allocation2 + $0x90] sm:$0xe]
        %v1667 = vld [vmem:[#allocation2 + $0x94] sm:$0xf]
        %v1668 = vld [vmem:[#allocation2 + $0x98] sm:$0x1]
        %v1669 = vld [vmem:[#allocation2 + $0x9c] sm:$0xe]
        %v1670 = vld [vmem:[#allocation2 + $0xa0] sm:$0xf]
        %v1671 = vld [vmem:[#allocation2 + $0xa4] sm:$0x1]
        %v1672 = vld [vmem:[#allocation2 + $0xa8] sm:$0xe]
        %v1673 = vld [vmem:[#allocation2 + $0xac] sm:$0xf]
        %v1674 = vld [vmem:[#allocation2 + $0xb0] sm:$0x1]
        %v1675 = vld [vmem:[#allocation2 + $0xb4] sm:$0xe]
        %v1676 = vld [vmem:[#allocation2 + $0xb8] sm:$0xf]
        %v1677 = vld [vmem:[#allocation2 + $0xbc] sm:$0x1]
        %vm1726 = vcmask 1042432
        %vm1727 = vcmask 1046532
        %vm1728 = vmor %vm1726, %vm1727
        %v1729 = vrot.slane %v1630, 5
        %v1730 = vrot.slane %v1729, 4
        %v1731 = vrot.slane %v1631, 5
        %v1732 = vsel %vm1728, %v1730, %v1731
        %v1733 = vrot.slane %v1731, 4
        %v1734 = vrot.slane %v1632, 5
        %v1735 = vsel %vm1728, %v1733, %v1734
        %v1736 = vrot.slane %v1633, 5
        %v1737 = vrot.slane %v1736, 4
        %v1738 = vrot.slane %v1634, 5
        %v1739 = vsel %vm1728, %v1737, %v1738
        %v1740 = vrot.slane %v1738, 4
        %v1741 = vrot.slane %v1635, 5
        %v1742 = vsel %vm1728, %v1740, %v1741
        %v1743 = vrot.slane %v1636, 5
        %v1744 = vrot.slane %v1743, 4
        %v1745 = vrot.slane %v1637, 5
        %v1746 = vsel %vm1728, %v1744, %v1745
        %v1747 = vrot.slane %v1745, 4
        %v1748 = vrot.slane %v1638, 5
        %v1749 = vsel %vm1728, %v1747, %v1748
        %v1750 = vrot.slane %v1639, 5
        %v1751 = vrot.slane %v1750, 4
        %v1752 = vrot.slane %v1640, 5
        %v1753 = vsel %vm1728, %v1751, %v1752
        %v1754 = vrot.slane %v1752, 4
        %v1755 = vrot.slane %v1641, 5
        %v1756 = vsel %vm1728, %v1754, %v1755
        %v1757 = vrot.slane %v1642, 5
        %v1758 = vrot.slane %v1757, 4
        %v1759 = vrot.slane %v1643, 5
        %v1760 = vsel %vm1728, %v1758, %v1759
        %v1761 = vrot.slane %v1759, 4
        %v1762 = vrot.slane %v1644, 5
        %v1763 = vsel %vm1728, %v1761, %v1762
        %v1764 = vrot.slane %v1645, 5
        %v1765 = vrot.slane %v1764, 4
        %v1766 = vrot.slane %v1646, 5
        %v1767 = vsel %vm1728, %v1765, %v1766
        %v1768 = vrot.slane %v1766, 4
        %v1769 = vrot.slane %v1647, 5
        %v1770 = vsel %vm1728, %v1768, %v1769
        %v1771 = vrot.slane %v1648, 5
        %v1772 = vrot.slane %v1771, 4
        %v1773 = vrot.slane %v1649, 5
        %v1774 = vsel %vm1728, %v1772, %v1773
        %v1775 = vrot.slane %v1773, 4
        %v1776 = vrot.slane %v1650, 5
        %v1777 = vsel %vm1728, %v1775, %v1776
        %v1778 = vrot.slane %v1651, 5
        %v1779 = vrot.slane %v1778, 4
        %v1780 = vrot.slane %v1652, 5
        %v1781 = vsel %vm1728, %v1779, %v1780
        %v1782 = vrot.slane %v1780, 4
        %v1783 = vrot.slane %v1653, 5
        %v1784 = vsel %vm1728, %v1782, %v1783
        %v1785 = vrot.slane %v1654, 5
        %v1786 = vrot.slane %v1785, 4
        %v1787 = vrot.slane %v1655, 5
        %v1788 = vsel %vm1728, %v1786, %v1787
        %v1789 = vrot.slane %v1787, 4
        %v1790 = vrot.slane %v1656, 5
        %v1791 = vsel %vm1728, %v1789, %v1790
        %v1792 = vrot.slane %v1657, 5
        %v1793 = vrot.slane %v1792, 4
        %v1794 = vrot.slane %v1658, 5
        %v1795 = vsel %vm1728, %v1793, %v1794
        %v1796 = vrot.slane %v1794, 4
        %v1797 = vrot.slane %v1659, 5
        %v1798 = vsel %vm1728, %v1796, %v1797
        %v1799 = vrot.slane %v1660, 5
        %v1800 = vrot.slane %v1799, 4
        %v1801 = vrot.slane %v1661, 5
        %v1802 = vsel %vm1728, %v1800, %v1801
        %v1803 = vrot.slane %v1801, 4
        %v1804 = vrot.slane %v1662, 5
        %v1805 = vsel %vm1728, %v1803, %v1804
        %v1806 = vrot.slane %v1663, 5
        %v1807 = vrot.slane %v1806, 4
        %v1808 = vrot.slane %v1664, 5
        %v1809 = vsel %vm1728, %v1807, %v1808
        %v1810 = vrot.slane %v1808, 4
        %v1811 = vrot.slane %v1665, 5
        %v1812 = vsel %vm1728, %v1810, %v1811
        %v1813 = vrot.slane %v1666, 5
        %v1814 = vrot.slane %v1813, 4
        %v1815 = vrot.slane %v1667, 5
        %v1816 = vsel %vm1728, %v1814, %v1815
        %v1817 = vrot.slane %v1815, 4
        %v1818 = vrot.slane %v1668, 5
        %v1819 = vsel %vm1728, %v1817, %v1818
        %v1820 = vrot.slane %v1669, 5
        %v1821 = vrot.slane %v1820, 4
        %v1822 = vrot.slane %v1670, 5
        %v1823 = vsel %vm1728, %v1821, %v1822
        %v1824 = vrot.slane %v1822, 4
        %v1825 = vrot.slane %v1671, 5
        %v1826 = vsel %vm1728, %v1824, %v1825
        %v1827 = vrot.slane %v1672, 5
        %v1828 = vrot.slane %v1827, 4
        %v1829 = vrot.slane %v1673, 5
        %v1830 = vsel %vm1728, %v1828, %v1829
        %v1831 = vrot.slane %v1829, 4
        %v1832 = vrot.slane %v1674, 5
        %v1833 = vsel %vm1728, %v1831, %v1832
        %v1834 = vrot.slane %v1675, 5
        %v1835 = vrot.slane %v1834, 4
        %v1836 = vrot.slane %v1676, 5
        %v1837 = vsel %vm1728, %v1835, %v1836
        %v1838 = vrot.slane %v1836, 4
        %v1839 = vrot.slane %v1677, 5
        %v1840 = vsel %vm1728, %v1838, %v1839
        %v1841 = vunpack.c.l.b16 %v1732
        %v1842 = vunpack.c.l.b16 %v1735
        %v1843 = vunpack.c.l.b16 %v1739
        %v1844 = vunpack.c.l.b16 %v1742
        %v1845 = vunpack.c.l.b16 %v1746
        %v1846 = vunpack.c.l.b16 %v1749
        %v1847 = vunpack.c.l.b16 %v1753
        %v1848 = vunpack.c.l.b16 %v1756
        %v1849 = vunpack.c.l.b16 %v1760
        %v1850 = vunpack.c.l.b16 %v1763
        %v1851 = vunpack.c.l.b16 %v1767
        %v1852 = vunpack.c.l.b16 %v1770
        %v1853 = vunpack.c.l.b16 %v1774
        %v1854 = vunpack.c.l.b16 %v1777
        %v1855 = vunpack.c.l.b16 %v1781
        %v1856 = vunpack.c.l.b16 %v1784
        %v1857 = vunpack.c.l.b16 %v1788
        %v1858 = vunpack.c.l.b16 %v1791
        %v1859 = vunpack.c.l.b16 %v1795
        %v1860 = vunpack.c.l.b16 %v1798
        %v1861 = vunpack.c.l.b16 %v1802
        %v1862 = vunpack.c.l.b16 %v1805
        %v1863 = vunpack.c.l.b16 %v1809
        %v1864 = vunpack.c.l.b16 %v1812
        %v1865 = vunpack.c.l.b16 %v1816
        %v1866 = vunpack.c.l.b16 %v1819
        %v1867 = vunpack.c.l.b16 %v1823
        %v1868 = vunpack.c.l.b16 %v1826
        %v1869 = vunpack.c.l.b16 %v1830
        %v1870 = vunpack.c.l.b16 %v1833
        %v1871 = vunpack.c.l.b16 %v1837
        %v1872 = vunpack.c.l.b16 %v1840
        %v1873 = vpack.c.b16 %v1842, %v1841
        %v1874 = vpack.c.b16 %v1844, %v1843
        %v1875 = vpack.c.b16 %v1846, %v1845
        %v1876 = vpack.c.b16 %v1848, %v1847
        %v1877 = vpack.c.b16 %v1850, %v1849
        %v1878 = vpack.c.b16 %v1852, %v1851
        %v1879 = vpack.c.b16 %v1854, %v1853
        %v1880 = vpack.c.b16 %v1856, %v1855
        %v1881 = vpack.c.b16 %v1858, %v1857
        %v1882 = vpack.c.b16 %v1860, %v1859
        %v1883 = vpack.c.b16 %v1862, %v1861
        %v1884 = vpack.c.b16 %v1864, %v1863
        %v1885 = vpack.c.b16 %v1866, %v1865
        %v1886 = vpack.c.b16 %v1868, %v1867
        %v1887 = vpack.c.b16 %v1870, %v1869
        %v1888 = vpack.c.b16 %v1872, %v1871
        %1905 = vst [vmem:[#allocation3 + $0x10] sm:$0xff] %v1873
        %1906 = vst [vmem:[#allocation3 + $0x58] sm:$0xff] %v1874
        %1907 = vst [vmem:[#allocation3 + $0xa0] sm:$0xff] %v1875
        %1908 = vst [vmem:[#allocation3 + $0xe8] sm:$0xff] %v1876
        %1909 = vst [vmem:[#allocation3 + $0x130] sm:$0xff] %v1877
        %1910 = vst [vmem:[#allocation3 + $0x178] sm:$0xff] %v1878
        %1911 = vst [vmem:[#allocation3 + $0x1c0] sm:$0xff] %v1879
        %1912 = vst [vmem:[#allocation3 + $0x208] sm:$0xff] %v1880
        %1913 = vst [vmem:[#allocation3 + $0x250] sm:$0xff] %v1881
        %1914 = vst [vmem:[#allocation3 + $0x298] sm:$0xff] %v1882
        %1915 = vst [vmem:[#allocation3 + $0x2e0] sm:$0xff] %v1883
        %1916 = vst [vmem:[#allocation3 + $0x328] sm:$0xff] %v1884
        %1917 = vst [vmem:[#allocation3 + $0x370] sm:$0xff] %v1885
        %1918 = vst [vmem:[#allocation3 + $0x3b8] sm:$0xff] %v1886
        %1919 = vst [vmem:[#allocation3 + $0x400] sm:$0xff] %v1887
        %1920 = vst [vmem:[#allocation3 + $0x448] sm:$0xff] %v1888
        %v1921 = vld [vmem:[%s773] sm:$0xf]
        %v1922 = vld [vmem:[%s773 + $0x4] sm:$0xf]
        %v1923 = vld [vmem:[%s773 + $0xc] sm:$0xf]
        %v1924 = vld [vmem:[%s773 + $0x10] sm:$0xf]
        %v1925 = vld [vmem:[%s773 + $0x18] sm:$0xf]
        %v1926 = vld [vmem:[%s773 + $0x1c] sm:$0xf]
        %v1927 = vld [vmem:[%s773 + $0x24] sm:$0xf]
        %v1928 = vld [vmem:[%s773 + $0x28] sm:$0xf]
        %v1929 = vld [vmem:[%s773 + $0x30] sm:$0xf]
        %v1930 = vld [vmem:[%s773 + $0x34] sm:$0xf]
        %v1931 = vld [vmem:[%s773 + $0x3c] sm:$0xf]
        %v1932 = vld [vmem:[%s773 + $0x40] sm:$0xf]
        %v1933 = vld [vmem:[%s773 + $0x48] sm:$0xf]
        %v1934 = vld [vmem:[%s773 + $0x4c] sm:$0xf]
        %v1935 = vld [vmem:[%s773 + $0x54] sm:$0xf]
        %v1936 = vld [vmem:[%s773 + $0x58] sm:$0xf]
        %v1937 = vld [vmem:[%s773 + $0x60] sm:$0xf]
        %v1938 = vld [vmem:[%s773 + $0x64] sm:$0xf]
        %v1939 = vld [vmem:[%s773 + $0x6c] sm:$0xf]
        %v1940 = vld [vmem:[%s773 + $0x70] sm:$0xf]
        %v1941 = vld [vmem:[%s773 + $0x78] sm:$0xf]
        %v1942 = vld [vmem:[%s773 + $0x7c] sm:$0xf]
        %v1943 = vld [vmem:[%s773 + $0x84] sm:$0xf]
        %v1944 = vld [vmem:[%s773 + $0x88] sm:$0xf]
        %v1945 = vld [vmem:[%s773 + $0x90] sm:$0xf]
        %v1946 = vld [vmem:[%s773 + $0x94] sm:$0xf]
        %v1947 = vld [vmem:[%s773 + $0x9c] sm:$0xf]
        %v1948 = vld [vmem:[%s773 + $0xa0] sm:$0xf]
        %v1949 = vld [vmem:[%s773 + $0xa8] sm:$0xf]
        %v1950 = vld [vmem:[%s773 + $0xac] sm:$0xf]
        %v1951 = vld [vmem:[%s773 + $0xb4] sm:$0xf]
        %v1952 = vld [vmem:[%s773 + $0xb8] sm:$0xf]
        %v1985 = vunpack.c.l.b16 %v1921
        %v1986 = vunpack.c.l.b16 %v1922
        %v1987 = vunpack.c.l.b16 %v1923
        %v1988 = vunpack.c.l.b16 %v1924
        %v1989 = vunpack.c.l.b16 %v1925
        %v1990 = vunpack.c.l.b16 %v1926
        %v1991 = vunpack.c.l.b16 %v1927
        %v1992 = vunpack.c.l.b16 %v1928
        %v1993 = vunpack.c.l.b16 %v1929
        %v1994 = vunpack.c.l.b16 %v1930
        %v1995 = vunpack.c.l.b16 %v1931
        %v1996 = vunpack.c.l.b16 %v1932
        %v1997 = vunpack.c.l.b16 %v1933
        %v1998 = vunpack.c.l.b16 %v1934
        %v1999 = vunpack.c.l.b16 %v1935
        %v2000 = vunpack.c.l.b16 %v1936
        %v2001 = vunpack.c.l.b16 %v1937
        %v2002 = vunpack.c.l.b16 %v1938
        %v2003 = vunpack.c.l.b16 %v1939
        %v2004 = vunpack.c.l.b16 %v1940
        %v2005 = vunpack.c.l.b16 %v1941
        %v2006 = vunpack.c.l.b16 %v1942
        %v2007 = vunpack.c.l.b16 %v1943
        %v2008 = vunpack.c.l.b16 %v1944
        %v2009 = vunpack.c.l.b16 %v1945
        %v2010 = vunpack.c.l.b16 %v1946
        %v2011 = vunpack.c.l.b16 %v1947
        %v2012 = vunpack.c.l.b16 %v1948
        %v2013 = vunpack.c.l.b16 %v1949
        %v2014 = vunpack.c.l.b16 %v1950
        %v2015 = vunpack.c.l.b16 %v1951
        %v2016 = vunpack.c.l.b16 %v1952
        %v2017 = vpack.c.b16 %v1986, %v1985
        %v2018 = vpack.c.b16 %v1988, %v1987
        %v2019 = vpack.c.b16 %v1990, %v1989
        %v2020 = vpack.c.b16 %v1992, %v1991
        %v2021 = vpack.c.b16 %v1994, %v1993
        %v2022 = vpack.c.b16 %v1996, %v1995
        %v2023 = vpack.c.b16 %v1998, %v1997
        %v2024 = vpack.c.b16 %v2000, %v1999
        %v2025 = vpack.c.b16 %v2002, %v2001
        %v2026 = vpack.c.b16 %v2004, %v2003
        %v2027 = vpack.c.b16 %v2006, %v2005
        %v2028 = vpack.c.b16 %v2008, %v2007
        %v2029 = vpack.c.b16 %v2010, %v2009
        %v2030 = vpack.c.b16 %v2012, %v2011
        %v2031 = vpack.c.b16 %v2014, %v2013
        %v2032 = vpack.c.b16 %v2016, %v2015
        %2049 = vst [vmem:[#allocation3 + $0x18] sm:$0xff] %v2017
        %2050 = vst [vmem:[#allocation3 + $0x60] sm:$0xff] %v2018
        %2051 = vst [vmem:[#allocation3 + $0xa8] sm:$0xff] %v2019
        %2052 = vst [vmem:[#allocation3 + $0xf0] sm:$0xff] %v2020
        %2053 = vst [vmem:[#allocation3 + $0x138] sm:$0xff] %v2021
        %2054 = vst [vmem:[#allocation3 + $0x180] sm:$0xff] %v2022
        %2055 = vst [vmem:[#allocation3 + $0x1c8] sm:$0xff] %v2023
        %2056 = vst [vmem:[#allocation3 + $0x210] sm:$0xff] %v2024
        %2057 = vst [vmem:[#allocation3 + $0x258] sm:$0xff] %v2025
        %2058 = vst [vmem:[#allocation3 + $0x2a0] sm:$0xff] %v2026
        %2059 = vst [vmem:[#allocation3 + $0x2e8] sm:$0xff] %v2027
        %2060 = vst [vmem:[#allocation3 + $0x330] sm:$0xff] %v2028
        %2061 = vst [vmem:[#allocation3 + $0x378] sm:$0xff] %v2029
        %2062 = vst [vmem:[#allocation3 + $0x3c0] sm:$0xff] %v2030
        %2063 = vst [vmem:[#allocation3 + $0x408] sm:$0xff] %v2031
        %2064 = vst [vmem:[#allocation3 + $0x450] sm:$0xff] %v2032
        %v2065 = vld [vmem:[%s773] sm:$0xf]
        %v2066 = vld [vmem:[%s773 + $0x4] sm:$0xf]
        %v2067 = vld [vmem:[%s773 + $0x8] sm:$0x1]
        %v2068 = vld [vmem:[%s773 + $0xc] sm:$0xf]
        %v2069 = vld [vmem:[%s773 + $0x10] sm:$0xf]
        %v2070 = vld [vmem:[%s773 + $0x14] sm:$0x1]
        %v2071 = vld [vmem:[%s773 + $0x18] sm:$0xf]
        %v2072 = vld [vmem:[%s773 + $0x1c] sm:$0xf]
        %v2073 = vld [vmem:[%s773 + $0x20] sm:$0x1]
        %v2074 = vld [vmem:[%s773 + $0x24] sm:$0xf]
        %v2075 = vld [vmem:[%s773 + $0x28] sm:$0xf]
        %v2076 = vld [vmem:[%s773 + $0x2c] sm:$0x1]
        %v2077 = vld [vmem:[%s773 + $0x30] sm:$0xf]
        %v2078 = vld [vmem:[%s773 + $0x34] sm:$0xf]
        %v2079 = vld [vmem:[%s773 + $0x38] sm:$0x1]
        %v2080 = vld [vmem:[%s773 + $0x3c] sm:$0xf]
        %v2081 = vld [vmem:[%s773 + $0x40] sm:$0xf]
        %v2082 = vld [vmem:[%s773 + $0x44] sm:$0x1]
        %v2083 = vld [vmem:[%s773 + $0x48] sm:$0xf]
        %v2084 = vld [vmem:[%s773 + $0x4c] sm:$0xf]
        %v2085 = vld [vmem:[%s773 + $0x50] sm:$0x1]
        %v2086 = vld [vmem:[%s773 + $0x54] sm:$0xf]
        %v2087 = vld [vmem:[%s773 + $0x58] sm:$0xf]
        %v2088 = vld [vmem:[%s773 + $0x5c] sm:$0x1]
        %v2089 = vld [vmem:[%s773 + $0x60] sm:$0xf]
        %v2090 = vld [vmem:[%s773 + $0x64] sm:$0xf]
        %v2091 = vld [vmem:[%s773 + $0x68] sm:$0x1]
        %v2092 = vld [vmem:[%s773 + $0x6c] sm:$0xf]
        %v2093 = vld [vmem:[%s773 + $0x70] sm:$0xf]
        %v2094 = vld [vmem:[%s773 + $0x74] sm:$0x1]
        %v2095 = vld [vmem:[%s773 + $0x78] sm:$0xf]
        %v2096 = vld [vmem:[%s773 + $0x7c] sm:$0xf]
        %v2097 = vld [vmem:[%s773 + $0x80] sm:$0x1]
        %v2098 = vld [vmem:[%s773 + $0x84] sm:$0xf]
        %v2099 = vld [vmem:[%s773 + $0x88] sm:$0xf]
        %v2100 = vld [vmem:[%s773 + $0x8c] sm:$0x1]
        %v2101 = vld [vmem:[%s773 + $0x90] sm:$0xf]
        %v2102 = vld [vmem:[%s773 + $0x94] sm:$0xf]
        %v2103 = vld [vmem:[%s773 + $0x98] sm:$0x1]
        %v2104 = vld [vmem:[%s773 + $0x9c] sm:$0xf]
        %v2105 = vld [vmem:[%s773 + $0xa0] sm:$0xf]
        %v2106 = vld [vmem:[%s773 + $0xa4] sm:$0x1]
        %v2107 = vld [vmem:[%s773 + $0xa8] sm:$0xf]
        %v2108 = vld [vmem:[%s773 + $0xac] sm:$0xf]
        %v2109 = vld [vmem:[%s773 + $0xb0] sm:$0x1]
        %v2110 = vld [vmem:[%s773 + $0xb4] sm:$0xf]
        %v2111 = vld [vmem:[%s773 + $0xb8] sm:$0xf]
        %v2112 = vld [vmem:[%s773 + $0xbc] sm:$0x1]
        %v2114 = vshrl.u32 %v2065, 16
        %v2116 = vrot.slane %v2114, 4
        %v2117 = vshll.u32 %v2065, 16
        %v2119 = vrot.slane %v2117, 5
        %v2120 = vor.u32 %v2116, %v2119
        %v2121 = vrot.slane %v2120, 4
        %v2123 = vshll.u32 %v2066, 16
        %v2125 = vrot.slane %v2123, 5
        %v2126 = vsel %vm1165, %v2121, %v2125
        %v2127 = vshrl.u32 %v2066, 16
        %v2129 = vrot.slane %v2127, 4
        %v2130 = vor.u32 %v2129, %v2125
        %v2131 = vrot.slane %v2130, 4
        %v2133 = vshll.u32 %v2067, 16
        %v2135 = vrot.slane %v2133, 5
        %v2136 = vsel %vm1165, %v2131, %v2135
        %v2138 = vshrl.u32 %v2068, 16
        %v2140 = vrot.slane %v2138, 4
        %v2141 = vshll.u32 %v2068, 16
        %v2143 = vrot.slane %v2141, 5
        %v2144 = vor.u32 %v2140, %v2143
        %v2145 = vrot.slane %v2144, 4
        %v2147 = vshll.u32 %v2069, 16
        %v2149 = vrot.slane %v2147, 5
        %v2150 = vsel %vm1165, %v2145, %v2149
        %v2151 = vshrl.u32 %v2069, 16
        %v2153 = vrot.slane %v2151, 4
        %v2154 = vor.u32 %v2153, %v2149
        %v2155 = vrot.slane %v2154, 4
        %v2157 = vshll.u32 %v2070, 16
        %v2159 = vrot.slane %v2157, 5
        %v2160 = vsel %vm1165, %v2155, %v2159
        %v2162 = vshrl.u32 %v2071, 16
        %v2164 = vrot.slane %v2162, 4
        %v2165 = vshll.u32 %v2071, 16
        %v2167 = vrot.slane %v2165, 5
        %v2168 = vor.u32 %v2164, %v2167
        %v2169 = vrot.slane %v2168, 4
        %v2171 = vshll.u32 %v2072, 16
        %v2173 = vrot.slane %v2171, 5
        %v2174 = vsel %vm1165, %v2169, %v2173
        %v2175 = vshrl.u32 %v2072, 16
        %v2177 = vrot.slane %v2175, 4
        %v2178 = vor.u32 %v2177, %v2173
        %v2179 = vrot.slane %v2178, 4
        %v2181 = vshll.u32 %v2073, 16
        %v2183 = vrot.slane %v2181, 5
        %v2184 = vsel %vm1165, %v2179, %v2183
        %v2186 = vshrl.u32 %v2074, 16
        %v2188 = vrot.slane %v2186, 4
        %v2189 = vshll.u32 %v2074, 16
        %v2191 = vrot.slane %v2189, 5
        %v2192 = vor.u32 %v2188, %v2191
        %v2193 = vrot.slane %v2192, 4
        %v2195 = vshll.u32 %v2075, 16
        %v2197 = vrot.slane %v2195, 5
        %v2198 = vsel %vm1165, %v2193, %v2197
        %v2199 = vshrl.u32 %v2075, 16
        %v2201 = vrot.slane %v2199, 4
        %v2202 = vor.u32 %v2201, %v2197
        %v2203 = vrot.slane %v2202, 4
        %v2205 = vshll.u32 %v2076, 16
        %v2207 = vrot.slane %v2205, 5
        %v2208 = vsel %vm1165, %v2203, %v2207
        %v2210 = vshrl.u32 %v2077, 16
        %v2212 = vrot.slane %v2210, 4
        %v2213 = vshll.u32 %v2077, 16
        %v2215 = vrot.slane %v2213, 5
        %v2216 = vor.u32 %v2212, %v2215
        %v2217 = vrot.slane %v2216, 4
        %v2219 = vshll.u32 %v2078, 16
        %v2221 = vrot.slane %v2219, 5
        %v2222 = vsel %vm1165, %v2217, %v2221
        %v2223 = vshrl.u32 %v2078, 16
        %v2225 = vrot.slane %v2223, 4
        %v2226 = vor.u32 %v2225, %v2221
        %v2227 = vrot.slane %v2226, 4
        %v2229 = vshll.u32 %v2079, 16
        %v2231 = vrot.slane %v2229, 5
        %v2232 = vsel %vm1165, %v2227, %v2231
        %v2234 = vshrl.u32 %v2080, 16
        %v2236 = vrot.slane %v2234, 4
        %v2237 = vshll.u32 %v2080, 16
        %v2239 = vrot.slane %v2237, 5
        %v2240 = vor.u32 %v2236, %v2239
        %v2241 = vrot.slane %v2240, 4
        %v2243 = vshll.u32 %v2081, 16
        %v2245 = vrot.slane %v2243, 5
        %v2246 = vsel %vm1165, %v2241, %v2245
        %v2247 = vshrl.u32 %v2081, 16
        %v2249 = vrot.slane %v2247, 4
        %v2250 = vor.u32 %v2249, %v2245
        %v2251 = vrot.slane %v2250, 4
        %v2253 = vshll.u32 %v2082, 16
        %v2255 = vrot.slane %v2253, 5
        %v2256 = vsel %vm1165, %v2251, %v2255
        %v2258 = vshrl.u32 %v2083, 16
        %v2260 = vrot.slane %v2258, 4
        %v2261 = vshll.u32 %v2083, 16
        %v2263 = vrot.slane %v2261, 5
        %v2264 = vor.u32 %v2260, %v2263
        %v2265 = vrot.slane %v2264, 4
        %v2267 = vshll.u32 %v2084, 16
        %v2269 = vrot.slane %v2267, 5
        %v2270 = vsel %vm1165, %v2265, %v2269
        %v2271 = vshrl.u32 %v2084, 16
        %v2273 = vrot.slane %v2271, 4
        %v2274 = vor.u32 %v2273, %v2269
        %v2275 = vrot.slane %v2274, 4
        %v2277 = vshll.u32 %v2085, 16
        %v2279 = vrot.slane %v2277, 5
        %v2280 = vsel %vm1165, %v2275, %v2279
        %v2282 = vshrl.u32 %v2086, 16
        %v2284 = vrot.slane %v2282, 4
        %v2285 = vshll.u32 %v2086, 16
        %v2287 = vrot.slane %v2285, 5
        %v2288 = vor.u32 %v2284, %v2287
        %v2289 = vrot.slane %v2288, 4
        %v2291 = vshll.u32 %v2087, 16
        %v2293 = vrot.slane %v2291, 5
        %v2294 = vsel %vm1165, %v2289, %v2293
        %v2295 = vshrl.u32 %v2087, 16
        %v2297 = vrot.slane %v2295, 4
        %v2298 = vor.u32 %v2297, %v2293
        %v2299 = vrot.slane %v2298, 4
        %v2301 = vshll.u32 %v2088, 16
        %v2303 = vrot.slane %v2301, 5
        %v2304 = vsel %vm1165, %v2299, %v2303
        %v2306 = vshrl.u32 %v2089, 16
        %v2308 = vrot.slane %v2306, 4
        %v2309 = vshll.u32 %v2089, 16
        %v2311 = vrot.slane %v2309, 5
        %v2312 = vor.u32 %v2308, %v2311
        %v2313 = vrot.slane %v2312, 4
        %v2315 = vshll.u32 %v2090, 16
        %v2317 = vrot.slane %v2315, 5
        %v2318 = vsel %vm1165, %v2313, %v2317
        %v2319 = vshrl.u32 %v2090, 16
        %v2321 = vrot.slane %v2319, 4
        %v2322 = vor.u32 %v2321, %v2317
        %v2323 = vrot.slane %v2322, 4
        %v2325 = vshll.u32 %v2091, 16
        %v2327 = vrot.slane %v2325, 5
        %v2328 = vsel %vm1165, %v2323, %v2327
        %v2330 = vshrl.u32 %v2092, 16
        %v2332 = vrot.slane %v2330, 4
        %v2333 = vshll.u32 %v2092, 16
        %v2335 = vrot.slane %v2333, 5
        %v2336 = vor.u32 %v2332, %v2335
        %v2337 = vrot.slane %v2336, 4
        %v2339 = vshll.u32 %v2093, 16
        %v2341 = vrot.slane %v2339, 5
        %v2342 = vsel %vm1165, %v2337, %v2341
        %v2343 = vshrl.u32 %v2093, 16
        %v2345 = vrot.slane %v2343, 4
        %v2346 = vor.u32 %v2345, %v2341
        %v2347 = vrot.slane %v2346, 4
        %v2349 = vshll.u32 %v2094, 16
        %v2351 = vrot.slane %v2349, 5
        %v2352 = vsel %vm1165, %v2347, %v2351
        %v2354 = vshrl.u32 %v2095, 16
        %v2356 = vrot.slane %v2354, 4
        %v2357 = vshll.u32 %v2095, 16
        %v2359 = vrot.slane %v2357, 5
        %v2360 = vor.u32 %v2356, %v2359
        %v2361 = vrot.slane %v2360, 4
        %v2363 = vshll.u32 %v2096, 16
        %v2365 = vrot.slane %v2363, 5
        %v2366 = vsel %vm1165, %v2361, %v2365
        %v2367 = vshrl.u32 %v2096, 16
        %v2369 = vrot.slane %v2367, 4
        %v2370 = vor.u32 %v2369, %v2365
        %v2371 = vrot.slane %v2370, 4
        %v2373 = vshll.u32 %v2097, 16
        %v2375 = vrot.slane %v2373, 5
        %v2376 = vsel %vm1165, %v2371, %v2375
        %v2378 = vshrl.u32 %v2098, 16
        %v2380 = vrot.slane %v2378, 4
        %v2381 = vshll.u32 %v2098, 16
        %v2383 = vrot.slane %v2381, 5
        %v2384 = vor.u32 %v2380, %v2383
        %v2385 = vrot.slane %v2384, 4
        %v2387 = vshll.u32 %v2099, 16
        %v2389 = vrot.slane %v2387, 5
        %v2390 = vsel %vm1165, %v2385, %v2389
        %v2391 = vshrl.u32 %v2099, 16
        %v2393 = vrot.slane %v2391, 4
        %v2394 = vor.u32 %v2393, %v2389
        %v2395 = vrot.slane %v2394, 4
        %v2397 = vshll.u32 %v2100, 16
        %v2399 = vrot.slane %v2397, 5
        %v2400 = vsel %vm1165, %v2395, %v2399
        %v2402 = vshrl.u32 %v2101, 16
        %v2404 = vrot.slane %v2402, 4
        %v2405 = vshll.u32 %v2101, 16
        %v2407 = vrot.slane %v2405, 5
        %v2408 = vor.u32 %v2404, %v2407
        %v2409 = vrot.slane %v2408, 4
        %v2411 = vshll.u32 %v2102, 16
        %v2413 = vrot.slane %v2411, 5
        %v2414 = vsel %vm1165, %v2409, %v2413
        %v2415 = vshrl.u32 %v2102, 16
        %v2417 = vrot.slane %v2415, 4
        %v2418 = vor.u32 %v2417, %v2413
        %v2419 = vrot.slane %v2418, 4
        %v2421 = vshll.u32 %v2103, 16
        %v2423 = vrot.slane %v2421, 5
        %v2424 = vsel %vm1165, %v2419, %v2423
        %v2426 = vshrl.u32 %v2104, 16
        %v2428 = vrot.slane %v2426, 4
        %v2429 = vshll.u32 %v2104, 16
        %v2431 = vrot.slane %v2429, 5
        %v2432 = vor.u32 %v2428, %v2431
        %v2433 = vrot.slane %v2432, 4
        %v2435 = vshll.u32 %v2105, 16
        %v2437 = vrot.slane %v2435, 5
        %v2438 = vsel %vm1165, %v2433, %v2437
        %v2439 = vshrl.u32 %v2105, 16
        %v2441 = vrot.slane %v2439, 4
        %v2442 = vor.u32 %v2441, %v2437
        %v2443 = vrot.slane %v2442, 4
        %v2445 = vshll.u32 %v2106, 16
        %v2447 = vrot.slane %v2445, 5
        %v2448 = vsel %vm1165, %v2443, %v2447
        %v2450 = vshrl.u32 %v2107, 16
        %v2452 = vrot.slane %v2450, 4
        %v2453 = vshll.u32 %v2107, 16
        %v2455 = vrot.slane %v2453, 5
        %v2456 = vor.u32 %v2452, %v2455
        %v2457 = vrot.slane %v2456, 4
        %v2459 = vshll.u32 %v2108, 16
        %v2461 = vrot.slane %v2459, 5
        %v2462 = vsel %vm1165, %v2457, %v2461
        %v2463 = vshrl.u32 %v2108, 16
        %v2465 = vrot.slane %v2463, 4
        %v2466 = vor.u32 %v2465, %v2461
        %v2467 = vrot.slane %v2466, 4
        %v2469 = vshll.u32 %v2109, 16
        %v2471 = vrot.slane %v2469, 5
        %v2472 = vsel %vm1165, %v2467, %v2471
        %v2474 = vshrl.u32 %v2110, 16
        %v2476 = vrot.slane %v2474, 4
        %v2477 = vshll.u32 %v2110, 16
        %v2479 = vrot.slane %v2477, 5
        %v2480 = vor.u32 %v2476, %v2479
        %v2481 = vrot.slane %v2480, 4
        %v2483 = vshll.u32 %v2111, 16
        %v2485 = vrot.slane %v2483, 5
        %v2486 = vsel %vm1165, %v2481, %v2485
        %v2487 = vshrl.u32 %v2111, 16
        %v2489 = vrot.slane %v2487, 4
        %v2490 = vor.u32 %v2489, %v2485
        %v2491 = vrot.slane %v2490, 4
        %v2493 = vshll.u32 %v2112, 16
        %v2495 = vrot.slane %v2493, 5
        %v2496 = vsel %vm1165, %v2491, %v2495
        %v2497 = vunpack.c.l.b16 %v2126
        %v2498 = vunpack.c.l.b16 %v2136
        %v2499 = vunpack.c.l.b16 %v2150
        %v2500 = vunpack.c.l.b16 %v2160
        %v2501 = vunpack.c.l.b16 %v2174
        %v2502 = vunpack.c.l.b16 %v2184
        %v2503 = vunpack.c.l.b16 %v2198
        %v2504 = vunpack.c.l.b16 %v2208
        %v2505 = vunpack.c.l.b16 %v2222
        %v2506 = vunpack.c.l.b16 %v2232
        %v2507 = vunpack.c.l.b16 %v2246
        %v2508 = vunpack.c.l.b16 %v2256
        %v2509 = vunpack.c.l.b16 %v2270
        %v2510 = vunpack.c.l.b16 %v2280
        %v2511 = vunpack.c.l.b16 %v2294
        %v2512 = vunpack.c.l.b16 %v2304
        %v2513 = vunpack.c.l.b16 %v2318
        %v2514 = vunpack.c.l.b16 %v2328
        %v2515 = vunpack.c.l.b16 %v2342
        %v2516 = vunpack.c.l.b16 %v2352
        %v2517 = vunpack.c.l.b16 %v2366
        %v2518 = vunpack.c.l.b16 %v2376
        %v2519 = vunpack.c.l.b16 %v2390
        %v2520 = vunpack.c.l.b16 %v2400
        %v2521 = vunpack.c.l.b16 %v2414
        %v2522 = vunpack.c.l.b16 %v2424
        %v2523 = vunpack.c.l.b16 %v2438
        %v2524 = vunpack.c.l.b16 %v2448
        %v2525 = vunpack.c.l.b16 %v2462
        %v2526 = vunpack.c.l.b16 %v2472
        %v2527 = vunpack.c.l.b16 %v2486
        %v2528 = vunpack.c.l.b16 %v2496
        %v2529 = vpack.c.b16 %v2498, %v2497
        %v2530 = vpack.c.b16 %v2500, %v2499
        %v2531 = vpack.c.b16 %v2502, %v2501
        %v2532 = vpack.c.b16 %v2504, %v2503
        %v2533 = vpack.c.b16 %v2506, %v2505
        %v2534 = vpack.c.b16 %v2508, %v2507
        %v2535 = vpack.c.b16 %v2510, %v2509
        %v2536 = vpack.c.b16 %v2512, %v2511
        %v2537 = vpack.c.b16 %v2514, %v2513
        %v2538 = vpack.c.b16 %v2516, %v2515
        %v2539 = vpack.c.b16 %v2518, %v2517
        %v2540 = vpack.c.b16 %v2520, %v2519
        %v2541 = vpack.c.b16 %v2522, %v2521
        %v2542 = vpack.c.b16 %v2524, %v2523
        %v2543 = vpack.c.b16 %v2526, %v2525
        %v2544 = vpack.c.b16 %v2528, %v2527
        %2561 = vst [vmem:[#allocation3 + $0x20] sm:$0xff] %v2529
        %2562 = vst [vmem:[#allocation3 + $0x68] sm:$0xff] %v2530
        %2563 = vst [vmem:[#allocation3 + $0xb0] sm:$0xff] %v2531
        %2564 = vst [vmem:[#allocation3 + $0xf8] sm:$0xff] %v2532
        %2565 = vst [vmem:[#allocation3 + $0x140] sm:$0xff] %v2533
        %2566 = vst [vmem:[#allocation3 + $0x188] sm:$0xff] %v2534
        %2567 = vst [vmem:[#allocation3 + $0x1d0] sm:$0xff] %v2535
        %2568 = vst [vmem:[#allocation3 + $0x218] sm:$0xff] %v2536
        %2569 = vst [vmem:[#allocation3 + $0x260] sm:$0xff] %v2537
        %2570 = vst [vmem:[#allocation3 + $0x2a8] sm:$0xff] %v2538
        %2571 = vst [vmem:[#allocation3 + $0x2f0] sm:$0xff] %v2539
        %2572 = vst [vmem:[#allocation3 + $0x338] sm:$0xff] %v2540
        %2573 = vst [vmem:[#allocation3 + $0x380] sm:$0xff] %v2541
        %2574 = vst [vmem:[#allocation3 + $0x3c8] sm:$0xff] %v2542
        %2575 = vst [vmem:[#allocation3 + $0x410] sm:$0xff] %v2543
        %2576 = vst [vmem:[#allocation3 + $0x458] sm:$0xff] %v2544
        %v2577 = vld [vmem:[%s773] sm:$0xe]
        %v2578 = vld [vmem:[%s773 + $0x4] sm:$0xf]
        %v2579 = vld [vmem:[%s773 + $0x8] sm:$0x1]
        %v2580 = vld [vmem:[%s773 + $0xc] sm:$0xe]
        %v2581 = vld [vmem:[%s773 + $0x10] sm:$0xf]
        %v2582 = vld [vmem:[%s773 + $0x14] sm:$0x1]
        %v2583 = vld [vmem:[%s773 + $0x18] sm:$0xe]
        %v2584 = vld [vmem:[%s773 + $0x1c] sm:$0xf]
        %v2585 = vld [vmem:[%s773 + $0x20] sm:$0x1]
        %v2586 = vld [vmem:[%s773 + $0x24] sm:$0xe]
        %v2587 = vld [vmem:[%s773 + $0x28] sm:$0xf]
        %v2588 = vld [vmem:[%s773 + $0x2c] sm:$0x1]
        %v2589 = vld [vmem:[%s773 + $0x30] sm:$0xe]
        %v2590 = vld [vmem:[%s773 + $0x34] sm:$0xf]
        %v2591 = vld [vmem:[%s773 + $0x38] sm:$0x1]
        %v2592 = vld [vmem:[%s773 + $0x3c] sm:$0xe]
        %v2593 = vld [vmem:[%s773 + $0x40] sm:$0xf]
        %v2594 = vld [vmem:[%s773 + $0x44] sm:$0x1]
        %v2595 = vld [vmem:[%s773 + $0x48] sm:$0xe]
        %v2596 = vld [vmem:[%s773 + $0x4c] sm:$0xf]
        %v2597 = vld [vmem:[%s773 + $0x50] sm:$0x1]
        %v2598 = vld [vmem:[%s773 + $0x54] sm:$0xe]
        %v2599 = vld [vmem:[%s773 + $0x58] sm:$0xf]
        %v2600 = vld [vmem:[%s773 + $0x5c] sm:$0x1]
        %v2601 = vld [vmem:[%s773 + $0x60] sm:$0xe]
        %v2602 = vld [vmem:[%s773 + $0x64] sm:$0xf]
        %v2603 = vld [vmem:[%s773 + $0x68] sm:$0x1]
        %v2604 = vld [vmem:[%s773 + $0x6c] sm:$0xe]
        %v2605 = vld [vmem:[%s773 + $0x70] sm:$0xf]
        %v2606 = vld [vmem:[%s773 + $0x74] sm:$0x1]
        %v2607 = vld [vmem:[%s773 + $0x78] sm:$0xe]
        %v2608 = vld [vmem:[%s773 + $0x7c] sm:$0xf]
        %v2609 = vld [vmem:[%s773 + $0x80] sm:$0x1]
        %v2610 = vld [vmem:[%s773 + $0x84] sm:$0xe]
        %v2611 = vld [vmem:[%s773 + $0x88] sm:$0xf]
        %v2612 = vld [vmem:[%s773 + $0x8c] sm:$0x1]
        %v2613 = vld [vmem:[%s773 + $0x90] sm:$0xe]
        %v2614 = vld [vmem:[%s773 + $0x94] sm:$0xf]
        %v2615 = vld [vmem:[%s773 + $0x98] sm:$0x1]
        %v2616 = vld [vmem:[%s773 + $0x9c] sm:$0xe]
        %v2617 = vld [vmem:[%s773 + $0xa0] sm:$0xf]
        %v2618 = vld [vmem:[%s773 + $0xa4] sm:$0x1]
        %v2619 = vld [vmem:[%s773 + $0xa8] sm:$0xe]
        %v2620 = vld [vmem:[%s773 + $0xac] sm:$0xf]
        %v2621 = vld [vmem:[%s773 + $0xb0] sm:$0x1]
        %v2622 = vld [vmem:[%s773 + $0xb4] sm:$0xe]
        %v2623 = vld [vmem:[%s773 + $0xb8] sm:$0xf]
        %v2624 = vld [vmem:[%s773 + $0xbc] sm:$0x1]
        %v2673 = vrot.slane %v2577, 5
        %v2674 = vrot.slane %v2673, 4
        %v2675 = vrot.slane %v2578, 5
        %v2676 = vsel %vm1728, %v2674, %v2675
        %v2677 = vrot.slane %v2675, 4
        %v2678 = vrot.slane %v2579, 5
        %v2679 = vsel %vm1728, %v2677, %v2678
        %v2680 = vrot.slane %v2580, 5
        %v2681 = vrot.slane %v2680, 4
        %v2682 = vrot.slane %v2581, 5
        %v2683 = vsel %vm1728, %v2681, %v2682
        %v2684 = vrot.slane %v2682, 4
        %v2685 = vrot.slane %v2582, 5
        %v2686 = vsel %vm1728, %v2684, %v2685
        %v2687 = vrot.slane %v2583, 5
        %v2688 = vrot.slane %v2687, 4
        %v2689 = vrot.slane %v2584, 5
        %v2690 = vsel %vm1728, %v2688, %v2689
        %v2691 = vrot.slane %v2689, 4
        %v2692 = vrot.slane %v2585, 5
        %v2693 = vsel %vm1728, %v2691, %v2692
        %v2694 = vrot.slane %v2586, 5
        %v2695 = vrot.slane %v2694, 4
        %v2696 = vrot.slane %v2587, 5
        %v2697 = vsel %vm1728, %v2695, %v2696
        %v2698 = vrot.slane %v2696, 4
        %v2699 = vrot.slane %v2588, 5
        %v2700 = vsel %vm1728, %v2698, %v2699
        %v2701 = vrot.slane %v2589, 5
        %v2702 = vrot.slane %v2701, 4
        %v2703 = vrot.slane %v2590, 5
        %v2704 = vsel %vm1728, %v2702, %v2703
        %v2705 = vrot.slane %v2703, 4
        %v2706 = vrot.slane %v2591, 5
        %v2707 = vsel %vm1728, %v2705, %v2706
        %v2708 = vrot.slane %v2592, 5
        %v2709 = vrot.slane %v2708, 4
        %v2710 = vrot.slane %v2593, 5
        %v2711 = vsel %vm1728, %v2709, %v2710
        %v2712 = vrot.slane %v2710, 4
        %v2713 = vrot.slane %v2594, 5
        %v2714 = vsel %vm1728, %v2712, %v2713
        %v2715 = vrot.slane %v2595, 5
        %v2716 = vrot.slane %v2715, 4
        %v2717 = vrot.slane %v2596, 5
        %v2718 = vsel %vm1728, %v2716, %v2717
        %v2719 = vrot.slane %v2717, 4
        %v2720 = vrot.slane %v2597, 5
        %v2721 = vsel %vm1728, %v2719, %v2720
        %v2722 = vrot.slane %v2598, 5
        %v2723 = vrot.slane %v2722, 4
        %v2724 = vrot.slane %v2599, 5
        %v2725 = vsel %vm1728, %v2723, %v2724
        %v2726 = vrot.slane %v2724, 4
        %v2727 = vrot.slane %v2600, 5
        %v2728 = vsel %vm1728, %v2726, %v2727
        %v2729 = vrot.slane %v2601, 5
        %v2730 = vrot.slane %v2729, 4
        %v2731 = vrot.slane %v2602, 5
        %v2732 = vsel %vm1728, %v2730, %v2731
        %v2733 = vrot.slane %v2731, 4
        %v2734 = vrot.slane %v2603, 5
        %v2735 = vsel %vm1728, %v2733, %v2734
        %v2736 = vrot.slane %v2604, 5
        %v2737 = vrot.slane %v2736, 4
        %v2738 = vrot.slane %v2605, 5
        %v2739 = vsel %vm1728, %v2737, %v2738
        %v2740 = vrot.slane %v2738, 4
        %v2741 = vrot.slane %v2606, 5
        %v2742 = vsel %vm1728, %v2740, %v2741
        %v2743 = vrot.slane %v2607, 5
        %v2744 = vrot.slane %v2743, 4
        %v2745 = vrot.slane %v2608, 5
        %v2746 = vsel %vm1728, %v2744, %v2745
        %v2747 = vrot.slane %v2745, 4
        %v2748 = vrot.slane %v2609, 5
        %v2749 = vsel %vm1728, %v2747, %v2748
        %v2750 = vrot.slane %v2610, 5
        %v2751 = vrot.slane %v2750, 4
        %v2752 = vrot.slane %v2611, 5
        %v2753 = vsel %vm1728, %v2751, %v2752
        %v2754 = vrot.slane %v2752, 4
        %v2755 = vrot.slane %v2612, 5
        %v2756 = vsel %vm1728, %v2754, %v2755
        %v2757 = vrot.slane %v2613, 5
        %v2758 = vrot.slane %v2757, 4
        %v2759 = vrot.slane %v2614, 5
        %v2760 = vsel %vm1728, %v2758, %v2759
        %v2761 = vrot.slane %v2759, 4
        %v2762 = vrot.slane %v2615, 5
        %v2763 = vsel %vm1728, %v2761, %v2762
        %v2764 = vrot.slane %v2616, 5
        %v2765 = vrot.slane %v2764, 4
        %v2766 = vrot.slane %v2617, 5
        %v2767 = vsel %vm1728, %v2765, %v2766
        %v2768 = vrot.slane %v2766, 4
        %v2769 = vrot.slane %v2618, 5
        %v2770 = vsel %vm1728, %v2768, %v2769
        %v2771 = vrot.slane %v2619, 5
        %v2772 = vrot.slane %v2771, 4
        %v2773 = vrot.slane %v2620, 5
        %v2774 = vsel %vm1728, %v2772, %v2773
        %v2775 = vrot.slane %v2773, 4
        %v2776 = vrot.slane %v2621, 5
        %v2777 = vsel %vm1728, %v2775, %v2776
        %v2778 = vrot.slane %v2622, 5
        %v2779 = vrot.slane %v2778, 4
        %v2780 = vrot.slane %v2623, 5
        %v2781 = vsel %vm1728, %v2779, %v2780
        %v2782 = vrot.slane %v2780, 4
        %v2783 = vrot.slane %v2624, 5
        %v2784 = vsel %vm1728, %v2782, %v2783
        %v2785 = vunpack.c.l.b16 %v2676
        %v2786 = vunpack.c.l.b16 %v2679
        %v2787 = vunpack.c.l.b16 %v2683
        %v2788 = vunpack.c.l.b16 %v2686
        %v2789 = vunpack.c.l.b16 %v2690
        %v2790 = vunpack.c.l.b16 %v2693
        %v2791 = vunpack.c.l.b16 %v2697
        %v2792 = vunpack.c.l.b16 %v2700
        %v2793 = vunpack.c.l.b16 %v2704
        %v2794 = vunpack.c.l.b16 %v2707
        %v2795 = vunpack.c.l.b16 %v2711
        %v2796 = vunpack.c.l.b16 %v2714
        %v2797 = vunpack.c.l.b16 %v2718
        %v2798 = vunpack.c.l.b16 %v2721
        %v2799 = vunpack.c.l.b16 %v2725
        %v2800 = vunpack.c.l.b16 %v2728
        %v2801 = vunpack.c.l.b16 %v2732
        %v2802 = vunpack.c.l.b16 %v2735
        %v2803 = vunpack.c.l.b16 %v2739
        %v2804 = vunpack.c.l.b16 %v2742
        %v2805 = vunpack.c.l.b16 %v2746
        %v2806 = vunpack.c.l.b16 %v2749
        %v2807 = vunpack.c.l.b16 %v2753
        %v2808 = vunpack.c.l.b16 %v2756
        %v2809 = vunpack.c.l.b16 %v2760
        %v2810 = vunpack.c.l.b16 %v2763
        %v2811 = vunpack.c.l.b16 %v2767
        %v2812 = vunpack.c.l.b16 %v2770
        %v2813 = vunpack.c.l.b16 %v2774
        %v2814 = vunpack.c.l.b16 %v2777
        %v2815 = vunpack.c.l.b16 %v2781
        %v2816 = vunpack.c.l.b16 %v2784
        %v2817 = vpack.c.b16 %v2786, %v2785
        %v2818 = vpack.c.b16 %v2788, %v2787
        %v2819 = vpack.c.b16 %v2790, %v2789
        %v2820 = vpack.c.b16 %v2792, %v2791
        %v2821 = vpack.c.b16 %v2794, %v2793
        %v2822 = vpack.c.b16 %v2796, %v2795
        %v2823 = vpack.c.b16 %v2798, %v2797
        %v2824 = vpack.c.b16 %v2800, %v2799
        %v2825 = vpack.c.b16 %v2802, %v2801
        %v2826 = vpack.c.b16 %v2804, %v2803
        %v2827 = vpack.c.b16 %v2806, %v2805
        %v2828 = vpack.c.b16 %v2808, %v2807
        %v2829 = vpack.c.b16 %v2810, %v2809
        %v2830 = vpack.c.b16 %v2812, %v2811
        %v2831 = vpack.c.b16 %v2814, %v2813
        %v2832 = vpack.c.b16 %v2816, %v2815
        %2849 = vst [vmem:[#allocation3 + $0x28] sm:$0xff] %v2817
        %2850 = vst [vmem:[#allocation3 + $0x70] sm:$0xff] %v2818
        %2851 = vst [vmem:[#allocation3 + $0xb8] sm:$0xff] %v2819
        %2852 = vst [vmem:[#allocation3 + $0x100] sm:$0xff] %v2820
        %2853 = vst [vmem:[#allocation3 + $0x148] sm:$0xff] %v2821
        %2854 = vst [vmem:[#allocation3 + $0x190] sm:$0xff] %v2822
        %2855 = vst [vmem:[#allocation3 + $0x1d8] sm:$0xff] %v2823
        %2856 = vst [vmem:[#allocation3 + $0x220] sm:$0xff] %v2824
        %2857 = vst [vmem:[#allocation3 + $0x268] sm:$0xff] %v2825
        %2858 = vst [vmem:[#allocation3 + $0x2b0] sm:$0xff] %v2826
        %2859 = vst [vmem:[#allocation3 + $0x2f8] sm:$0xff] %v2827
        %2860 = vst [vmem:[#allocation3 + $0x340] sm:$0xff] %v2828
        %2861 = vst [vmem:[#allocation3 + $0x388] sm:$0xff] %v2829
        %2862 = vst [vmem:[#allocation3 + $0x3d0] sm:$0xff] %v2830
        %2863 = vst [vmem:[#allocation3 + $0x418] sm:$0xff] %v2831
        %2864 = vst [vmem:[#allocation3 + $0x460] sm:$0xff] %v2832
        %s2865 = scalar_lea.vmem [#allocation2], 24
        %v2866 = vld [vmem:[%s2865] sm:$0xf]
        %v2867 = vld [vmem:[%s2865 + $0x4] sm:$0xf]
        %v2868 = vld [vmem:[%s2865 + $0xc] sm:$0xf]
        %v2869 = vld [vmem:[%s2865 + $0x10] sm:$0xf]
        %v2870 = vld [vmem:[%s2865 + $0x18] sm:$0xf]
        %v2871 = vld [vmem:[%s2865 + $0x1c] sm:$0xf]
        %v2872 = vld [vmem:[%s2865 + $0x24] sm:$0xf]
        %v2873 = vld [vmem:[%s2865 + $0x28] sm:$0xf]
        %v2874 = vld [vmem:[%s2865 + $0x30] sm:$0xf]
        %v2875 = vld [vmem:[%s2865 + $0x34] sm:$0xf]
        %v2876 = vld [vmem:[%s2865 + $0x3c] sm:$0xf]
        %v2877 = vld [vmem:[%s2865 + $0x40] sm:$0xf]
        %v2878 = vld [vmem:[%s2865 + $0x48] sm:$0xf]
        %v2879 = vld [vmem:[%s2865 + $0x4c] sm:$0xf]
        %v2880 = vld [vmem:[%s2865 + $0x54] sm:$0xf]
        %v2881 = vld [vmem:[%s2865 + $0x58] sm:$0xf]
        %v2882 = vld [vmem:[%s2865 + $0x60] sm:$0xf]
        %v2883 = vld [vmem:[%s2865 + $0x64] sm:$0xf]
        %v2884 = vld [vmem:[%s2865 + $0x6c] sm:$0xf]
        %v2885 = vld [vmem:[%s2865 + $0x70] sm:$0xf]
        %v2886 = vld [vmem:[%s2865 + $0x78] sm:$0xf]
        %v2887 = vld [vmem:[%s2865 + $0x7c] sm:$0xf]
        %v2888 = vld [vmem:[%s2865 + $0x84] sm:$0xf]
        %v2889 = vld [vmem:[%s2865 + $0x88] sm:$0xf]
        %v2890 = vld [vmem:[%s2865 + $0x90] sm:$0xf]
        %v2891 = vld [vmem:[%s2865 + $0x94] sm:$0xf]
        %v2892 = vld [vmem:[%s2865 + $0x9c] sm:$0xf]
        %v2893 = vld [vmem:[%s2865 + $0xa0] sm:$0xf]
        %v2894 = vld [vmem:[%s2865 + $0xa8] sm:$0xf]
        %v2895 = vld [vmem:[%s2865 + $0xac] sm:$0xf]
        %v2896 = vld [vmem:[%s2865 + $0xb4] sm:$0xf]
        %v2897 = vld [vmem:[%s2865 + $0xb8] sm:$0xf]
        %v2930 = vunpack.c.l.b16 %v2866
        %v2931 = vunpack.c.l.b16 %v2867
        %v2932 = vunpack.c.l.b16 %v2868
        %v2933 = vunpack.c.l.b16 %v2869
        %v2934 = vunpack.c.l.b16 %v2870
        %v2935 = vunpack.c.l.b16 %v2871
        %v2936 = vunpack.c.l.b16 %v2872
        %v2937 = vunpack.c.l.b16 %v2873
        %v2938 = vunpack.c.l.b16 %v2874
        %v2939 = vunpack.c.l.b16 %v2875
        %v2940 = vunpack.c.l.b16 %v2876
        %v2941 = vunpack.c.l.b16 %v2877
        %v2942 = vunpack.c.l.b16 %v2878
        %v2943 = vunpack.c.l.b16 %v2879
        %v2944 = vunpack.c.l.b16 %v2880
        %v2945 = vunpack.c.l.b16 %v2881
        %v2946 = vunpack.c.l.b16 %v2882
        %v2947 = vunpack.c.l.b16 %v2883
        %v2948 = vunpack.c.l.b16 %v2884
        %v2949 = vunpack.c.l.b16 %v2885
        %v2950 = vunpack.c.l.b16 %v2886
        %v2951 = vunpack.c.l.b16 %v2887
        %v2952 = vunpack.c.l.b16 %v2888
        %v2953 = vunpack.c.l.b16 %v2889
        %v2954 = vunpack.c.l.b16 %v2890
        %v2955 = vunpack.c.l.b16 %v2891
        %v2956 = vunpack.c.l.b16 %v2892
        %v2957 = vunpack.c.l.b16 %v2893
        %v2958 = vunpack.c.l.b16 %v2894
        %v2959 = vunpack.c.l.b16 %v2895
        %v2960 = vunpack.c.l.b16 %v2896
        %v2961 = vunpack.c.l.b16 %v2897
        %v2962 = vpack.c.b16 %v2931, %v2930
        %v2963 = vpack.c.b16 %v2933, %v2932
        %v2964 = vpack.c.b16 %v2935, %v2934
        %v2965 = vpack.c.b16 %v2937, %v2936
        %v2966 = vpack.c.b16 %v2939, %v2938
        %v2967 = vpack.c.b16 %v2941, %v2940
        %v2968 = vpack.c.b16 %v2943, %v2942
        %v2969 = vpack.c.b16 %v2945, %v2944
        %v2970 = vpack.c.b16 %v2947, %v2946
        %v2971 = vpack.c.b16 %v2949, %v2948
        %v2972 = vpack.c.b16 %v2951, %v2950
        %v2973 = vpack.c.b16 %v2953, %v2952
        %v2974 = vpack.c.b16 %v2955, %v2954
        %v2975 = vpack.c.b16 %v2957, %v2956
        %v2976 = vpack.c.b16 %v2959, %v2958
        %v2977 = vpack.c.b16 %v2961, %v2960
        %2994 = vst [vmem:[#allocation3 + $0x30] sm:$0xff] %v2962
        %2995 = vst [vmem:[#allocation3 + $0x78] sm:$0xff] %v2963
        %2996 = vst [vmem:[#allocation3 + $0xc0] sm:$0xff] %v2964
        %2997 = vst [vmem:[#allocation3 + $0x108] sm:$0xff] %v2965
        %2998 = vst [vmem:[#allocation3 + $0x150] sm:$0xff] %v2966
        %2999 = vst [vmem:[#allocation3 + $0x198] sm:$0xff] %v2967
        %3000 = vst [vmem:[#allocation3 + $0x1e0] sm:$0xff] %v2968
        %3001 = vst [vmem:[#allocation3 + $0x228] sm:$0xff] %v2969
        %3002 = vst [vmem:[#allocation3 + $0x270] sm:$0xff] %v2970
        %3003 = vst [vmem:[#allocation3 + $0x2b8] sm:$0xff] %v2971
        %3004 = vst [vmem:[#allocation3 + $0x300] sm:$0xff] %v2972
        %3005 = vst [vmem:[#allocation3 + $0x348] sm:$0xff] %v2973
        %3006 = vst [vmem:[#allocation3 + $0x390] sm:$0xff] %v2974
        %3007 = vst [vmem:[#allocation3 + $0x3d8] sm:$0xff] %v2975
        %3008 = vst [vmem:[#allocation3 + $0x420] sm:$0xff] %v2976
        %3009 = vst [vmem:[#allocation3 + $0x468] sm:$0xff] %v2977
        %v3010 = vld [vmem:[%s2865] sm:$0xf]
        %v3011 = vld [vmem:[%s2865 + $0x4] sm:$0xf]
        %v3012 = vld [vmem:[%s2865 + $0x8] sm:$0x1]
        %v3013 = vld [vmem:[%s2865 + $0xc] sm:$0xf]
        %v3014 = vld [vmem:[%s2865 + $0x10] sm:$0xf]
        %v3015 = vld [vmem:[%s2865 + $0x14] sm:$0x1]
        %v3016 = vld [vmem:[%s2865 + $0x18] sm:$0xf]
        %v3017 = vld [vmem:[%s2865 + $0x1c] sm:$0xf]
        %v3018 = vld [vmem:[%s2865 + $0x20] sm:$0x1]
        %v3019 = vld [vmem:[%s2865 + $0x24] sm:$0xf]
        %v3020 = vld [vmem:[%s2865 + $0x28] sm:$0xf]
        %v3021 = vld [vmem:[%s2865 + $0x2c] sm:$0x1]
        %v3022 = vld [vmem:[%s2865 + $0x30] sm:$0xf]
        %v3023 = vld [vmem:[%s2865 + $0x34] sm:$0xf]
        %v3024 = vld [vmem:[%s2865 + $0x38] sm:$0x1]
        %v3025 = vld [vmem:[%s2865 + $0x3c] sm:$0xf]
        %v3026 = vld [vmem:[%s2865 + $0x40] sm:$0xf]
        %v3027 = vld [vmem:[%s2865 + $0x44] sm:$0x1]
        %v3028 = vld [vmem:[%s2865 + $0x48] sm:$0xf]
        %v3029 = vld [vmem:[%s2865 + $0x4c] sm:$0xf]
        %v3030 = vld [vmem:[%s2865 + $0x50] sm:$0x1]
        %v3031 = vld [vmem:[%s2865 + $0x54] sm:$0xf]
        %v3032 = vld [vmem:[%s2865 + $0x58] sm:$0xf]
        %v3033 = vld [vmem:[%s2865 + $0x5c] sm:$0x1]
        %v3034 = vld [vmem:[%s2865 + $0x60] sm:$0xf]
        %v3035 = vld [vmem:[%s2865 + $0x64] sm:$0xf]
        %v3036 = vld [vmem:[%s2865 + $0x68] sm:$0x1]
        %v3037 = vld [vmem:[%s2865 + $0x6c] sm:$0xf]
        %v3038 = vld [vmem:[%s2865 + $0x70] sm:$0xf]
        %v3039 = vld [vmem:[%s2865 + $0x74] sm:$0x1]
        %v3040 = vld [vmem:[%s2865 + $0x78] sm:$0xf]
        %v3041 = vld [vmem:[%s2865 + $0x7c] sm:$0xf]
        %v3042 = vld [vmem:[%s2865 + $0x80] sm:$0x1]
        %v3043 = vld [vmem:[%s2865 + $0x84] sm:$0xf]
        %v3044 = vld [vmem:[%s2865 + $0x88] sm:$0xf]
        %v3045 = vld [vmem:[%s2865 + $0x8c] sm:$0x1]
        %v3046 = vld [vmem:[%s2865 + $0x90] sm:$0xf]
        %v3047 = vld [vmem:[%s2865 + $0x94] sm:$0xf]
        %v3048 = vld [vmem:[%s2865 + $0x98] sm:$0x1]
        %v3049 = vld [vmem:[%s2865 + $0x9c] sm:$0xf]
        %v3050 = vld [vmem:[%s2865 + $0xa0] sm:$0xf]
        %v3051 = vld [vmem:[%s2865 + $0xa4] sm:$0x1]
        %v3052 = vld [vmem:[%s2865 + $0xa8] sm:$0xf]
        %v3053 = vld [vmem:[%s2865 + $0xac] sm:$0xf]
        %v3054 = vld [vmem:[%s2865 + $0xb0] sm:$0x1]
        %v3055 = vld [vmem:[%s2865 + $0xb4] sm:$0xf]
        %v3056 = vld [vmem:[%s2865 + $0xb8] sm:$0xf]
        %v3057 = vld [vmem:[%s2865 + $0xbc] sm:$0x1]
        %v3059 = vshrl.u32 %v3010, 16
        %v3061 = vrot.slane %v3059, 4
        %v3062 = vshll.u32 %v3010, 16
        %v3064 = vrot.slane %v3062, 5
        %v3065 = vor.u32 %v3061, %v3064
        %v3066 = vrot.slane %v3065, 4
        %v3068 = vshll.u32 %v3011, 16
        %v3070 = vrot.slane %v3068, 5
        %v3071 = vsel %vm1165, %v3066, %v3070
        %v3072 = vshrl.u32 %v3011, 16
        %v3074 = vrot.slane %v3072, 4
        %v3075 = vor.u32 %v3074, %v3070
        %v3076 = vrot.slane %v3075, 4
        %v3078 = vshll.u32 %v3012, 16
        %v3080 = vrot.slane %v3078, 5
        %v3081 = vsel %vm1165, %v3076, %v3080
        %v3083 = vshrl.u32 %v3013, 16
        %v3085 = vrot.slane %v3083, 4
        %v3086 = vshll.u32 %v3013, 16
        %v3088 = vrot.slane %v3086, 5
        %v3089 = vor.u32 %v3085, %v3088
        %v3090 = vrot.slane %v3089, 4
        %v3092 = vshll.u32 %v3014, 16
        %v3094 = vrot.slane %v3092, 5
        %v3095 = vsel %vm1165, %v3090, %v3094
        %v3096 = vshrl.u32 %v3014, 16
        %v3098 = vrot.slane %v3096, 4
        %v3099 = vor.u32 %v3098, %v3094
        %v3100 = vrot.slane %v3099, 4
        %v3102 = vshll.u32 %v3015, 16
        %v3104 = vrot.slane %v3102, 5
        %v3105 = vsel %vm1165, %v3100, %v3104
        %v3107 = vshrl.u32 %v3016, 16
        %v3109 = vrot.slane %v3107, 4
        %v3110 = vshll.u32 %v3016, 16
        %v3112 = vrot.slane %v3110, 5
        %v3113 = vor.u32 %v3109, %v3112
        %v3114 = vrot.slane %v3113, 4
        %v3116 = vshll.u32 %v3017, 16
        %v3118 = vrot.slane %v3116, 5
        %v3119 = vsel %vm1165, %v3114, %v3118
        %v3120 = vshrl.u32 %v3017, 16
        %v3122 = vrot.slane %v3120, 4
        %v3123 = vor.u32 %v3122, %v3118
        %v3124 = vrot.slane %v3123, 4
        %v3126 = vshll.u32 %v3018, 16
        %v3128 = vrot.slane %v3126, 5
        %v3129 = vsel %vm1165, %v3124, %v3128
        %v3131 = vshrl.u32 %v3019, 16
        %v3133 = vrot.slane %v3131, 4
        %v3134 = vshll.u32 %v3019, 16
        %v3136 = vrot.slane %v3134, 5
        %v3137 = vor.u32 %v3133, %v3136
        %v3138 = vrot.slane %v3137, 4
        %v3140 = vshll.u32 %v3020, 16
        %v3142 = vrot.slane %v3140, 5
        %v3143 = vsel %vm1165, %v3138, %v3142
        %v3144 = vshrl.u32 %v3020, 16
        %v3146 = vrot.slane %v3144, 4
        %v3147 = vor.u32 %v3146, %v3142
        %v3148 = vrot.slane %v3147, 4
        %v3150 = vshll.u32 %v3021, 16
        %v3152 = vrot.slane %v3150, 5
        %v3153 = vsel %vm1165, %v3148, %v3152
        %v3155 = vshrl.u32 %v3022, 16
        %v3157 = vrot.slane %v3155, 4
        %v3158 = vshll.u32 %v3022, 16
        %v3160 = vrot.slane %v3158, 5
        %v3161 = vor.u32 %v3157, %v3160
        %v3162 = vrot.slane %v3161, 4
        %v3164 = vshll.u32 %v3023, 16
        %v3166 = vrot.slane %v3164, 5
        %v3167 = vsel %vm1165, %v3162, %v3166
        %v3168 = vshrl.u32 %v3023, 16
        %v3170 = vrot.slane %v3168, 4
        %v3171 = vor.u32 %v3170, %v3166
        %v3172 = vrot.slane %v3171, 4
        %v3174 = vshll.u32 %v3024, 16
        %v3176 = vrot.slane %v3174, 5
        %v3177 = vsel %vm1165, %v3172, %v3176
        %v3179 = vshrl.u32 %v3025, 16
        %v3181 = vrot.slane %v3179, 4
        %v3182 = vshll.u32 %v3025, 16
        %v3184 = vrot.slane %v3182, 5
        %v3185 = vor.u32 %v3181, %v3184
        %v3186 = vrot.slane %v3185, 4
        %v3188 = vshll.u32 %v3026, 16
        %v3190 = vrot.slane %v3188, 5
        %v3191 = vsel %vm1165, %v3186, %v3190
        %v3192 = vshrl.u32 %v3026, 16
        %v3194 = vrot.slane %v3192, 4
        %v3195 = vor.u32 %v3194, %v3190
        %v3196 = vrot.slane %v3195, 4
        %v3198 = vshll.u32 %v3027, 16
        %v3200 = vrot.slane %v3198, 5
        %v3201 = vsel %vm1165, %v3196, %v3200
        %v3203 = vshrl.u32 %v3028, 16
        %v3205 = vrot.slane %v3203, 4
        %v3206 = vshll.u32 %v3028, 16
        %v3208 = vrot.slane %v3206, 5
        %v3209 = vor.u32 %v3205, %v3208
        %v3210 = vrot.slane %v3209, 4
        %v3212 = vshll.u32 %v3029, 16
        %v3214 = vrot.slane %v3212, 5
        %v3215 = vsel %vm1165, %v3210, %v3214
        %v3216 = vshrl.u32 %v3029, 16
        %v3218 = vrot.slane %v3216, 4
        %v3219 = vor.u32 %v3218, %v3214
        %v3220 = vrot.slane %v3219, 4
        %v3222 = vshll.u32 %v3030, 16
        %v3224 = vrot.slane %v3222, 5
        %v3225 = vsel %vm1165, %v3220, %v3224
        %v3227 = vshrl.u32 %v3031, 16
        %v3229 = vrot.slane %v3227, 4
        %v3230 = vshll.u32 %v3031, 16
        %v3232 = vrot.slane %v3230, 5
        %v3233 = vor.u32 %v3229, %v3232
        %v3234 = vrot.slane %v3233, 4
        %v3236 = vshll.u32 %v3032, 16
        %v3238 = vrot.slane %v3236, 5
        %v3239 = vsel %vm1165, %v3234, %v3238
        %v3240 = vshrl.u32 %v3032, 16
        %v3242 = vrot.slane %v3240, 4
        %v3243 = vor.u32 %v3242, %v3238
        %v3244 = vrot.slane %v3243, 4
        %v3246 = vshll.u32 %v3033, 16
        %v3248 = vrot.slane %v3246, 5
        %v3249 = vsel %vm1165, %v3244, %v3248
        %v3251 = vshrl.u32 %v3034, 16
        %v3253 = vrot.slane %v3251, 4
        %v3254 = vshll.u32 %v3034, 16
        %v3256 = vrot.slane %v3254, 5
        %v3257 = vor.u32 %v3253, %v3256
        %v3258 = vrot.slane %v3257, 4
        %v3260 = vshll.u32 %v3035, 16
        %v3262 = vrot.slane %v3260, 5
        %v3263 = vsel %vm1165, %v3258, %v3262
        %v3264 = vshrl.u32 %v3035, 16
        %v3266 = vrot.slane %v3264, 4
        %v3267 = vor.u32 %v3266, %v3262
        %v3268 = vrot.slane %v3267, 4
        %v3270 = vshll.u32 %v3036, 16
        %v3272 = vrot.slane %v3270, 5
        %v3273 = vsel %vm1165, %v3268, %v3272
        %v3275 = vshrl.u32 %v3037, 16
        %v3277 = vrot.slane %v3275, 4
        %v3278 = vshll.u32 %v3037, 16
        %v3280 = vrot.slane %v3278, 5
        %v3281 = vor.u32 %v3277, %v3280
        %v3282 = vrot.slane %v3281, 4
        %v3284 = vshll.u32 %v3038, 16
        %v3286 = vrot.slane %v3284, 5
        %v3287 = vsel %vm1165, %v3282, %v3286
        %v3288 = vshrl.u32 %v3038, 16
        %v3290 = vrot.slane %v3288, 4
        %v3291 = vor.u32 %v3290, %v3286
        %v3292 = vrot.slane %v3291, 4
        %v3294 = vshll.u32 %v3039, 16
        %v3296 = vrot.slane %v3294, 5
        %v3297 = vsel %vm1165, %v3292, %v3296
        %v3299 = vshrl.u32 %v3040, 16
        %v3301 = vrot.slane %v3299, 4
        %v3302 = vshll.u32 %v3040, 16
        %v3304 = vrot.slane %v3302, 5
        %v3305 = vor.u32 %v3301, %v3304
        %v3306 = vrot.slane %v3305, 4
        %v3308 = vshll.u32 %v3041, 16
        %v3310 = vrot.slane %v3308, 5
        %v3311 = vsel %vm1165, %v3306, %v3310
        %v3312 = vshrl.u32 %v3041, 16
        %v3314 = vrot.slane %v3312, 4
        %v3315 = vor.u32 %v3314, %v3310
        %v3316 = vrot.slane %v3315, 4
        %v3318 = vshll.u32 %v3042, 16
        %v3320 = vrot.slane %v3318, 5
        %v3321 = vsel %vm1165, %v3316, %v3320
        %v3323 = vshrl.u32 %v3043, 16
        %v3325 = vrot.slane %v3323, 4
        %v3326 = vshll.u32 %v3043, 16
        %v3328 = vrot.slane %v3326, 5
        %v3329 = vor.u32 %v3325, %v3328
        %v3330 = vrot.slane %v3329, 4
        %v3332 = vshll.u32 %v3044, 16
        %v3334 = vrot.slane %v3332, 5
        %v3335 = vsel %vm1165, %v3330, %v3334
        %v3336 = vshrl.u32 %v3044, 16
        %v3338 = vrot.slane %v3336, 4
        %v3339 = vor.u32 %v3338, %v3334
        %v3340 = vrot.slane %v3339, 4
        %v3342 = vshll.u32 %v3045, 16
        %v3344 = vrot.slane %v3342, 5
        %v3345 = vsel %vm1165, %v3340, %v3344
        %v3347 = vshrl.u32 %v3046, 16
        %v3349 = vrot.slane %v3347, 4
        %v3350 = vshll.u32 %v3046, 16
        %v3352 = vrot.slane %v3350, 5
        %v3353 = vor.u32 %v3349, %v3352
        %v3354 = vrot.slane %v3353, 4
        %v3356 = vshll.u32 %v3047, 16
        %v3358 = vrot.slane %v3356, 5
        %v3359 = vsel %vm1165, %v3354, %v3358
        %v3360 = vshrl.u32 %v3047, 16
        %v3362 = vrot.slane %v3360, 4
        %v3363 = vor.u32 %v3362, %v3358
        %v3364 = vrot.slane %v3363, 4
        %v3366 = vshll.u32 %v3048, 16
        %v3368 = vrot.slane %v3366, 5
        %v3369 = vsel %vm1165, %v3364, %v3368
        %v3371 = vshrl.u32 %v3049, 16
        %v3373 = vrot.slane %v3371, 4
        %v3374 = vshll.u32 %v3049, 16
        %v3376 = vrot.slane %v3374, 5
        %v3377 = vor.u32 %v3373, %v3376
        %v3378 = vrot.slane %v3377, 4
        %v3380 = vshll.u32 %v3050, 16
        %v3382 = vrot.slane %v3380, 5
        %v3383 = vsel %vm1165, %v3378, %v3382
        %v3384 = vshrl.u32 %v3050, 16
        %v3386 = vrot.slane %v3384, 4
        %v3387 = vor.u32 %v3386, %v3382
        %v3388 = vrot.slane %v3387, 4
        %v3390 = vshll.u32 %v3051, 16
        %v3392 = vrot.slane %v3390, 5
        %v3393 = vsel %vm1165, %v3388, %v3392
        %v3395 = vshrl.u32 %v3052, 16
        %v3397 = vrot.slane %v3395, 4
        %v3398 = vshll.u32 %v3052, 16
        %v3400 = vrot.slane %v3398, 5
        %v3401 = vor.u32 %v3397, %v3400
        %v3402 = vrot.slane %v3401, 4
        %v3404 = vshll.u32 %v3053, 16
        %v3406 = vrot.slane %v3404, 5
        %v3407 = vsel %vm1165, %v3402, %v3406
        %v3408 = vshrl.u32 %v3053, 16
        %v3410 = vrot.slane %v3408, 4
        %v3411 = vor.u32 %v3410, %v3406
        %v3412 = vrot.slane %v3411, 4
        %v3414 = vshll.u32 %v3054, 16
        %v3416 = vrot.slane %v3414, 5
        %v3417 = vsel %vm1165, %v3412, %v3416
        %v3419 = vshrl.u32 %v3055, 16
        %v3421 = vrot.slane %v3419, 4
        %v3422 = vshll.u32 %v3055, 16
        %v3424 = vrot.slane %v3422, 5
        %v3425 = vor.u32 %v3421, %v3424
        %v3426 = vrot.slane %v3425, 4
        %v3428 = vshll.u32 %v3056, 16
        %v3430 = vrot.slane %v3428, 5
        %v3431 = vsel %vm1165, %v3426, %v3430
        %v3432 = vshrl.u32 %v3056, 16
        %v3434 = vrot.slane %v3432, 4
        %v3435 = vor.u32 %v3434, %v3430
        %v3436 = vrot.slane %v3435, 4
        %v3438 = vshll.u32 %v3057, 16
        %v3440 = vrot.slane %v3438, 5
        %v3441 = vsel %vm1165, %v3436, %v3440
        %v3442 = vunpack.c.l.b16 %v3071
        %v3443 = vunpack.c.l.b16 %v3081
        %v3444 = vunpack.c.l.b16 %v3095
        %v3445 = vunpack.c.l.b16 %v3105
        %v3446 = vunpack.c.l.b16 %v3119
        %v3447 = vunpack.c.l.b16 %v3129
        %v3448 = vunpack.c.l.b16 %v3143
        %v3449 = vunpack.c.l.b16 %v3153
        %v3450 = vunpack.c.l.b16 %v3167
        %v3451 = vunpack.c.l.b16 %v3177
        %v3452 = vunpack.c.l.b16 %v3191
        %v3453 = vunpack.c.l.b16 %v3201
        %v3454 = vunpack.c.l.b16 %v3215
        %v3455 = vunpack.c.l.b16 %v3225
        %v3456 = vunpack.c.l.b16 %v3239
        %v3457 = vunpack.c.l.b16 %v3249
        %v3458 = vunpack.c.l.b16 %v3263
        %v3459 = vunpack.c.l.b16 %v3273
        %v3460 = vunpack.c.l.b16 %v3287
        %v3461 = vunpack.c.l.b16 %v3297
        %v3462 = vunpack.c.l.b16 %v3311
        %v3463 = vunpack.c.l.b16 %v3321
        %v3464 = vunpack.c.l.b16 %v3335
        %v3465 = vunpack.c.l.b16 %v3345
        %v3466 = vunpack.c.l.b16 %v3359
        %v3467 = vunpack.c.l.b16 %v3369
        %v3468 = vunpack.c.l.b16 %v3383
        %v3469 = vunpack.c.l.b16 %v3393
        %v3470 = vunpack.c.l.b16 %v3407
        %v3471 = vunpack.c.l.b16 %v3417
        %v3472 = vunpack.c.l.b16 %v3431
        %v3473 = vunpack.c.l.b16 %v3441
        %v3474 = vpack.c.b16 %v3443, %v3442
        %v3475 = vpack.c.b16 %v3445, %v3444
        %v3476 = vpack.c.b16 %v3447, %v3446
        %v3477 = vpack.c.b16 %v3449, %v3448
        %v3478 = vpack.c.b16 %v3451, %v3450
        %v3479 = vpack.c.b16 %v3453, %v3452
        %v3480 = vpack.c.b16 %v3455, %v3454
        %v3481 = vpack.c.b16 %v3457, %v3456
        %v3482 = vpack.c.b16 %v3459, %v3458
        %v3483 = vpack.c.b16 %v3461, %v3460
        %v3484 = vpack.c.b16 %v3463, %v3462
        %v3485 = vpack.c.b16 %v3465, %v3464
        %v3486 = vpack.c.b16 %v3467, %v3466
        %v3487 = vpack.c.b16 %v3469, %v3468
        %v3488 = vpack.c.b16 %v3471, %v3470
        %v3489 = vpack.c.b16 %v3473, %v3472
        %3506 = vst [vmem:[#allocation3 + $0x38] sm:$0xff] %v3474
        %3507 = vst [vmem:[#allocation3 + $0x80] sm:$0xff] %v3475
        %3508 = vst [vmem:[#allocation3 + $0xc8] sm:$0xff] %v3476
        %3509 = vst [vmem:[#allocation3 + $0x110] sm:$0xff] %v3477
        %3510 = vst [vmem:[#allocation3 + $0x158] sm:$0xff] %v3478
        %3511 = vst [vmem:[#allocation3 + $0x1a0] sm:$0xff] %v3479
        %3512 = vst [vmem:[#allocation3 + $0x1e8] sm:$0xff] %v3480
        %3513 = vst [vmem:[#allocation3 + $0x230] sm:$0xff] %v3481
        %3514 = vst [vmem:[#allocation3 + $0x278] sm:$0xff] %v3482
        %3515 = vst [vmem:[#allocation3 + $0x2c0] sm:$0xff] %v3483
        %3516 = vst [vmem:[#allocation3 + $0x308] sm:$0xff] %v3484
        %3517 = vst [vmem:[#allocation3 + $0x350] sm:$0xff] %v3485
        %3518 = vst [vmem:[#allocation3 + $0x398] sm:$0xff] %v3486
        %3519 = vst [vmem:[#allocation3 + $0x3e0] sm:$0xff] %v3487
        %3520 = vst [vmem:[#allocation3 + $0x428] sm:$0xff] %v3488
        %3521 = vst [vmem:[#allocation3 + $0x470] sm:$0xff] %v3489
        %v3522 = vld [vmem:[%s2865] sm:$0xe]
        %v3523 = vld [vmem:[%s2865 + $0x4] sm:$0xf]
        %v3524 = vld [vmem:[%s2865 + $0x8] sm:$0x1]
        %v3525 = vld [vmem:[%s2865 + $0xc] sm:$0xe]
        %v3526 = vld [vmem:[%s2865 + $0x10] sm:$0xf]
        %v3527 = vld [vmem:[%s2865 + $0x14] sm:$0x1]
        %v3528 = vld [vmem:[%s2865 + $0x18] sm:$0xe]
        %v3529 = vld [vmem:[%s2865 + $0x1c] sm:$0xf]
        %v3530 = vld [vmem:[%s2865 + $0x20] sm:$0x1]
        %v3531 = vld [vmem:[%s2865 + $0x24] sm:$0xe]
        %v3532 = vld [vmem:[%s2865 + $0x28] sm:$0xf]
        %v3533 = vld [vmem:[%s2865 + $0x2c] sm:$0x1]
        %v3534 = vld [vmem:[%s2865 + $0x30] sm:$0xe]
        %v3535 = vld [vmem:[%s2865 + $0x34] sm:$0xf]
        %v3536 = vld [vmem:[%s2865 + $0x38] sm:$0x1]
        %v3537 = vld [vmem:[%s2865 + $0x3c] sm:$0xe]
        %v3538 = vld [vmem:[%s2865 + $0x40] sm:$0xf]
        %v3539 = vld [vmem:[%s2865 + $0x44] sm:$0x1]
        %v3540 = vld [vmem:[%s2865 + $0x48] sm:$0xe]
        %v3541 = vld [vmem:[%s2865 + $0x4c] sm:$0xf]
        %v3542 = vld [vmem:[%s2865 + $0x50] sm:$0x1]
        %v3543 = vld [vmem:[%s2865 + $0x54] sm:$0xe]
        %v3544 = vld [vmem:[%s2865 + $0x58] sm:$0xf]
        %v3545 = vld [vmem:[%s2865 + $0x5c] sm:$0x1]
        %v3546 = vld [vmem:[%s2865 + $0x60] sm:$0xe]
        %v3547 = vld [vmem:[%s2865 + $0x64] sm:$0xf]
        %v3548 = vld [vmem:[%s2865 + $0x68] sm:$0x1]
        %v3549 = vld [vmem:[%s2865 + $0x6c] sm:$0xe]
        %v3550 = vld [vmem:[%s2865 + $0x70] sm:$0xf]
        %v3551 = vld [vmem:[%s2865 + $0x74] sm:$0x1]
        %v3552 = vld [vmem:[%s2865 + $0x78] sm:$0xe]
        %v3553 = vld [vmem:[%s2865 + $0x7c] sm:$0xf]
        %v3554 = vld [vmem:[%s2865 + $0x80] sm:$0x1]
        %v3555 = vld [vmem:[%s2865 + $0x84] sm:$0xe]
        %v3556 = vld [vmem:[%s2865 + $0x88] sm:$0xf]
        %v3557 = vld [vmem:[%s2865 + $0x8c] sm:$0x1]
        %v3558 = vld [vmem:[%s2865 + $0x90] sm:$0xe]
        %v3559 = vld [vmem:[%s2865 + $0x94] sm:$0xf]
        %v3560 = vld [vmem:[%s2865 + $0x98] sm:$0x1]
        %v3561 = vld [vmem:[%s2865 + $0x9c] sm:$0xe]
        %v3562 = vld [vmem:[%s2865 + $0xa0] sm:$0xf]
        %v3563 = vld [vmem:[%s2865 + $0xa4] sm:$0x1]
        %v3564 = vld [vmem:[%s2865 + $0xa8] sm:$0xe]
        %v3565 = vld [vmem:[%s2865 + $0xac] sm:$0xf]
        %v3566 = vld [vmem:[%s2865 + $0xb0] sm:$0x1]
        %v3567 = vld [vmem:[%s2865 + $0xb4] sm:$0xe]
        %v3568 = vld [vmem:[%s2865 + $0xb8] sm:$0xf]
        %v3569 = vld [vmem:[%s2865 + $0xbc] sm:$0x1]
        %v3618 = vrot.slane %v3522, 5
        %v3619 = vrot.slane %v3618, 4
        %v3620 = vrot.slane %v3523, 5
        %v3621 = vsel %vm1728, %v3619, %v3620
        %v3622 = vrot.slane %v3620, 4
        %v3623 = vrot.slane %v3524, 5
        %v3624 = vsel %vm1728, %v3622, %v3623
        %v3625 = vrot.slane %v3525, 5
        %v3626 = vrot.slane %v3625, 4
        %v3627 = vrot.slane %v3526, 5
        %v3628 = vsel %vm1728, %v3626, %v3627
        %v3629 = vrot.slane %v3627, 4
        %v3630 = vrot.slane %v3527, 5
        %v3631 = vsel %vm1728, %v3629, %v3630
        %v3632 = vrot.slane %v3528, 5
        %v3633 = vrot.slane %v3632, 4
        %v3634 = vrot.slane %v3529, 5
        %v3635 = vsel %vm1728, %v3633, %v3634
        %v3636 = vrot.slane %v3634, 4
        %v3637 = vrot.slane %v3530, 5
        %v3638 = vsel %vm1728, %v3636, %v3637
        %v3639 = vrot.slane %v3531, 5
        %v3640 = vrot.slane %v3639, 4
        %v3641 = vrot.slane %v3532, 5
        %v3642 = vsel %vm1728, %v3640, %v3641
        %v3643 = vrot.slane %v3641, 4
        %v3644 = vrot.slane %v3533, 5
        %v3645 = vsel %vm1728, %v3643, %v3644
        %v3646 = vrot.slane %v3534, 5
        %v3647 = vrot.slane %v3646, 4
        %v3648 = vrot.slane %v3535, 5
        %v3649 = vsel %vm1728, %v3647, %v3648
        %v3650 = vrot.slane %v3648, 4
        %v3651 = vrot.slane %v3536, 5
        %v3652 = vsel %vm1728, %v3650, %v3651
        %v3653 = vrot.slane %v3537, 5
        %v3654 = vrot.slane %v3653, 4
        %v3655 = vrot.slane %v3538, 5
        %v3656 = vsel %vm1728, %v3654, %v3655
        %v3657 = vrot.slane %v3655, 4
        %v3658 = vrot.slane %v3539, 5
        %v3659 = vsel %vm1728, %v3657, %v3658
        %v3660 = vrot.slane %v3540, 5
        %v3661 = vrot.slane %v3660, 4
        %v3662 = vrot.slane %v3541, 5
        %v3663 = vsel %vm1728, %v3661, %v3662
        %v3664 = vrot.slane %v3662, 4
        %v3665 = vrot.slane %v3542, 5
        %v3666 = vsel %vm1728, %v3664, %v3665
        %v3667 = vrot.slane %v3543, 5
        %v3668 = vrot.slane %v3667, 4
        %v3669 = vrot.slane %v3544, 5
        %v3670 = vsel %vm1728, %v3668, %v3669
        %v3671 = vrot.slane %v3669, 4
        %v3672 = vrot.slane %v3545, 5
        %v3673 = vsel %vm1728, %v3671, %v3672
        %v3674 = vrot.slane %v3546, 5
        %v3675 = vrot.slane %v3674, 4
        %v3676 = vrot.slane %v3547, 5
        %v3677 = vsel %vm1728, %v3675, %v3676
        %v3678 = vrot.slane %v3676, 4
        %v3679 = vrot.slane %v3548, 5
        %v3680 = vsel %vm1728, %v3678, %v3679
        %v3681 = vrot.slane %v3549, 5
        %v3682 = vrot.slane %v3681, 4
        %v3683 = vrot.slane %v3550, 5
        %v3684 = vsel %vm1728, %v3682, %v3683
        %v3685 = vrot.slane %v3683, 4
        %v3686 = vrot.slane %v3551, 5
        %v3687 = vsel %vm1728, %v3685, %v3686
        %v3688 = vrot.slane %v3552, 5
        %v3689 = vrot.slane %v3688, 4
        %v3690 = vrot.slane %v3553, 5
        %v3691 = vsel %vm1728, %v3689, %v3690
        %v3692 = vrot.slane %v3690, 4
        %v3693 = vrot.slane %v3554, 5
        %v3694 = vsel %vm1728, %v3692, %v3693
        %v3695 = vrot.slane %v3555, 5
        %v3696 = vrot.slane %v3695, 4
        %v3697 = vrot.slane %v3556, 5
        %v3698 = vsel %vm1728, %v3696, %v3697
        %v3699 = vrot.slane %v3697, 4
        %v3700 = vrot.slane %v3557, 5
        %v3701 = vsel %vm1728, %v3699, %v3700
        %v3702 = vrot.slane %v3558, 5
        %v3703 = vrot.slane %v3702, 4
        %v3704 = vrot.slane %v3559, 5
        %v3705 = vsel %vm1728, %v3703, %v3704
        %v3706 = vrot.slane %v3704, 4
        %v3707 = vrot.slane %v3560, 5
        %v3708 = vsel %vm1728, %v3706, %v3707
        %v3709 = vrot.slane %v3561, 5
        %v3710 = vrot.slane %v3709, 4
        %v3711 = vrot.slane %v3562, 5
        %v3712 = vsel %vm1728, %v3710, %v3711
        %v3713 = vrot.slane %v3711, 4
        %v3714 = vrot.slane %v3563, 5
        %v3715 = vsel %vm1728, %v3713, %v3714
        %v3716 = vrot.slane %v3564, 5
        %v3717 = vrot.slane %v3716, 4
        %v3718 = vrot.slane %v3565, 5
        %v3719 = vsel %vm1728, %v3717, %v3718
        %v3720 = vrot.slane %v3718, 4
        %v3721 = vrot.slane %v3566, 5
        %v3722 = vsel %vm1728, %v3720, %v3721
        %v3723 = vrot.slane %v3567, 5
        %v3724 = vrot.slane %v3723, 4
        %v3725 = vrot.slane %v3568, 5
        %v3726 = vsel %vm1728, %v3724, %v3725
        %v3727 = vrot.slane %v3725, 4
        %v3728 = vrot.slane %v3569, 5
        %v3729 = vsel %vm1728, %v3727, %v3728
        %v3730 = vunpack.c.l.b16 %v3621
        %v3731 = vunpack.c.l.b16 %v3624
        %v3732 = vunpack.c.l.b16 %v3628
        %v3733 = vunpack.c.l.b16 %v3631
        %v3734 = vunpack.c.l.b16 %v3635
        %v3735 = vunpack.c.l.b16 %v3638
        %v3736 = vunpack.c.l.b16 %v3642
        %v3737 = vunpack.c.l.b16 %v3645
        %v3738 = vunpack.c.l.b16 %v3649
        %v3739 = vunpack.c.l.b16 %v3652
        %v3740 = vunpack.c.l.b16 %v3656
        %v3741 = vunpack.c.l.b16 %v3659
        %v3742 = vunpack.c.l.b16 %v3663
        %v3743 = vunpack.c.l.b16 %v3666
        %v3744 = vunpack.c.l.b16 %v3670
        %v3745 = vunpack.c.l.b16 %v3673
        %v3746 = vunpack.c.l.b16 %v3677
        %v3747 = vunpack.c.l.b16 %v3680
        %v3748 = vunpack.c.l.b16 %v3684
        %v3749 = vunpack.c.l.b16 %v3687
        %v3750 = vunpack.c.l.b16 %v3691
        %v3751 = vunpack.c.l.b16 %v3694
        %v3752 = vunpack.c.l.b16 %v3698
        %v3753 = vunpack.c.l.b16 %v3701
        %v3754 = vunpack.c.l.b16 %v3705
        %v3755 = vunpack.c.l.b16 %v3708
        %v3756 = vunpack.c.l.b16 %v3712
        %v3757 = vunpack.c.l.b16 %v3715
        %v3758 = vunpack.c.l.b16 %v3719
        %v3759 = vunpack.c.l.b16 %v3722
        %v3760 = vunpack.c.l.b16 %v3726
        %v3761 = vunpack.c.l.b16 %v3729
        %v3762 = vpack.c.b16 %v3731, %v3730
        %v3763 = vpack.c.b16 %v3733, %v3732
        %v3764 = vpack.c.b16 %v3735, %v3734
        %v3765 = vpack.c.b16 %v3737, %v3736
        %v3766 = vpack.c.b16 %v3739, %v3738
        %v3767 = vpack.c.b16 %v3741, %v3740
        %v3768 = vpack.c.b16 %v3743, %v3742
        %v3769 = vpack.c.b16 %v3745, %v3744
        %v3770 = vpack.c.b16 %v3747, %v3746
        %v3771 = vpack.c.b16 %v3749, %v3748
        %v3772 = vpack.c.b16 %v3751, %v3750
        %v3773 = vpack.c.b16 %v3753, %v3752
        %v3774 = vpack.c.b16 %v3755, %v3754
        %v3775 = vpack.c.b16 %v3757, %v3756
        %v3776 = vpack.c.b16 %v3759, %v3758
        %v3777 = vpack.c.b16 %v3761, %v3760
        %3794 = vst [vmem:[#allocation3 + $0x40] sm:$0xff] %v3762
        %3795 = vst [vmem:[#allocation3 + $0x88] sm:$0xff] %v3763
        %3796 = vst [vmem:[#allocation3 + $0xd0] sm:$0xff] %v3764
        %3797 = vst [vmem:[#allocation3 + $0x118] sm:$0xff] %v3765
        %3798 = vst [vmem:[#allocation3 + $0x160] sm:$0xff] %v3766
        %3799 = vst [vmem:[#allocation3 + $0x1a8] sm:$0xff] %v3767
        %3800 = vst [vmem:[#allocation3 + $0x1f0] sm:$0xff] %v3768
        %3801 = vst [vmem:[#allocation3 + $0x238] sm:$0xff] %v3769
        %3802 = vst [vmem:[#allocation3 + $0x280] sm:$0xff] %v3770
        %3803 = vst [vmem:[#allocation3 + $0x2c8] sm:$0xff] %v3771
        %3804 = vst [vmem:[#allocation3 + $0x310] sm:$0xff] %v3772
        %3805 = vst [vmem:[#allocation3 + $0x358] sm:$0xff] %v3773
        %3806 = vst [vmem:[#allocation3 + $0x3a0] sm:$0xff] %v3774
        %3807 = vst [vmem:[#allocation3 + $0x3e8] sm:$0xff] %v3775
        %3808 = vst [vmem:[#allocation3 + $0x430] sm:$0xff] %v3776
        %3809 = vst [vmem:[#allocation3 + $0x478] sm:$0xff] %v3777
        %v3810 = vld [vmem:[#allocation3] sm:$0xff]
        %v3811 = vld [vmem:[#allocation3 + $0x8] sm:$0xff]
        %v3812 = vld [vmem:[#allocation3 + $0x10] sm:$0xff]
        %v3813 = vld [vmem:[#allocation3 + $0x18] sm:$0xff]
        %v3814 = vld [vmem:[#allocation3 + $0x20] sm:$0xff]
        %v3815 = vld [vmem:[#allocation3 + $0x28] sm:$0xff]
        %v3816 = vld [vmem:[#allocation3 + $0x30] sm:$0xff]
        %v3817 = vld [vmem:[#allocation3 + $0x38] sm:$0xff]
        %v3818 = vld [vmem:[#allocation3 + $0x40] sm:$0xff]
        %v3819 = vld [vmem:[#allocation3 + $0x48] sm:$0xff]
        %v3820 = vld [vmem:[#allocation3 + $0x50] sm:$0xff]
        %v3821 = vld [vmem:[#allocation3 + $0x58] sm:$0xff]
        %v3822 = vld [vmem:[#allocation3 + $0x60] sm:$0xff]
        %v3823 = vld [vmem:[#allocation3 + $0x68] sm:$0xff]
        %v3824 = vld [vmem:[#allocation3 + $0x70] sm:$0xff]
        %v3825 = vld [vmem:[#allocation3 + $0x78] sm:$0xff]
        %v3826 = vld [vmem:[#allocation3 + $0x80] sm:$0xff]
        %v3827 = vld [vmem:[#allocation3 + $0x88] sm:$0xff]
        %v3828 = vld [vmem:[#allocation3 + $0x90] sm:$0xff]
        %v3829 = vld [vmem:[#allocation3 + $0x98] sm:$0xff]
        %v3830 = vld [vmem:[#allocation3 + $0xa0] sm:$0xff]
        %v3831 = vld [vmem:[#allocation3 + $0xa8] sm:$0xff]
        %v3832 = vld [vmem:[#allocation3 + $0xb0] sm:$0xff]
        %v3833 = vld [vmem:[#allocation3 + $0xb8] sm:$0xff]
        %v3834 = vld [vmem:[#allocation3 + $0xc0] sm:$0xff]
        %v3835 = vld [vmem:[#allocation3 + $0xc8] sm:$0xff]
        %v3836 = vld [vmem:[#allocation3 + $0xd0] sm:$0xff]
        %v3837 = vld [vmem:[#allocation3 + $0xd8] sm:$0xff]
        %v3838 = vld [vmem:[#allocation3 + $0xe0] sm:$0xff]
        %v3839 = vld [vmem:[#allocation3 + $0xe8] sm:$0xff]
        %v3840 = vld [vmem:[#allocation3 + $0xf0] sm:$0xff]
        %v3841 = vld [vmem:[#allocation3 + $0xf8] sm:$0xff]
        %v3842 = vld [vmem:[#allocation3 + $0x100] sm:$0xff]
        %v3843 = vld [vmem:[#allocation3 + $0x108] sm:$0xff]
        %v3844 = vld [vmem:[#allocation3 + $0x110] sm:$0xff]
        %v3845 = vld [vmem:[#allocation3 + $0x118] sm:$0xff]
        %v3846 = vld [vmem:[#allocation3 + $0x120] sm:$0xff]
        %v3847 = vld [vmem:[#allocation3 + $0x128] sm:$0xff]
        %v3848 = vld [vmem:[#allocation3 + $0x130] sm:$0xff]
        %v3849 = vld [vmem:[#allocation3 + $0x138] sm:$0xff]
        %v3850 = vld [vmem:[#allocation3 + $0x140] sm:$0xff]
        %v3851 = vld [vmem:[#allocation3 + $0x148] sm:$0xff]
        %v3852 = vld [vmem:[#allocation3 + $0x150] sm:$0xff]
        %v3853 = vld [vmem:[#allocation3 + $0x158] sm:$0xff]
        %v3854 = vld [vmem:[#allocation3 + $0x160] sm:$0xff]
        %v3855 = vld [vmem:[#allocation3 + $0x168] sm:$0xff]
        %v3856 = vld [vmem:[#allocation3 + $0x170] sm:$0xff]
        %v3857 = vld [vmem:[#allocation3 + $0x178] sm:$0xff]
        %v3858 = vld [vmem:[#allocation3 + $0x180] sm:$0xff]
        %v3859 = vld [vmem:[#allocation3 + $0x188] sm:$0xff]
        %v3860 = vld [vmem:[#allocation3 + $0x190] sm:$0xff]
        %v3861 = vld [vmem:[#allocation3 + $0x198] sm:$0xff]
        %v3862 = vld [vmem:[#allocation3 + $0x1a0] sm:$0xff]
        %v3863 = vld [vmem:[#allocation3 + $0x1a8] sm:$0xff]
        %v3864 = vld [vmem:[#allocation3 + $0x1b0] sm:$0xff]
        %v3865 = vld [vmem:[#allocation3 + $0x1b8] sm:$0xff]
        %v3866 = vld [vmem:[#allocation3 + $0x1c0] sm:$0xff]
        %v3867 = vld [vmem:[#allocation3 + $0x1c8] sm:$0xff]
        %v3868 = vld [vmem:[#allocation3 + $0x1d0] sm:$0xff]
        %v3869 = vld [vmem:[#allocation3 + $0x1d8] sm:$0xff]
        %v3870 = vld [vmem:[#allocation3 + $0x1e0] sm:$0xff]
        %v3871 = vld [vmem:[#allocation3 + $0x1e8] sm:$0xff]
        %v3872 = vld [vmem:[#allocation3 + $0x1f0] sm:$0xff]
        %v3873 = vld [vmem:[#allocation3 + $0x1f8] sm:$0xff]
        %v3874 = vld [vmem:[#allocation3 + $0x200] sm:$0xff]
        %v3875 = vld [vmem:[#allocation3 + $0x208] sm:$0xff]
        %v3876 = vld [vmem:[#allocation3 + $0x210] sm:$0xff]
        %v3877 = vld [vmem:[#allocation3 + $0x218] sm:$0xff]
        %v3878 = vld [vmem:[#allocation3 + $0x220] sm:$0xff]
        %v3879 = vld [vmem:[#allocation3 + $0x228] sm:$0xff]
        %v3880 = vld [vmem:[#allocation3 + $0x230] sm:$0xff]
        %v3881 = vld [vmem:[#allocation3 + $0x238] sm:$0xff]
        %v3882 = vld [vmem:[#allocation3 + $0x240] sm:$0xff]
        %v3883 = vld [vmem:[#allocation3 + $0x248] sm:$0xff]
        %v3884 = vld [vmem:[#allocation3 + $0x250] sm:$0xff]
        %v3885 = vld [vmem:[#allocation3 + $0x258] sm:$0xff]
        %v3886 = vld [vmem:[#allocation3 + $0x260] sm:$0xff]
        %v3887 = vld [vmem:[#allocation3 + $0x268] sm:$0xff]
        %v3888 = vld [vmem:[#allocation3 + $0x270] sm:$0xff]
        %v3889 = vld [vmem:[#allocation3 + $0x278] sm:$0xff]
        %v3890 = vld [vmem:[#allocation3 + $0x280] sm:$0xff]
        %v3891 = vld [vmem:[#allocation3 + $0x288] sm:$0xff]
        %v3892 = vld [vmem:[#allocation3 + $0x290] sm:$0xff]
        %v3893 = vld [vmem:[#allocation3 + $0x298] sm:$0xff]
        %v3894 = vld [vmem:[#allocation3 + $0x2a0] sm:$0xff]
        %v3895 = vld [vmem:[#allocation3 + $0x2a8] sm:$0xff]
        %v3896 = vld [vmem:[#allocation3 + $0x2b0] sm:$0xff]
        %v3897 = vld [vmem:[#allocation3 + $0x2b8] sm:$0xff]
        %v3898 = vld [vmem:[#allocation3 + $0x2c0] sm:$0xff]
        %v3899 = vld [vmem:[#allocation3 + $0x2c8] sm:$0xff]
        %v3900 = vld [vmem:[#allocation3 + $0x2d0] sm:$0xff]
        %v3901 = vld [vmem:[#allocation3 + $0x2d8] sm:$0xff]
        %v3902 = vld [vmem:[#allocation3 + $0x2e0] sm:$0xff]
        %v3903 = vld [vmem:[#allocation3 + $0x2e8] sm:$0xff]
        %v3904 = vld [vmem:[#allocation3 + $0x2f0] sm:$0xff]
        %v3905 = vld [vmem:[#allocation3 + $0x2f8] sm:$0xff]
        %v3906 = vld [vmem:[#allocation3 + $0x300] sm:$0xff]
        %v3907 = vld [vmem:[#allocation3 + $0x308] sm:$0xff]
        %v3908 = vld [vmem:[#allocation3 + $0x310] sm:$0xff]
        %v3909 = vld [vmem:[#allocation3 + $0x318] sm:$0xff]
        %v3910 = vld [vmem:[#allocation3 + $0x320] sm:$0xff]
        %v3911 = vld [vmem:[#allocation3 + $0x328] sm:$0xff]
        %v3912 = vld [vmem:[#allocation3 + $0x330] sm:$0xff]
        %v3913 = vld [vmem:[#allocation3 + $0x338] sm:$0xff]
        %v3914 = vld [vmem:[#allocation3 + $0x340] sm:$0xff]
        %v3915 = vld [vmem:[#allocation3 + $0x348] sm:$0xff]
        %v3916 = vld [vmem:[#allocation3 + $0x350] sm:$0xff]
        %v3917 = vld [vmem:[#allocation3 + $0x358] sm:$0xff]
        %v3918 = vld [vmem:[#allocation3 + $0x360] sm:$0xff]
        %v3919 = vld [vmem:[#allocation3 + $0x368] sm:$0xff]
        %v3920 = vld [vmem:[#allocation3 + $0x370] sm:$0xff]
        %v3921 = vld [vmem:[#allocation3 + $0x378] sm:$0xff]
        %v3922 = vld [vmem:[#allocation3 + $0x380] sm:$0xff]
        %v3923 = vld [vmem:[#allocation3 + $0x388] sm:$0xff]
        %v3924 = vld [vmem:[#allocation3 + $0x390] sm:$0xff]
        %v3925 = vld [vmem:[#allocation3 + $0x398] sm:$0xff]
        %v3926 = vld [vmem:[#allocation3 + $0x3a0] sm:$0xff]
        %v3927 = vld [vmem:[#allocation3 + $0x3a8] sm:$0xff]
        %v3928 = vld [vmem:[#allocation3 + $0x3b0] sm:$0xff]
        %v3929 = vld [vmem:[#allocation3 + $0x3b8] sm:$0xff]
        %v3930 = vld [vmem:[#allocation3 + $0x3c0] sm:$0xff]
        %v3931 = vld [vmem:[#allocation3 + $0x3c8] sm:$0xff]
        %v3932 = vld [vmem:[#allocation3 + $0x3d0] sm:$0xff]
        %v3933 = vld [vmem:[#allocation3 + $0x3d8] sm:$0xff]
        %v3934 = vld [vmem:[#allocation3 + $0x3e0] sm:$0xff]
        %v3935 = vld [vmem:[#allocation3 + $0x3e8] sm:$0xff]
        %v3936 = vld [vmem:[#allocation3 + $0x3f0] sm:$0xff]
        %v3937 = vld [vmem:[#allocation3 + $0x3f8] sm:$0xff]
        %v3938 = vld [vmem:[#allocation3 + $0x400] sm:$0xff]
        %v3939 = vld [vmem:[#allocation3 + $0x408] sm:$0xff]
        %v3940 = vld [vmem:[#allocation3 + $0x410] sm:$0xff]
        %v3941 = vld [vmem:[#allocation3 + $0x418] sm:$0xff]
        %v3942 = vld [vmem:[#allocation3 + $0x420] sm:$0xff]
        %v3943 = vld [vmem:[#allocation3 + $0x428] sm:$0xff]
        %v3944 = vld [vmem:[#allocation3 + $0x430] sm:$0xff]
        %v3945 = vld [vmem:[#allocation3 + $0x438] sm:$0xff]
        %v3946 = vld [vmem:[#allocation3 + $0x440] sm:$0xff]
        %v3947 = vld [vmem:[#allocation3 + $0x448] sm:$0xff]
        %v3948 = vld [vmem:[#allocation3 + $0x450] sm:$0xff]
        %v3949 = vld [vmem:[#allocation3 + $0x458] sm:$0xff]
        %v3950 = vld [vmem:[#allocation3 + $0x460] sm:$0xff]
        %v3951 = vld [vmem:[#allocation3 + $0x468] sm:$0xff]
        %v3952 = vld [vmem:[#allocation3 + $0x470] sm:$0xff]
        %v3953 = vld [vmem:[#allocation3 + $0x478] sm:$0xff]
        %v3954 = vld [vmem:[#allocation7] sm:$0xf]
        %v3955 = vld [vmem:[#allocation7 + $0x4] sm:$0xf]
        %v3956 = vld [vmem:[#allocation7 + $0x8] sm:$0xf]
        %v3957 = vld [vmem:[#allocation7 + $0xc] sm:$0xf]
        %v3958 = vld [vmem:[#allocation7 + $0x10] sm:$0xf]
        %v3959 = vld [vmem:[#allocation7 + $0x14] sm:$0xf]
        %v3960 = vld [vmem:[#allocation7 + $0x18] sm:$0xf]
        %v3961 = vld [vmem:[#allocation7 + $0x1c] sm:$0xf]
        %v3962 = vld [vmem:[#allocation7 + $0x20] sm:$0xf]
        %v3963 = vld [vmem:[#allocation7 + $0x24] sm:$0xf]
        %v3964 = vld [vmem:[#allocation7 + $0x28] sm:$0xf]
        %v3965 = vld [vmem:[#allocation7 + $0x2c] sm:$0xf]
        %v3966 = vld [vmem:[#allocation7 + $0x30] sm:$0xf]
        %v3967 = vld [vmem:[#allocation7 + $0x34] sm:$0xf]
        %v3968 = vld [vmem:[#allocation7 + $0x38] sm:$0xf]
        %v3969 = vld [vmem:[#allocation7 + $0x3c] sm:$0xf]
        %v3970 = vld [vmem:[#allocation7 + $0x40] sm:$0xf]
        %v3971 = vld [vmem:[#allocation7 + $0x44] sm:$0xf]
        %v3972 = vld [vmem:[#allocation7 + $0x48] sm:$0xf]
        %v3973 = vld [vmem:[#allocation7 + $0x4c] sm:$0xf]
        %v3974 = vld [vmem:[#allocation7 + $0x50] sm:$0xf]
        %v3975 = vld [vmem:[#allocation7 + $0x54] sm:$0xf]
        %v3976 = vld [vmem:[#allocation7 + $0x58] sm:$0xf]
        %v3977 = vld [vmem:[#allocation7 + $0x5c] sm:$0xf]
        %v3978 = vld [vmem:[#allocation7 + $0x60] sm:$0xf]
        %v3979 = vld [vmem:[#allocation7 + $0x64] sm:$0xf]
        %v3980 = vld [vmem:[#allocation7 + $0x68] sm:$0xf]
        %v3981 = vld [vmem:[#allocation7 + $0x6c] sm:$0xf]
        %v3982 = vld [vmem:[#allocation7 + $0x70] sm:$0xf]
        %v3983 = vld [vmem:[#allocation7 + $0x74] sm:$0xf]
        %v3984 = vld [vmem:[#allocation7 + $0x78] sm:$0xf]
        %v3985 = vld [vmem:[#allocation7 + $0x7c] sm:$0xf]
        %v3986 = vld [vmem:[#allocation7 + $0x80] sm:$0xf]
        %v3987 = vld [vmem:[#allocation7 + $0x84] sm:$0xf]
        %v3988 = vld [vmem:[#allocation7 + $0x88] sm:$0xf]
        %v3989 = vld [vmem:[#allocation7 + $0x8c] sm:$0xf]
        %v3990 = vld [vmem:[#allocation7 + $0x90] sm:$0xf]
        %v3991 = vld [vmem:[#allocation7 + $0x94] sm:$0xf]
        %v3992 = vld [vmem:[#allocation7 + $0x98] sm:$0xf]
        %v3993 = vld [vmem:[#allocation7 + $0x9c] sm:$0xf]
        %v3994 = vld [vmem:[#allocation7 + $0xa0] sm:$0xf]
        %v3995 = vld [vmem:[#allocation7 + $0xa4] sm:$0xf]
        %v3996 = vld [vmem:[#allocation7 + $0xa8] sm:$0xf]
        %v3997 = vld [vmem:[#allocation7 + $0xac] sm:$0xf]
        %v3998 = vld [vmem:[#allocation7 + $0xb0] sm:$0xf]
        %v3999 = vld [vmem:[#allocation7 + $0xb4] sm:$0xf]
        %v4000 = vld [vmem:[#allocation7 + $0xb8] sm:$0xf]
        %v4001 = vld [vmem:[#allocation7 + $0xbc] sm:$0xf]
        %v4002 = vld [vmem:[#allocation7 + $0xc0] sm:$0xf]
        %v4003 = vld [vmem:[#allocation7 + $0xc4] sm:$0xf]
        %v4004 = vld [vmem:[#allocation7 + $0xc8] sm:$0xf]
        %v4005 = vld [vmem:[#allocation7 + $0xcc] sm:$0xf]
        %v4006 = vld [vmem:[#allocation7 + $0xd0] sm:$0xf]
        %v4007 = vld [vmem:[#allocation7 + $0xd4] sm:$0xf]
        %v4008 = vld [vmem:[#allocation7 + $0xd8] sm:$0xf]
        %v4009 = vld [vmem:[#allocation7 + $0xdc] sm:$0xf]
        %v4010 = vld [vmem:[#allocation7 + $0xe0] sm:$0xf]
        %v4011 = vld [vmem:[#allocation7 + $0xe4] sm:$0xf]
        %v4012 = vld [vmem:[#allocation7 + $0xe8] sm:$0xf]
        %v4013 = vld [vmem:[#allocation7 + $0xec] sm:$0xf]
        %v4014 = vld [vmem:[#allocation7 + $0xf0] sm:$0xf]
        %v4015 = vld [vmem:[#allocation7 + $0xf4] sm:$0xf]
        %v4016 = vld [vmem:[#allocation7 + $0xf8] sm:$0xf]
        %v4017 = vld [vmem:[#allocation7 + $0xfc] sm:$0xf]
        %v4018 = vld [vmem:[#allocation7 + $0x100] sm:$0xf]
        %v4019 = vld [vmem:[#allocation7 + $0x104] sm:$0xf]
        %v4020 = vld [vmem:[#allocation7 + $0x108] sm:$0xf]
        %v4021 = vld [vmem:[#allocation7 + $0x10c] sm:$0xf]
        %v4022 = vld [vmem:[#allocation7 + $0x110] sm:$0xf]
        %v4023 = vld [vmem:[#allocation7 + $0x114] sm:$0xf]
        %v4024 = vld [vmem:[#allocation7 + $0x118] sm:$0xf]
        %v4025 = vld [vmem:[#allocation7 + $0x11c] sm:$0xf]
        %v4026 = vld [vmem:[#allocation7 + $0x120] sm:$0xf]
        %v4027 = vld [vmem:[#allocation7 + $0x124] sm:$0xf]
        %v4028 = vld [vmem:[#allocation7 + $0x128] sm:$0xf]
        %v4029 = vld [vmem:[#allocation7 + $0x12c] sm:$0xf]
        %v4030 = vld [vmem:[#allocation7 + $0x130] sm:$0xf]
        %v4031 = vld [vmem:[#allocation7 + $0x134] sm:$0xf]
        %v4032 = vld [vmem:[#allocation7 + $0x138] sm:$0xf]
        %v4033 = vld [vmem:[#allocation7 + $0x13c] sm:$0xf]
        %v4034 = vld [vmem:[#allocation7 + $0x140] sm:$0xf]
        %v4035 = vld [vmem:[#allocation7 + $0x144] sm:$0xf]
        %v4036 = vld [vmem:[#allocation7 + $0x148] sm:$0xf]
        %v4037 = vld [vmem:[#allocation7 + $0x14c] sm:$0xf]
        %v4038 = vld [vmem:[#allocation7 + $0x150] sm:$0xf]
        %v4039 = vld [vmem:[#allocation7 + $0x154] sm:$0xf]
        %v4040 = vld [vmem:[#allocation7 + $0x158] sm:$0xf]
        %v4041 = vld [vmem:[#allocation7 + $0x15c] sm:$0xf]
        %v4042 = vld [vmem:[#allocation7 + $0x160] sm:$0xf]
        %v4043 = vld [vmem:[#allocation7 + $0x164] sm:$0xf]
        %v4044 = vld [vmem:[#allocation7 + $0x168] sm:$0xf]
        %v4045 = vld [vmem:[#allocation7 + $0x16c] sm:$0xf]
        %v4046 = vld [vmem:[#allocation7 + $0x170] sm:$0xf]
        %v4047 = vld [vmem:[#allocation7 + $0x174] sm:$0xf]
        %v4048 = vld [vmem:[#allocation7 + $0x178] sm:$0xf]
        %v4049 = vld [vmem:[#allocation7 + $0x17c] sm:$0xf]
        %v4050 = vld [vmem:[#allocation7 + $0x180] sm:$0xf]
        %v4051 = vld [vmem:[#allocation7 + $0x184] sm:$0xf]
        %v4052 = vld [vmem:[#allocation7 + $0x188] sm:$0xf]
        %v4053 = vld [vmem:[#allocation7 + $0x18c] sm:$0xf]
        %v4054 = vld [vmem:[#allocation7 + $0x190] sm:$0xf]
        %v4055 = vld [vmem:[#allocation7 + $0x194] sm:$0xf]
        %v4056 = vld [vmem:[#allocation7 + $0x198] sm:$0xf]
        %v4057 = vld [vmem:[#allocation7 + $0x19c] sm:$0xf]
        %v4058 = vld [vmem:[#allocation7 + $0x1a0] sm:$0xf]
        %v4059 = vld [vmem:[#allocation7 + $0x1a4] sm:$0xf]
        %v4060 = vld [vmem:[#allocation7 + $0x1a8] sm:$0xf]
        %v4061 = vld [vmem:[#allocation7 + $0x1ac] sm:$0xf]
        %v4062 = vld [vmem:[#allocation7 + $0x1b0] sm:$0xf]
        %v4063 = vld [vmem:[#allocation7 + $0x1b4] sm:$0xf]
        %v4064 = vld [vmem:[#allocation7 + $0x1b8] sm:$0xf]
        %v4065 = vld [vmem:[#allocation7 + $0x1bc] sm:$0xf]
        %v4066 = vld [vmem:[#allocation7 + $0x1c0] sm:$0xf]
        %v4067 = vld [vmem:[#allocation7 + $0x1c4] sm:$0xf]
        %v4068 = vld [vmem:[#allocation7 + $0x1c8] sm:$0xf]
        %v4069 = vld [vmem:[#allocation7 + $0x1cc] sm:$0xf]
        %v4070 = vld [vmem:[#allocation7 + $0x1d0] sm:$0xf]
        %v4071 = vld [vmem:[#allocation7 + $0x1d4] sm:$0xf]
        %v4072 = vld [vmem:[#allocation7 + $0x1d8] sm:$0xf]
        %v4073 = vld [vmem:[#allocation7 + $0x1dc] sm:$0xf]
        %v4074 = vld [vmem:[#allocation7 + $0x1e0] sm:$0xf]
        %v4075 = vld [vmem:[#allocation7 + $0x1e4] sm:$0xf]
        %v4076 = vld [vmem:[#allocation7 + $0x1e8] sm:$0xf]
        %v4077 = vld [vmem:[#allocation7 + $0x1ec] sm:$0xf]
        %v4078 = vld [vmem:[#allocation7 + $0x1f0] sm:$0xf]
        %v4079 = vld [vmem:[#allocation7 + $0x1f4] sm:$0xf]
        %v4080 = vld [vmem:[#allocation7 + $0x1f8] sm:$0xf]
        %v4081 = vld [vmem:[#allocation7 + $0x1fc] sm:$0xf]
        %v4082 = vld [vmem:[#allocation7 + $0x200] sm:$0xf]
        %v4083 = vld [vmem:[#allocation7 + $0x204] sm:$0xf]
        %v4084 = vld [vmem:[#allocation7 + $0x208] sm:$0xf]
        %v4085 = vld [vmem:[#allocation7 + $0x20c] sm:$0xf]
        %v4086 = vld [vmem:[#allocation7 + $0x210] sm:$0xf]
        %v4087 = vld [vmem:[#allocation7 + $0x214] sm:$0xf]
        %v4088 = vld [vmem:[#allocation7 + $0x218] sm:$0xf]
        %v4089 = vld [vmem:[#allocation7 + $0x21c] sm:$0xf]
        %v4090 = vld [vmem:[#allocation7 + $0x220] sm:$0xf]
        %v4091 = vld [vmem:[#allocation7 + $0x224] sm:$0xf]
        %v4092 = vld [vmem:[#allocation7 + $0x228] sm:$0xf]
        %v4093 = vld [vmem:[#allocation7 + $0x22c] sm:$0xf]
        %v4094 = vld [vmem:[#allocation7 + $0x230] sm:$0xf]
        %v4095 = vld [vmem:[#allocation7 + $0x234] sm:$0xf]
        %v4096 = vld [vmem:[#allocation7 + $0x238] sm:$0xf]
        %v4097 = vld [vmem:[#allocation7 + $0x23c] sm:$0xf]
        %v4098 = vld [vmem:[#allocation9] sm:$0x1]
        %v4100 = vlaneseq
        %v4101 = vshrl.u32 %v4100, 7
        %v4102 = vsub.s32 0, %v4101
        %v4103 = vrot.slane %v4098, %v4102
        %v4249 = vunpack.c.l.b16 %v3954
        %v4250 = vunpack.c.l.b16 %v3955
        %v4251 = vunpack.c.l.b16 %v3956
        %v4252 = vunpack.c.l.b16 %v3957
        %v4253 = vunpack.c.l.b16 %v3958
        %v4254 = vunpack.c.l.b16 %v3959
        %v4255 = vunpack.c.l.b16 %v3960
        %v4256 = vunpack.c.l.b16 %v3961
        %v4257 = vunpack.c.l.b16 %v3962
        %v4258 = vunpack.c.l.b16 %v3963
        %v4259 = vunpack.c.l.b16 %v3964
        %v4260 = vunpack.c.l.b16 %v3965
        %v4261 = vunpack.c.l.b16 %v3966
        %v4262 = vunpack.c.l.b16 %v3967
        %v4263 = vunpack.c.l.b16 %v3968
        %v4264 = vunpack.c.l.b16 %v3969
        %v4265 = vunpack.c.l.b16 %v3970
        %v4266 = vunpack.c.l.b16 %v3971
        %v4267 = vunpack.c.l.b16 %v3972
        %v4268 = vunpack.c.l.b16 %v3973
        %v4269 = vunpack.c.l.b16 %v3974
        %v4270 = vunpack.c.l.b16 %v3975
        %v4271 = vunpack.c.l.b16 %v3976
        %v4272 = vunpack.c.l.b16 %v3977
        %v4273 = vunpack.c.l.b16 %v3978
        %v4274 = vunpack.c.l.b16 %v3979
        %v4275 = vunpack.c.l.b16 %v3980
        %v4276 = vunpack.c.l.b16 %v3981
        %v4277 = vunpack.c.l.b16 %v3982
        %v4278 = vunpack.c.l.b16 %v3983
        %v4279 = vunpack.c.l.b16 %v3984
        %v4280 = vunpack.c.l.b16 %v3985
        %v4281 = vunpack.c.l.b16 %v3986
        %v4282 = vunpack.c.l.b16 %v3987
        %v4283 = vunpack.c.l.b16 %v3988
        %v4284 = vunpack.c.l.b16 %v3989
        %v4285 = vunpack.c.l.b16 %v3990
        %v4286 = vunpack.c.l.b16 %v3991
        %v4287 = vunpack.c.l.b16 %v3992
        %v4288 = vunpack.c.l.b16 %v3993
        %v4289 = vunpack.c.l.b16 %v3994
        %v4290 = vunpack.c.l.b16 %v3995
        %v4291 = vunpack.c.l.b16 %v3996
        %v4292 = vunpack.c.l.b16 %v3997
        %v4293 = vunpack.c.l.b16 %v3998
        %v4294 = vunpack.c.l.b16 %v3999
        %v4295 = vunpack.c.l.b16 %v4000
        %v4296 = vunpack.c.l.b16 %v4001
        %v4297 = vunpack.c.l.b16 %v4002
        %v4298 = vunpack.c.l.b16 %v4003
        %v4299 = vunpack.c.l.b16 %v4004
        %v4300 = vunpack.c.l.b16 %v4005
        %v4301 = vunpack.c.l.b16 %v4006
        %v4302 = vunpack.c.l.b16 %v4007
        %v4303 = vunpack.c.l.b16 %v4008
        %v4304 = vunpack.c.l.b16 %v4009
        %v4305 = vunpack.c.l.b16 %v4010
        %v4306 = vunpack.c.l.b16 %v4011
        %v4307 = vunpack.c.l.b16 %v4012
        %v4308 = vunpack.c.l.b16 %v4013
        %v4309 = vunpack.c.l.b16 %v4014
        %v4310 = vunpack.c.l.b16 %v4015
        %v4311 = vunpack.c.l.b16 %v4016
        %v4312 = vunpack.c.l.b16 %v4017
        %v4313 = vunpack.c.l.b16 %v4018
        %v4314 = vunpack.c.l.b16 %v4019
        %v4315 = vunpack.c.l.b16 %v4020
        %v4316 = vunpack.c.l.b16 %v4021
        %v4317 = vunpack.c.l.b16 %v4022
        %v4318 = vunpack.c.l.b16 %v4023
        %v4319 = vunpack.c.l.b16 %v4024
        %v4320 = vunpack.c.l.b16 %v4025
        %v4321 = vunpack.c.l.b16 %v4026
        %v4322 = vunpack.c.l.b16 %v4027
        %v4323 = vunpack.c.l.b16 %v4028
        %v4324 = vunpack.c.l.b16 %v4029
        %v4325 = vunpack.c.l.b16 %v4030
        %v4326 = vunpack.c.l.b16 %v4031
        %v4327 = vunpack.c.l.b16 %v4032
        %v4328 = vunpack.c.l.b16 %v4033
        %v4329 = vunpack.c.l.b16 %v4034
        %v4330 = vunpack.c.l.b16 %v4035
        %v4331 = vunpack.c.l.b16 %v4036
        %v4332 = vunpack.c.l.b16 %v4037
        %v4333 = vunpack.c.l.b16 %v4038
        %v4334 = vunpack.c.l.b16 %v4039
        %v4335 = vunpack.c.l.b16 %v4040
        %v4336 = vunpack.c.l.b16 %v4041
        %v4337 = vunpack.c.l.b16 %v4042
        %v4338 = vunpack.c.l.b16 %v4043
        %v4339 = vunpack.c.l.b16 %v4044
        %v4340 = vunpack.c.l.b16 %v4045
        %v4341 = vunpack.c.l.b16 %v4046
        %v4342 = vunpack.c.l.b16 %v4047
        %v4343 = vunpack.c.l.b16 %v4048
        %v4344 = vunpack.c.l.b16 %v4049
        %v4345 = vunpack.c.l.b16 %v4050
        %v4346 = vunpack.c.l.b16 %v4051
        %v4347 = vunpack.c.l.b16 %v4052
        %v4348 = vunpack.c.l.b16 %v4053
        %v4349 = vunpack.c.l.b16 %v4054
        %v4350 = vunpack.c.l.b16 %v4055
        %v4351 = vunpack.c.l.b16 %v4056
        %v4352 = vunpack.c.l.b16 %v4057
        %v4353 = vunpack.c.l.b16 %v4058
        %v4354 = vunpack.c.l.b16 %v4059
        %v4355 = vunpack.c.l.b16 %v4060
        %v4356 = vunpack.c.l.b16 %v4061
        %v4357 = vunpack.c.l.b16 %v4062
        %v4358 = vunpack.c.l.b16 %v4063
        %v4359 = vunpack.c.l.b16 %v4064
        %v4360 = vunpack.c.l.b16 %v4065
        %v4361 = vunpack.c.l.b16 %v4066
        %v4362 = vunpack.c.l.b16 %v4067
        %v4363 = vunpack.c.l.b16 %v4068
        %v4364 = vunpack.c.l.b16 %v4069
        %v4365 = vunpack.c.l.b16 %v4070
        %v4366 = vunpack.c.l.b16 %v4071
        %v4367 = vunpack.c.l.b16 %v4072
        %v4368 = vunpack.c.l.b16 %v4073
        %v4369 = vunpack.c.l.b16 %v4074
        %v4370 = vunpack.c.l.b16 %v4075
        %v4371 = vunpack.c.l.b16 %v4076
        %v4372 = vunpack.c.l.b16 %v4077
        %v4373 = vunpack.c.l.b16 %v4078
        %v4374 = vunpack.c.l.b16 %v4079
        %v4375 = vunpack.c.l.b16 %v4080
        %v4376 = vunpack.c.l.b16 %v4081
        %v4377 = vunpack.c.l.b16 %v4082
        %v4378 = vunpack.c.l.b16 %v4083
        %v4379 = vunpack.c.l.b16 %v4084
        %v4380 = vunpack.c.l.b16 %v4085
        %v4381 = vunpack.c.l.b16 %v4086
        %v4382 = vunpack.c.l.b16 %v4087
        %v4383 = vunpack.c.l.b16 %v4088
        %v4384 = vunpack.c.l.b16 %v4089
        %v4385 = vunpack.c.l.b16 %v4090
        %v4386 = vunpack.c.l.b16 %v4091
        %v4387 = vunpack.c.l.b16 %v4092
        %v4388 = vunpack.c.l.b16 %v4093
        %v4389 = vunpack.c.l.b16 %v4094
        %v4390 = vunpack.c.l.b16 %v4095
        %v4391 = vunpack.c.l.b16 %v4096
        %v4392 = vunpack.c.l.b16 %v4097
        %v4393 = vpack.c.b16 %v4250, %v4249
        %v4394 = vpack.c.b16 %v4252, %v4251
        %v4395 = vpack.c.b16 %v4254, %v4253
        %v4396 = vpack.c.b16 %v4256, %v4255
        %v4397 = vpack.c.b16 %v4258, %v4257
        %v4398 = vpack.c.b16 %v4260, %v4259
        %v4399 = vpack.c.b16 %v4262, %v4261
        %v4400 = vpack.c.b16 %v4264, %v4263
        %v4401 = vpack.c.b16 %v4266, %v4265
        %v4402 = vpack.c.b16 %v4268, %v4267
        %v4403 = vpack.c.b16 %v4270, %v4269
        %v4404 = vpack.c.b16 %v4272, %v4271
        %v4405 = vpack.c.b16 %v4274, %v4273
        %v4406 = vpack.c.b16 %v4276, %v4275
        %v4407 = vpack.c.b16 %v4278, %v4277
        %v4408 = vpack.c.b16 %v4280, %v4279
        %v4409 = vpack.c.b16 %v4282, %v4281
        %v4410 = vpack.c.b16 %v4284, %v4283
        %v4411 = vpack.c.b16 %v4286, %v4285
        %v4412 = vpack.c.b16 %v4288, %v4287
        %v4413 = vpack.c.b16 %v4290, %v4289
        %v4414 = vpack.c.b16 %v4292, %v4291
        %v4415 = vpack.c.b16 %v4294, %v4293
        %v4416 = vpack.c.b16 %v4296, %v4295
        %v4417 = vpack.c.b16 %v4298, %v4297
        %v4418 = vpack.c.b16 %v4300, %v4299
        %v4419 = vpack.c.b16 %v4302, %v4301
        %v4420 = vpack.c.b16 %v4304, %v4303
        %v4421 = vpack.c.b16 %v4306, %v4305
        %v4422 = vpack.c.b16 %v4308, %v4307
        %v4423 = vpack.c.b16 %v4310, %v4309
        %v4424 = vpack.c.b16 %v4312, %v4311
        %v4425 = vpack.c.b16 %v4314, %v4313
        %v4426 = vpack.c.b16 %v4316, %v4315
        %v4427 = vpack.c.b16 %v4318, %v4317
        %v4428 = vpack.c.b16 %v4320, %v4319
        %v4429 = vpack.c.b16 %v4322, %v4321
        %v4430 = vpack.c.b16 %v4324, %v4323
        %v4431 = vpack.c.b16 %v4326, %v4325
        %v4432 = vpack.c.b16 %v4328, %v4327
        %v4433 = vpack.c.b16 %v4330, %v4329
        %v4434 = vpack.c.b16 %v4332, %v4331
        %v4435 = vpack.c.b16 %v4334, %v4333
        %v4436 = vpack.c.b16 %v4336, %v4335
        %v4437 = vpack.c.b16 %v4338, %v4337
        %v4438 = vpack.c.b16 %v4340, %v4339
        %v4439 = vpack.c.b16 %v4342, %v4341
        %v4440 = vpack.c.b16 %v4344, %v4343
        %v4441 = vpack.c.b16 %v4346, %v4345
        %v4442 = vpack.c.b16 %v4348, %v4347
        %v4443 = vpack.c.b16 %v4350, %v4349
        %v4444 = vpack.c.b16 %v4352, %v4351
        %v4445 = vpack.c.b16 %v4354, %v4353
        %v4446 = vpack.c.b16 %v4356, %v4355
        %v4447 = vpack.c.b16 %v4358, %v4357
        %v4448 = vpack.c.b16 %v4360, %v4359
        %v4449 = vpack.c.b16 %v4362, %v4361
        %v4450 = vpack.c.b16 %v4364, %v4363
        %v4451 = vpack.c.b16 %v4366, %v4365
        %v4452 = vpack.c.b16 %v4368, %v4367
        %v4453 = vpack.c.b16 %v4370, %v4369
        %v4454 = vpack.c.b16 %v4372, %v4371
        %v4455 = vpack.c.b16 %v4374, %v4373
        %v4456 = vpack.c.b16 %v4376, %v4375
        %v4457 = vpack.c.b16 %v4378, %v4377
        %v4458 = vpack.c.b16 %v4380, %v4379
        %v4459 = vpack.c.b16 %v4382, %v4381
        %v4460 = vpack.c.b16 %v4384, %v4383
        %v4461 = vpack.c.b16 %v4386, %v4385
        %v4462 = vpack.c.b16 %v4388, %v4387
        %v4463 = vpack.c.b16 %v4390, %v4389
        %v4464 = vpack.c.b16 %v4392, %v4391
        %4537 = vmatprep.subr.bf16.mxu0 0
        %4538 = vmatpush1.bf16.msra.mxu0 %v4393
        %4539 = vmatprep.subr.bf16.mxu0 0
        %4540 = vmatpush1.bf16.msra.mxu0 %v4394
        %4541 = vmatprep.subr.bf16.mxu0 0
        %4542 = vmatpush1.bf16.msra.mxu0 %v4395
        %4543 = vmatprep.subr.bf16.mxu0 0
        %4544 = vmatpush1.bf16.msra.mxu0 %v4396
        %4545 = vmatprep.subr.bf16.mxu0 0
        %4546 = vmatpush1.bf16.msra.mxu0 %v4397
        %4547 = vmatprep.subr.bf16.mxu0 0
        %4548 = vmatpush1.bf16.msra.mxu0 %v4398
        %4549 = vmatprep.subr.bf16.mxu0 0
        %4550 = vmatpush1.bf16.msra.mxu0 %v4399
        %4551 = vmatprep.subr.bf16.mxu0 0
        %4552 = vmatpush1.bf16.msra.mxu0 %v4400
        %4553 = vmatprep.subr.bf16.mxu0 0
        %4554 = vmatpush1.bf16.msra.mxu0 %v4401
        %4555 = vmatprep.subr.bf16.mxu0 0
        %4556 = vmatpush1.bf16.msra.mxu0 %v4402
        %4557 = vmatprep.subr.bf16.mxu0 0
        %4558 = vmatpush1.bf16.msra.mxu0 %v4403
        %4559 = vmatprep.subr.bf16.mxu0 0
        %4560 = vmatpush1.bf16.msra.mxu0 %v4404
        %4561 = vmatprep.subr.bf16.mxu0 0
        %4562 = vmatpush1.bf16.msra.mxu0 %v4405
        %4563 = vmatprep.subr.bf16.mxu0 0
        %4564 = vmatpush1.bf16.msra.mxu0 %v4406
        %4565 = vmatprep.subr.bf16.mxu0 0
        %4566 = vmatpush1.bf16.msra.mxu0 %v4407
        %4567 = vmatprep.subr.bf16.mxu0 0
        %4568 = vmatpush1.bf16.msra.mxu0 %v4408
        %4569 = vmatprep.mubr.bf16.mxu0 %v3811
        %4570 = vmatmul.mubr.bf16.gmra.mrb[0].mxu0 %v3810
        %v4571 = vpop.f32.mrb[0].mxu0
        %v4572 = vadd.f32 %v4103, %v4571
        %v4573 = vpop.f32.mrb[0].mxu0
        %v4574 = vpop.f32.mrb[0].mxu0
        %v4575 = vadd.f32 %v4103, %v4574
        %v4576 = vpop.f32.mrb[0].mxu0
        %4577 = vmatprep.mubr.bf16.mxu0 %v3820
        %4578 = vmatmul.mubr.bf16.gmra.mrb[0].mxu0 %v3819
        %v4579 = vpop.f32.mrb[0].mxu0
        %v4580 = vadd.f32 %v4103, %v4579
        %v4581 = vpop.f32.mrb[0].mxu0
        %v4582 = vpop.f32.mrb[0].mxu0
        %v4583 = vadd.f32 %v4103, %v4582
        %v4584 = vpop.f32.mrb[0].mxu0
        %4585 = vmatprep.mubr.bf16.mxu0 %v3829
        %4586 = vmatmul.mubr.bf16.gmra.mrb[0].mxu0 %v3828
        %v4587 = vpop.f32.mrb[0].mxu0
        %v4588 = vadd.f32 %v4103, %v4587
        %v4589 = vpop.f32.mrb[0].mxu0
        %v4590 = vpop.f32.mrb[0].mxu0
        %v4591 = vadd.f32 %v4103, %v4590
        %v4592 = vpop.f32.mrb[0].mxu0
        %4593 = vmatprep.mubr.bf16.mxu0 %v3838
        %4594 = vmatmul.mubr.bf16.gmra.mrb[0].mxu0 %v3837
        %v4595 = vpop.f32.mrb[0].mxu0
        %v4596 = vadd.f32 %v4103, %v4595
        %v4597 = vpop.f32.mrb[0].mxu0
        %v4598 = vpop.f32.mrb[0].mxu0
        %v4599 = vadd.f32 %v4103, %v4598
        %v4600 = vpop.f32.mrb[0].mxu0
        %4601 = vmatprep.mubr.bf16.mxu0 %v3847
        %4602 = vmatmul.mubr.bf16.gmra.mrb[0].mxu0 %v3846
        %v4603 = vpop.f32.mrb[0].mxu0
        %v4604 = vadd.f32 %v4103, %v4603
        %v4605 = vpop.f32.mrb[0].mxu0
        %v4606 = vpop.f32.mrb[0].mxu0
        %v4607 = vadd.f32 %v4103, %v4606
        %v4608 = vpop.f32.mrb[0].mxu0
        %4609 = vmatprep.mubr.bf16.mxu0 %v3856
        %4610 = vmatmul.mubr.bf16.gmra.mrb[0].mxu0 %v3855
        %v4611 = vpop.f32.mrb[0].mxu0
        %v4612 = vadd.f32 %v4103, %v4611
        %v4613 = vpop.f32.mrb[0].mxu0
        %v4614 = vpop.f32.mrb[0].mxu0
        %v4615 = vadd.f32 %v4103, %v4614
        %v4616 = vpop.f32.mrb[0].mxu0
        %4617 = vmatprep.mubr.bf16.mxu0 %v3865
        %4618 = vmatmul.mubr.bf16.gmra.mrb[0].mxu0 %v3864
        %v4619 = vpop.f32.mrb[0].mxu0
        %v4620 = vadd.f32 %v4103, %v4619
        %v4621 = vpop.f32.mrb[0].mxu0
        %v4622 = vpop.f32.mrb[0].mxu0
        %v4623 = vadd.f32 %v4103, %v4622
        %v4624 = vpop.f32.mrb[0].mxu0
        %4625 = vmatprep.mubr.bf16.mxu0 %v3874
        %4626 = vmatmul.mubr.bf16.gmra.mrb[0].mxu0 %v3873
        %v4627 = vpop.f32.mrb[0].mxu0
        %v4628 = vadd.f32 %v4103, %v4627
        %v4629 = vpop.f32.mrb[0].mxu0
        %v4630 = vpop.f32.mrb[0].mxu0
        %v4631 = vadd.f32 %v4103, %v4630
        %v4632 = vpop.f32.mrb[0].mxu0
        %4633 = vmatprep.mubr.bf16.mxu0 %v3883
        %4634 = vmatmul.mubr.bf16.gmra.mrb[0].mxu0 %v3882
        %v4635 = vpop.f32.mrb[0].mxu0
        %v4636 = vadd.f32 %v4103, %v4635
        %v4637 = vpop.f32.mrb[0].mxu0
        %v4638 = vpop.f32.mrb[0].mxu0
        %v4639 = vadd.f32 %v4103, %v4638
        %v4640 = vpop.f32.mrb[0].mxu0
        %4641 = vmatprep.mubr.bf16.mxu0 %v3892
        %4642 = vmatmul.mubr.bf16.gmra.mrb[0].mxu0 %v3891
        %v4643 = vpop.f32.mrb[0].mxu0
        %v4644 = vadd.f32 %v4103, %v4643
        %v4645 = vpop.f32.mrb[0].mxu0
        %v4646 = vpop.f32.mrb[0].mxu0
        %v4647 = vadd.f32 %v4103, %v4646
        %v4648 = vpop.f32.mrb[0].mxu0
        %4649 = vmatprep.mubr.bf16.mxu0 %v3901
        %4650 = vmatmul.mubr.bf16.gmra.mrb[0].mxu0 %v3900
        %v4651 = vpop.f32.mrb[0].mxu0
        %v4652 = vadd.f32 %v4103, %v4651
        %v4653 = vpop.f32.mrb[0].mxu0
        %v4654 = vpop.f32.mrb[0].mxu0
        %v4655 = vadd.f32 %v4103, %v4654
        %v4656 = vpop.f32.mrb[0].mxu0
        %4657 = vmatprep.mubr.bf16.mxu0 %v3910
        %4658 = vmatmul.mubr.bf16.gmra.mrb[0].mxu0 %v3909
        %v4659 = vpop.f32.mrb[0].mxu0
        %v4660 = vadd.f32 %v4103, %v4659
        %v4661 = vpop.f32.mrb[0].mxu0
        %v4662 = vpop.f32.mrb[0].mxu0
        %v4663 = vadd.f32 %v4103, %v4662
        %v4664 = vpop.f32.mrb[0].mxu0
        %4665 = vmatprep.mubr.bf16.mxu0 %v3919
        %4666 = vmatmul.mubr.bf16.gmra.mrb[0].mxu0 %v3918
        %v4667 = vpop.f32.mrb[0].mxu0
        %v4668 = vadd.f32 %v4103, %v4667
        %v4669 = vpop.f32.mrb[0].mxu0
        %v4670 = vpop.f32.mrb[0].mxu0
        %v4671 = vadd.f32 %v4103, %v4670
        %v4672 = vpop.f32.mrb[0].mxu0
        %4673 = vmatprep.mubr.bf16.mxu0 %v3928
        %4674 = vmatmul.mubr.bf16.gmra.mrb[0].mxu0 %v3927
        %v4675 = vpop.f32.mrb[0].mxu0
        %v4676 = vadd.f32 %v4103, %v4675
        %v4677 = vpop.f32.mrb[0].mxu0
        %v4678 = vpop.f32.mrb[0].mxu0
        %v4679 = vadd.f32 %v4103, %v4678
        %v4680 = vpop.f32.mrb[0].mxu0
        %4681 = vmatprep.mubr.bf16.mxu0 %v3937
        %4682 = vmatmul.mubr.bf16.gmra.mrb[0].mxu0 %v3936
        %v4683 = vpop.f32.mrb[0].mxu0
        %v4684 = vadd.f32 %v4103, %v4683
        %v4685 = vpop.f32.mrb[0].mxu0
        %v4686 = vpop.f32.mrb[0].mxu0
        %v4687 = vadd.f32 %v4103, %v4686
        %v4688 = vpop.f32.mrb[0].mxu0
        %4689 = vmatprep.mubr.bf16.mxu0 %v3946
        %4690 = vmatmul.mubr.bf16.gmra.mrb[0].mxu0 %v3945
        %v4691 = vpop.f32.mrb[0].mxu0
        %v4692 = vadd.f32 %v4103, %v4691
        %v4693 = vpop.f32.mrb[0].mxu0
        %v4694 = vpop.f32.mrb[0].mxu0
        %v4695 = vadd.f32 %v4103, %v4694
        %v4696 = vpop.f32.mrb[0].mxu0
        %4697 = vdwg.mxu0
        %4698 = vmatprep.subr.bf16.mxu0 0
        %4699 = vmatpush1.bf16.msra.mxu0 %v4409
        %4700 = vmatprep.subr.bf16.mxu0 0
        %4701 = vmatpush1.bf16.msra.mxu0 %v4410
        %4702 = vmatprep.subr.bf16.mxu0 0
        %4703 = vmatpush1.bf16.msra.mxu0 %v4411
        %4704 = vmatprep.subr.bf16.mxu0 0
        %4705 = vmatpush1.bf16.msra.mxu0 %v4412
        %4706 = vmatprep.subr.bf16.mxu0 0
        %4707 = vmatpush1.bf16.msra.mxu0 %v4413
        %4708 = vmatprep.subr.bf16.mxu0 0
        %4709 = vmatpush1.bf16.msra.mxu0 %v4414
        %4710 = vmatprep.subr.bf16.mxu0 0
        %4711 = vmatpush1.bf16.msra.mxu0 %v4415
        %4712 = vmatprep.subr.bf16.mxu0 0
        %4713 = vmatpush1.bf16.msra.mxu0 %v4416
        %4714 = vmatprep.subr.bf16.mxu0 0
        %4715 = vmatpush1.bf16.msra.mxu0 %v4417
        %4716 = vmatprep.subr.bf16.mxu0 0
        %4717 = vmatpush1.bf16.msra.mxu0 %v4418
        %4718 = vmatprep.subr.bf16.mxu0 0
        %4719 = vmatpush1.bf16.msra.mxu0 %v4419
        %4720 = vmatprep.subr.bf16.mxu0 0
        %4721 = vmatpush1.bf16.msra.mxu0 %v4420
        %4722 = vmatprep.subr.bf16.mxu0 0
        %4723 = vmatpush1.bf16.msra.mxu0 %v4421
        %4724 = vmatprep.subr.bf16.mxu0 0
        %4725 = vmatpush1.bf16.msra.mxu0 %v4422
        %4726 = vmatprep.subr.bf16.mxu0 0
        %4727 = vmatpush1.bf16.msra.mxu0 %v4423
        %4728 = vmatprep.subr.bf16.mxu0 0
        %4729 = vmatpush1.bf16.msra.mxu0 %v4424
        %4730 = vmatprep.mubr.bf16.mxu0 %v3813
        %4731 = vmatmul.mubr.bf16.gmra.mrb[0].mxu0 %v3812
        %v4732 = vpop.f32.mrb[0].mxu0
        %v4733 = vadd.f32 %v4572, %v4732
        %v4734 = vpop.f32.mrb[0].mxu0
        %v4735 = vpop.f32.mrb[0].mxu0
        %v4736 = vadd.f32 %v4575, %v4735
        %v4737 = vpop.f32.mrb[0].mxu0
        %4738 = vmatprep.mubr.bf16.mxu0 %v3822
        %4739 = vmatmul.mubr.bf16.gmra.mrb[0].mxu0 %v3821
        %v4740 = vpop.f32.mrb[0].mxu0
        %v4741 = vadd.f32 %v4580, %v4740
        %v4742 = vpop.f32.mrb[0].mxu0
        %v4743 = vpop.f32.mrb[0].mxu0
        %v4744 = vadd.f32 %v4583, %v4743
        %v4745 = vpop.f32.mrb[0].mxu0
        %4746 = vmatprep.mubr.bf16.mxu0 %v3831
        %4747 = vmatmul.mubr.bf16.gmra.mrb[0].mxu0 %v3830
        %v4748 = vpop.f32.mrb[0].mxu0
        %v4749 = vadd.f32 %v4588, %v4748
        %v4750 = vpop.f32.mrb[0].mxu0
        %v4751 = vpop.f32.mrb[0].mxu0
        %v4752 = vadd.f32 %v4591, %v4751
        %v4753 = vpop.f32.mrb[0].mxu0
        %4754 = vmatprep.mubr.bf16.mxu0 %v3840
        %4755 = vmatmul.mubr.bf16.gmra.mrb[0].mxu0 %v3839
        %v4756 = vpop.f32.mrb[0].mxu0
        %v4757 = vadd.f32 %v4596, %v4756
        %v4758 = vpop.f32.mrb[0].mxu0
        %v4759 = vpop.f32.mrb[0].mxu0
        %v4760 = vadd.f32 %v4599, %v4759
        %v4761 = vpop.f32.mrb[0].mxu0
        %4762 = vmatprep.mubr.bf16.mxu0 %v3849
        %4763 = vmatmul.mubr.bf16.gmra.mrb[0].mxu0 %v3848
        %v4764 = vpop.f32.mrb[0].mxu0
        %v4765 = vadd.f32 %v4604, %v4764
        %v4766 = vpop.f32.mrb[0].mxu0
        %v4767 = vpop.f32.mrb[0].mxu0
        %v4768 = vadd.f32 %v4607, %v4767
        %v4769 = vpop.f32.mrb[0].mxu0
        %4770 = vmatprep.mubr.bf16.mxu0 %v3858
        %4771 = vmatmul.mubr.bf16.gmra.mrb[0].mxu0 %v3857
        %v4772 = vpop.f32.mrb[0].mxu0
        %v4773 = vadd.f32 %v4612, %v4772
        %v4774 = vpop.f32.mrb[0].mxu0
        %v4775 = vpop.f32.mrb[0].mxu0
        %v4776 = vadd.f32 %v4615, %v4775
        %v4777 = vpop.f32.mrb[0].mxu0
        %4778 = vmatprep.mubr.bf16.mxu0 %v3867
        %4779 = vmatmul.mubr.bf16.gmra.mrb[0].mxu0 %v3866
        %v4780 = vpop.f32.mrb[0].mxu0
        %v4781 = vadd.f32 %v4620, %v4780
        %v4782 = vpop.f32.mrb[0].mxu0
        %v4783 = vpop.f32.mrb[0].mxu0
        %v4784 = vadd.f32 %v4623, %v4783
        %v4785 = vpop.f32.mrb[0].mxu0
        %4786 = vmatprep.mubr.bf16.mxu0 %v3876
        %4787 = vmatmul.mubr.bf16.gmra.mrb[0].mxu0 %v3875
        %v4788 = vpop.f32.mrb[0].mxu0
        %v4789 = vadd.f32 %v4628, %v4788
        %v4790 = vpop.f32.mrb[0].mxu0
        %v4791 = vpop.f32.mrb[0].mxu0
        %v4792 = vadd.f32 %v4631, %v4791
        %v4793 = vpop.f32.mrb[0].mxu0
        %4794 = vmatprep.mubr.bf16.mxu0 %v3885
        %4795 = vmatmul.mubr.bf16.gmra.mrb[0].mxu0 %v3884
        %v4796 = vpop.f32.mrb[0].mxu0
        %v4797 = vadd.f32 %v4636, %v4796
        %v4798 = vpop.f32.mrb[0].mxu0
        %v4799 = vpop.f32.mrb[0].mxu0
        %v4800 = vadd.f32 %v4639, %v4799
        %v4801 = vpop.f32.mrb[0].mxu0
        %4802 = vmatprep.mubr.bf16.mxu0 %v3894
        %4803 = vmatmul.mubr.bf16.gmra.mrb[0].mxu0 %v3893
        %v4804 = vpop.f32.mrb[0].mxu0
        %v4805 = vadd.f32 %v4644, %v4804
        %v4806 = vpop.f32.mrb[0].mxu0
        %v4807 = vpop.f32.mrb[0].mxu0
        %v4808 = vadd.f32 %v4647, %v4807
        %v4809 = vpop.f32.mrb[0].mxu0
        %4810 = vmatprep.mubr.bf16.mxu0 %v3903
        %4811 = vmatmul.mubr.bf16.gmra.mrb[0].mxu0 %v3902
        %v4812 = vpop.f32.mrb[0].mxu0
        %v4813 = vadd.f32 %v4652, %v4812
        %v4814 = vpop.f32.mrb[0].mxu0
        %v4815 = vpop.f32.mrb[0].mxu0
        %v4816 = vadd.f32 %v4655, %v4815
        %v4817 = vpop.f32.mrb[0].mxu0
        %4818 = vmatprep.mubr.bf16.mxu0 %v3912
        %4819 = vmatmul.mubr.bf16.gmra.mrb[0].mxu0 %v3911
        %v4820 = vpop.f32.mrb[0].mxu0
        %v4821 = vadd.f32 %v4660, %v4820
        %v4822 = vpop.f32.mrb[0].mxu0
        %v4823 = vpop.f32.mrb[0].mxu0
        %v4824 = vadd.f32 %v4663, %v4823
        %v4825 = vpop.f32.mrb[0].mxu0
        %4826 = vmatprep.mubr.bf16.mxu0 %v3921
        %4827 = vmatmul.mubr.bf16.gmra.mrb[0].mxu0 %v3920
        %v4828 = vpop.f32.mrb[0].mxu0
        %v4829 = vadd.f32 %v4668, %v4828
        %v4830 = vpop.f32.mrb[0].mxu0
        %v4831 = vpop.f32.mrb[0].mxu0
        %v4832 = vadd.f32 %v4671, %v4831
        %v4833 = vpop.f32.mrb[0].mxu0
        %4834 = vmatprep.mubr.bf16.mxu0 %v3930
        %4835 = vmatmul.mubr.bf16.gmra.mrb[0].mxu0 %v3929
        %v4836 = vpop.f32.mrb[0].mxu0
        %v4837 = vadd.f32 %v4676, %v4836
        %v4838 = vpop.f32.mrb[0].mxu0
        %v4839 = vpop.f32.mrb[0].mxu0
        %v4840 = vadd.f32 %v4679, %v4839
        %v4841 = vpop.f32.mrb[0].mxu0
        %4842 = vmatprep.mubr.bf16.mxu0 %v3939
        %4843 = vmatmul.mubr.bf16.gmra.mrb[0].mxu0 %v3938
        %v4844 = vpop.f32.mrb[0].mxu0
        %v4845 = vadd.f32 %v4684, %v4844
        %v4846 = vpop.f32.mrb[0].mxu0
        %v4847 = vpop.f32.mrb[0].mxu0
        %v4848 = vadd.f32 %v4687, %v4847
        %v4849 = vpop.f32.mrb[0].mxu0
        %4850 = vmatprep.mubr.bf16.mxu0 %v3948
        %4851 = vmatmul.mubr.bf16.gmra.mrb[0].mxu0 %v3947
        %v4852 = vpop.f32.mrb[0].mxu0
        %v4853 = vadd.f32 %v4692, %v4852
        %v4854 = vpop.f32.mrb[0].mxu0
        %v4855 = vpop.f32.mrb[0].mxu0
        %v4856 = vadd.f32 %v4695, %v4855
        %v4857 = vpop.f32.mrb[0].mxu0
        %4858 = vdwg.mxu0
        %4859 = vmatprep.subr.bf16.mxu0 0
        %4860 = vmatpush1.bf16.msra.mxu0 %v4425
        %4861 = vmatprep.subr.bf16.mxu0 0
        %4862 = vmatpush1.bf16.msra.mxu0 %v4426
        %4863 = vmatprep.subr.bf16.mxu0 0
        %4864 = vmatpush1.bf16.msra.mxu0 %v4427
        %4865 = vmatprep.subr.bf16.mxu0 0
        %4866 = vmatpush1.bf16.msra.mxu0 %v4428
        %4867 = vmatprep.subr.bf16.mxu0 0
        %4868 = vmatpush1.bf16.msra.mxu0 %v4429
        %4869 = vmatprep.subr.bf16.mxu0 0
        %4870 = vmatpush1.bf16.msra.mxu0 %v4430
        %4871 = vmatprep.subr.bf16.mxu0 0
        %4872 = vmatpush1.bf16.msra.mxu0 %v4431
        %4873 = vmatprep.subr.bf16.mxu0 0
        %4874 = vmatpush1.bf16.msra.mxu0 %v4432
        %4875 = vmatprep.subr.bf16.mxu0 0
        %4876 = vmatpush1.bf16.msra.mxu0 %v4433
        %4877 = vmatprep.subr.bf16.mxu0 0
        %4878 = vmatpush1.bf16.msra.mxu0 %v4434
        %4879 = vmatprep.subr.bf16.mxu0 0
        %4880 = vmatpush1.bf16.msra.mxu0 %v4435
        %4881 = vmatprep.subr.bf16.mxu0 0
        %4882 = vmatpush1.bf16.msra.mxu0 %v4436
        %4883 = vmatprep.subr.bf16.mxu0 0
        %4884 = vmatpush1.bf16.msra.mxu0 %v4437
        %4885 = vmatprep.subr.bf16.mxu0 0
        %4886 = vmatpush1.bf16.msra.mxu0 %v4438
        %4887 = vmatprep.subr.bf16.mxu0 0
        %4888 = vmatpush1.bf16.msra.mxu0 %v4439
        %4889 = vmatprep.subr.bf16.mxu0 0
        %4890 = vmatpush1.bf16.msra.mxu0 %v4440
        %4891 = vmatprep.mubr.bf16.mxu0 %v3815
        %4892 = vmatmul.mubr.bf16.gmra.mrb[0].mxu0 %v3814
        %v4893 = vpop.f32.mrb[0].mxu0
        %v4894 = vadd.f32 %v4733, %v4893
        %v4895 = vpop.f32.mrb[0].mxu0
        %v4896 = vpop.f32.mrb[0].mxu0
        %v4897 = vadd.f32 %v4736, %v4896
        %v4898 = vpop.f32.mrb[0].mxu0
        %4899 = vmatprep.mubr.bf16.mxu0 %v3824
        %4900 = vmatmul.mubr.bf16.gmra.mrb[0].mxu0 %v3823
        %v4901 = vpop.f32.mrb[0].mxu0
        %v4902 = vadd.f32 %v4741, %v4901
        %v4903 = vpop.f32.mrb[0].mxu0
        %v4904 = vpop.f32.mrb[0].mxu0
        %v4905 = vadd.f32 %v4744, %v4904
        %v4906 = vpop.f32.mrb[0].mxu0
        %4907 = vmatprep.mubr.bf16.mxu0 %v3833
        %4908 = vmatmul.mubr.bf16.gmra.mrb[0].mxu0 %v3832
        %v4909 = vpop.f32.mrb[0].mxu0
        %v4910 = vadd.f32 %v4749, %v4909
        %v4911 = vpop.f32.mrb[0].mxu0
        %v4912 = vpop.f32.mrb[0].mxu0
        %v4913 = vadd.f32 %v4752, %v4912
        %v4914 = vpop.f32.mrb[0].mxu0
        %4915 = vmatprep.mubr.bf16.mxu0 %v3842
        %4916 = vmatmul.mubr.bf16.gmra.mrb[0].mxu0 %v3841
        %v4917 = vpop.f32.mrb[0].mxu0
        %v4918 = vadd.f32 %v4757, %v4917
        %v4919 = vpop.f32.mrb[0].mxu0
        %v4920 = vpop.f32.mrb[0].mxu0
        %v4921 = vadd.f32 %v4760, %v4920
        %v4922 = vpop.f32.mrb[0].mxu0
        %4923 = vmatprep.mubr.bf16.mxu0 %v3851
        %4924 = vmatmul.mubr.bf16.gmra.mrb[0].mxu0 %v3850
        %v4925 = vpop.f32.mrb[0].mxu0
        %v4926 = vadd.f32 %v4765, %v4925
        %v4927 = vpop.f32.mrb[0].mxu0
        %v4928 = vpop.f32.mrb[0].mxu0
        %v4929 = vadd.f32 %v4768, %v4928
        %v4930 = vpop.f32.mrb[0].mxu0
        %4931 = vmatprep.mubr.bf16.mxu0 %v3860
        %4932 = vmatmul.mubr.bf16.gmra.mrb[0].mxu0 %v3859
        %v4933 = vpop.f32.mrb[0].mxu0
        %v4934 = vadd.f32 %v4773, %v4933
        %v4935 = vpop.f32.mrb[0].mxu0
        %v4936 = vpop.f32.mrb[0].mxu0
        %v4937 = vadd.f32 %v4776, %v4936
        %v4938 = vpop.f32.mrb[0].mxu0
        %4939 = vmatprep.mubr.bf16.mxu0 %v3869
        %4940 = vmatmul.mubr.bf16.gmra.mrb[0].mxu0 %v3868
        %v4941 = vpop.f32.mrb[0].mxu0
        %v4942 = vadd.f32 %v4781, %v4941
        %v4943 = vpop.f32.mrb[0].mxu0
        %v4944 = vpop.f32.mrb[0].mxu0
        %v4945 = vadd.f32 %v4784, %v4944
        %v4946 = vpop.f32.mrb[0].mxu0
        %4947 = vmatprep.mubr.bf16.mxu0 %v3878
        %4948 = vmatmul.mubr.bf16.gmra.mrb[0].mxu0 %v3877
        %v4949 = vpop.f32.mrb[0].mxu0
        %v4950 = vadd.f32 %v4789, %v4949
        %v4951 = vpop.f32.mrb[0].mxu0
        %v4952 = vpop.f32.mrb[0].mxu0
        %v4953 = vadd.f32 %v4792, %v4952
        %v4954 = vpop.f32.mrb[0].mxu0
        %4955 = vmatprep.mubr.bf16.mxu0 %v3887
        %4956 = vmatmul.mubr.bf16.gmra.mrb[0].mxu0 %v3886
        %v4957 = vpop.f32.mrb[0].mxu0
        %v4958 = vadd.f32 %v4797, %v4957
        %v4959 = vpop.f32.mrb[0].mxu0
        %v4960 = vpop.f32.mrb[0].mxu0
        %v4961 = vadd.f32 %v4800, %v4960
        %v4962 = vpop.f32.mrb[0].mxu0
        %4963 = vmatprep.mubr.bf16.mxu0 %v3896
        %4964 = vmatmul.mubr.bf16.gmra.mrb[0].mxu0 %v3895
        %v4965 = vpop.f32.mrb[0].mxu0
        %v4966 = vadd.f32 %v4805, %v4965
        %v4967 = vpop.f32.mrb[0].mxu0
        %v4968 = vpop.f32.mrb[0].mxu0
        %v4969 = vadd.f32 %v4808, %v4968
        %v4970 = vpop.f32.mrb[0].mxu0
        %4971 = vmatprep.mubr.bf16.mxu0 %v3905
        %4972 = vmatmul.mubr.bf16.gmra.mrb[0].mxu0 %v3904
        %v4973 = vpop.f32.mrb[0].mxu0
        %v4974 = vadd.f32 %v4813, %v4973
        %v4975 = vpop.f32.mrb[0].mxu0
        %v4976 = vpop.f32.mrb[0].mxu0
        %v4977 = vadd.f32 %v4816, %v4976
        %v4978 = vpop.f32.mrb[0].mxu0
        %4979 = vmatprep.mubr.bf16.mxu0 %v3914
        %4980 = vmatmul.mubr.bf16.gmra.mrb[0].mxu0 %v3913
        %v4981 = vpop.f32.mrb[0].mxu0
        %v4982 = vadd.f32 %v4821, %v4981
        %v4983 = vpop.f32.mrb[0].mxu0
        %v4984 = vpop.f32.mrb[0].mxu0
        %v4985 = vadd.f32 %v4824, %v4984
        %v4986 = vpop.f32.mrb[0].mxu0
        %4987 = vmatprep.mubr.bf16.mxu0 %v3923
        %4988 = vmatmul.mubr.bf16.gmra.mrb[0].mxu0 %v3922
        %v4989 = vpop.f32.mrb[0].mxu0
        %v4990 = vadd.f32 %v4829, %v4989
        %v4991 = vpop.f32.mrb[0].mxu0
        %v4992 = vpop.f32.mrb[0].mxu0
        %v4993 = vadd.f32 %v4832, %v4992
        %v4994 = vpop.f32.mrb[0].mxu0
        %4995 = vmatprep.mubr.bf16.mxu0 %v3932
        %4996 = vmatmul.mubr.bf16.gmra.mrb[0].mxu0 %v3931
        %v4997 = vpop.f32.mrb[0].mxu0
        %v4998 = vadd.f32 %v4837, %v4997
        %v4999 = vpop.f32.mrb[0].mxu0
        %v5000 = vpop.f32.mrb[0].mxu0
        %v5001 = vadd.f32 %v4840, %v5000
        %v5002 = vpop.f32.mrb[0].mxu0
        %5003 = vmatprep.mubr.bf16.mxu0 %v3941
        %5004 = vmatmul.mubr.bf16.gmra.mrb[0].mxu0 %v3940
        %v5005 = vpop.f32.mrb[0].mxu0
        %v5006 = vadd.f32 %v4845, %v5005
        %v5007 = vpop.f32.mrb[0].mxu0
        %v5008 = vpop.f32.mrb[0].mxu0
        %v5009 = vadd.f32 %v4848, %v5008
        %v5010 = vpop.f32.mrb[0].mxu0
        %5011 = vmatprep.mubr.bf16.mxu0 %v3950
        %5012 = vmatmul.mubr.bf16.gmra.mrb[0].mxu0 %v3949
        %v5013 = vpop.f32.mrb[0].mxu0
        %v5014 = vadd.f32 %v4853, %v5013
        %v5015 = vpop.f32.mrb[0].mxu0
        %v5016 = vpop.f32.mrb[0].mxu0
        %v5017 = vadd.f32 %v4856, %v5016
        %v5018 = vpop.f32.mrb[0].mxu0
        %5019 = vdwg.mxu0
        %5020 = vmatprep.subr.bf16.mxu0 0
        %5021 = vmatpush1.bf16.msra.mxu0 %v4441
        %5022 = vmatprep.subr.bf16.mxu0 0
        %5023 = vmatpush1.bf16.msra.mxu0 %v4442
        %5024 = vmatprep.subr.bf16.mxu0 0
        %5025 = vmatpush1.bf16.msra.mxu0 %v4443
        %5026 = vmatprep.subr.bf16.mxu0 0
        %5027 = vmatpush1.bf16.msra.mxu0 %v4444
        %5028 = vmatprep.subr.bf16.mxu0 0
        %5029 = vmatpush1.bf16.msra.mxu0 %v4445
        %5030 = vmatprep.subr.bf16.mxu0 0
        %5031 = vmatpush1.bf16.msra.mxu0 %v4446
        %5032 = vmatprep.subr.bf16.mxu0 0
        %5033 = vmatpush1.bf16.msra.mxu0 %v4447
        %5034 = vmatprep.subr.bf16.mxu0 0
        %5035 = vmatpush1.bf16.msra.mxu0 %v4448
        %5036 = vmatprep.subr.bf16.mxu0 0
        %5037 = vmatpush1.bf16.msra.mxu0 %v4449
        %5038 = vmatprep.subr.bf16.mxu0 0
        %5039 = vmatpush1.bf16.msra.mxu0 %v4450
        %5040 = vmatprep.subr.bf16.mxu0 0
        %5041 = vmatpush1.bf16.msra.mxu0 %v4451
        %5042 = vmatprep.subr.bf16.mxu0 0
        %5043 = vmatpush1.bf16.msra.mxu0 %v4452
        %5044 = vmatprep.subr.bf16.mxu0 0
        %5045 = vmatpush1.bf16.msra.mxu0 %v4453
        %5046 = vmatprep.subr.bf16.mxu0 0
        %5047 = vmatpush1.bf16.msra.mxu0 %v4454
        %5048 = vmatprep.subr.bf16.mxu0 0
        %5049 = vmatpush1.bf16.msra.mxu0 %v4455
        %5050 = vmatprep.subr.bf16.mxu0 0
        %5051 = vmatpush1.bf16.msra.mxu0 %v4456
        %5052 = vmatprep.mubr.bf16.mxu0 %v3817
        %5053 = vmatmul.mubr.bf16.gmra.mrb[0].mxu0 %v3816
        %v5054 = vpop.f32.mrb[0].mxu0
        %v5055 = vadd.f32 %v4894, %v5054
        %v5056 = vpop.f32.mrb[0].mxu0
        %v5057 = vpop.f32.mrb[0].mxu0
        %v5058 = vadd.f32 %v4897, %v5057
        %v5059 = vpop.f32.mrb[0].mxu0
        %5060 = vmatprep.mubr.bf16.mxu0 %v3826
        %5061 = vmatmul.mubr.bf16.gmra.mrb[0].mxu0 %v3825
        %v5062 = vpop.f32.mrb[0].mxu0
        %v5063 = vadd.f32 %v4902, %v5062
        %v5064 = vpop.f32.mrb[0].mxu0
        %v5065 = vpop.f32.mrb[0].mxu0
        %v5066 = vadd.f32 %v4905, %v5065
        %v5067 = vpop.f32.mrb[0].mxu0
        %5068 = vmatprep.mubr.bf16.mxu0 %v3835
        %5069 = vmatmul.mubr.bf16.gmra.mrb[0].mxu0 %v3834
        %v5070 = vpop.f32.mrb[0].mxu0
        %v5071 = vadd.f32 %v4910, %v5070
        %v5072 = vpop.f32.mrb[0].mxu0
        %v5073 = vpop.f32.mrb[0].mxu0
        %v5074 = vadd.f32 %v4913, %v5073
        %v5075 = vpop.f32.mrb[0].mxu0
        %5076 = vmatprep.mubr.bf16.mxu0 %v3844
        %5077 = vmatmul.mubr.bf16.gmra.mrb[0].mxu0 %v3843
        %v5078 = vpop.f32.mrb[0].mxu0
        %v5079 = vadd.f32 %v4918, %v5078
        %v5080 = vpop.f32.mrb[0].mxu0
        %v5081 = vpop.f32.mrb[0].mxu0
        %v5082 = vadd.f32 %v4921, %v5081
        %v5083 = vpop.f32.mrb[0].mxu0
        %5084 = vmatprep.mubr.bf16.mxu0 %v3853
        %5085 = vmatmul.mubr.bf16.gmra.mrb[0].mxu0 %v3852
        %v5086 = vpop.f32.mrb[0].mxu0
        %v5087 = vadd.f32 %v4926, %v5086
        %v5088 = vpop.f32.mrb[0].mxu0
        %v5089 = vpop.f32.mrb[0].mxu0
        %v5090 = vadd.f32 %v4929, %v5089
        %v5091 = vpop.f32.mrb[0].mxu0
        %5092 = vmatprep.mubr.bf16.mxu0 %v3862
        %5093 = vmatmul.mubr.bf16.gmra.mrb[0].mxu0 %v3861
        %v5094 = vpop.f32.mrb[0].mxu0
        %v5095 = vadd.f32 %v4934, %v5094
        %v5096 = vpop.f32.mrb[0].mxu0
        %v5097 = vpop.f32.mrb[0].mxu0
        %v5098 = vadd.f32 %v4937, %v5097
        %v5099 = vpop.f32.mrb[0].mxu0
        %5100 = vmatprep.mubr.bf16.mxu0 %v3871
        %5101 = vmatmul.mubr.bf16.gmra.mrb[0].mxu0 %v3870
        %v5102 = vpop.f32.mrb[0].mxu0
        %v5103 = vadd.f32 %v4942, %v5102
        %v5104 = vpop.f32.mrb[0].mxu0
        %v5105 = vpop.f32.mrb[0].mxu0
        %v5106 = vadd.f32 %v4945, %v5105
        %v5107 = vpop.f32.mrb[0].mxu0
        %5108 = vmatprep.mubr.bf16.mxu0 %v3880
        %5109 = vmatmul.mubr.bf16.gmra.mrb[0].mxu0 %v3879
        %v5110 = vpop.f32.mrb[0].mxu0
        %v5111 = vadd.f32 %v4950, %v5110
        %v5112 = vpop.f32.mrb[0].mxu0
        %v5113 = vpop.f32.mrb[0].mxu0
        %v5114 = vadd.f32 %v4953, %v5113
        %v5115 = vpop.f32.mrb[0].mxu0
        %5116 = vmatprep.mubr.bf16.mxu0 %v3889
        %5117 = vmatmul.mubr.bf16.gmra.mrb[0].mxu0 %v3888
        %v5118 = vpop.f32.mrb[0].mxu0
        %v5119 = vadd.f32 %v4958, %v5118
        %v5120 = vpop.f32.mrb[0].mxu0
        %v5121 = vpop.f32.mrb[0].mxu0
        %v5122 = vadd.f32 %v4961, %v5121
        %v5123 = vpop.f32.mrb[0].mxu0
        %5124 = vmatprep.mubr.bf16.mxu0 %v3898
        %5125 = vmatmul.mubr.bf16.gmra.mrb[0].mxu0 %v3897
        %v5126 = vpop.f32.mrb[0].mxu0
        %v5127 = vadd.f32 %v4966, %v5126
        %v5128 = vpop.f32.mrb[0].mxu0
        %v5129 = vpop.f32.mrb[0].mxu0
        %v5130 = vadd.f32 %v4969, %v5129
        %v5131 = vpop.f32.mrb[0].mxu0
        %5132 = vmatprep.mubr.bf16.mxu0 %v3907
        %5133 = vmatmul.mubr.bf16.gmra.mrb[0].mxu0 %v3906
        %v5134 = vpop.f32.mrb[0].mxu0
        %v5135 = vadd.f32 %v4974, %v5134
        %v5136 = vpop.f32.mrb[0].mxu0
        %v5137 = vpop.f32.mrb[0].mxu0
        %v5138 = vadd.f32 %v4977, %v5137
        %v5139 = vpop.f32.mrb[0].mxu0
        %5140 = vmatprep.mubr.bf16.mxu0 %v3916
        %5141 = vmatmul.mubr.bf16.gmra.mrb[0].mxu0 %v3915
        %v5142 = vpop.f32.mrb[0].mxu0
        %v5143 = vadd.f32 %v4982, %v5142
        %v5144 = vpop.f32.mrb[0].mxu0
        %v5145 = vpop.f32.mrb[0].mxu0
        %v5146 = vadd.f32 %v4985, %v5145
        %v5147 = vpop.f32.mrb[0].mxu0
        %5148 = vmatprep.mubr.bf16.mxu0 %v3925
        %5149 = vmatmul.mubr.bf16.gmra.mrb[0].mxu0 %v3924
        %v5150 = vpop.f32.mrb[0].mxu0
        %v5151 = vadd.f32 %v4990, %v5150
        %v5152 = vpop.f32.mrb[0].mxu0
        %v5153 = vpop.f32.mrb[0].mxu0
        %v5154 = vadd.f32 %v4993, %v5153
        %v5155 = vpop.f32.mrb[0].mxu0
        %5156 = vmatprep.mubr.bf16.mxu0 %v3934
        %5157 = vmatmul.mubr.bf16.gmra.mrb[0].mxu0 %v3933
        %v5158 = vpop.f32.mrb[0].mxu0
        %v5159 = vadd.f32 %v4998, %v5158
        %v5160 = vpop.f32.mrb[0].mxu0
        %v5161 = vpop.f32.mrb[0].mxu0
        %v5162 = vadd.f32 %v5001, %v5161
        %v5163 = vpop.f32.mrb[0].mxu0
        %5164 = vmatprep.mubr.bf16.mxu0 %v3943
        %5165 = vmatmul.mubr.bf16.gmra.mrb[0].mxu0 %v3942
        %v5166 = vpop.f32.mrb[0].mxu0
        %v5167 = vadd.f32 %v5006, %v5166
        %v5168 = vpop.f32.mrb[0].mxu0
        %v5169 = vpop.f32.mrb[0].mxu0
        %v5170 = vadd.f32 %v5009, %v5169
        %v5171 = vpop.f32.mrb[0].mxu0
        %5172 = vmatprep.mubr.bf16.mxu0 %v3952
        %5173 = vmatmul.mubr.bf16.gmra.mrb[0].mxu0 %v3951
        %v5174 = vpop.f32.mrb[0].mxu0
        %v5175 = vadd.f32 %v5014, %v5174
        %v5176 = vpop.f32.mrb[0].mxu0
        %v5177 = vpop.f32.mrb[0].mxu0
        %v5178 = vadd.f32 %v5017, %v5177
        %v5179 = vpop.f32.mrb[0].mxu0
        %5180 = vdwg.mxu0
        %5181 = vmatprep.subr.bf16.mxu0 0
        %5182 = vmatpush1.bf16.msra.mxu0 %v4457
        %5183 = vmatprep.subr.bf16.mxu0 0
        %5184 = vmatpush1.bf16.msra.mxu0 %v4458
        %5185 = vmatprep.subr.bf16.mxu0 0
        %5186 = vmatpush1.bf16.msra.mxu0 %v4459
        %5187 = vmatprep.subr.bf16.mxu0 0
        %5188 = vmatpush1.bf16.msra.mxu0 %v4460
        %5189 = vmatprep.subr.bf16.mxu0 0
        %5190 = vmatpush1.bf16.msra.mxu0 %v4461
        %5191 = vmatprep.subr.bf16.mxu0 0
        %5192 = vmatpush1.bf16.msra.mxu0 %v4462
        %5193 = vmatprep.subr.bf16.mxu0 0
        %5194 = vmatpush1.bf16.msra.mxu0 %v4463
        %5195 = vmatprep.subr.bf16.mxu0 0
        %5196 = vmatpush1.bf16.msra.mxu0 %v4464
        %5197 = vmatprep.subr.bf16.mxu0 0
        %5198 = vmatpush1.bf16.msra.mxu0 0
        %5199 = vmatprep.subr.bf16.mxu0 0
        %5200 = vmatpush1.bf16.msra.mxu0 0
        %5201 = vmatprep.subr.bf16.mxu0 0
        %5202 = vmatpush1.bf16.msra.mxu0 0
        %5203 = vmatprep.subr.bf16.mxu0 0
        %5204 = vmatpush1.bf16.msra.mxu0 0
        %5205 = vmatprep.subr.bf16.mxu0 0
        %5206 = vmatpush1.bf16.msra.mxu0 0
        %5207 = vmatprep.subr.bf16.mxu0 0
        %5208 = vmatpush1.bf16.msra.mxu0 0
        %5209 = vmatprep.subr.bf16.mxu0 0
        %5210 = vmatpush1.bf16.msra.mxu0 0
        %5211 = vmatprep.subr.bf16.mxu0 0
        %5212 = vmatpush1.bf16.msra.mxu0 0
        %5213 = vmatprep.mubr.bf16.mxu0 0
        %5214 = vmatmul.mubr.bf16.gmra.mrb[0].mxu0 %v3818
        %v5215 = vpop.f32.mrb[0].mxu0
        %v5216 = vadd.f32 %v5055, %v5215
        %v5217 = vpop.f32.mrb[0].mxu0
        %v5218 = vpop.f32.mrb[0].mxu0
        %v5219 = vadd.f32 %v5058, %v5218
        %v5220 = vpop.f32.mrb[0].mxu0
        %5221 = vmatprep.mubr.bf16.mxu0 0
        %5222 = vmatmul.mubr.bf16.gmra.mrb[0].mxu0 %v3827
        %v5223 = vpop.f32.mrb[0].mxu0
        %v5224 = vadd.f32 %v5063, %v5223
        %v5225 = vpop.f32.mrb[0].mxu0
        %v5226 = vpop.f32.mrb[0].mxu0
        %v5227 = vadd.f32 %v5066, %v5226
        %v5228 = vpop.f32.mrb[0].mxu0
        %5229 = vmatprep.mubr.bf16.mxu0 0
        %5230 = vmatmul.mubr.bf16.gmra.mrb[0].mxu0 %v3836
        %v5231 = vpop.f32.mrb[0].mxu0
        %v5232 = vadd.f32 %v5071, %v5231
        %v5233 = vpop.f32.mrb[0].mxu0
        %v5234 = vpop.f32.mrb[0].mxu0
        %v5235 = vadd.f32 %v5074, %v5234
        %v5236 = vpop.f32.mrb[0].mxu0
        %5237 = vmatprep.mubr.bf16.mxu0 0
        %5238 = vmatmul.mubr.bf16.gmra.mrb[0].mxu0 %v3845
        %v5239 = vpop.f32.mrb[0].mxu0
        %v5240 = vadd.f32 %v5079, %v5239
        %v5241 = vpop.f32.mrb[0].mxu0
        %v5242 = vpop.f32.mrb[0].mxu0
        %v5243 = vadd.f32 %v5082, %v5242
        %v5244 = vpop.f32.mrb[0].mxu0
        %5245 = vmatprep.mubr.bf16.mxu0 0
        %5246 = vmatmul.mubr.bf16.gmra.mrb[0].mxu0 %v3854
        %v5247 = vpop.f32.mrb[0].mxu0
        %v5248 = vadd.f32 %v5087, %v5247
        %v5249 = vpop.f32.mrb[0].mxu0
        %v5250 = vpop.f32.mrb[0].mxu0
        %v5251 = vadd.f32 %v5090, %v5250
        %v5252 = vpop.f32.mrb[0].mxu0
        %5253 = vmatprep.mubr.bf16.mxu0 0
        %5254 = vmatmul.mubr.bf16.gmra.mrb[0].mxu0 %v3863
        %v5255 = vpop.f32.mrb[0].mxu0
        %v5256 = vadd.f32 %v5095, %v5255
        %v5257 = vpop.f32.mrb[0].mxu0
        %v5258 = vpop.f32.mrb[0].mxu0
        %v5259 = vadd.f32 %v5098, %v5258
        %v5260 = vpop.f32.mrb[0].mxu0
        %5261 = vmatprep.mubr.bf16.mxu0 0
        %5262 = vmatmul.mubr.bf16.gmra.mrb[0].mxu0 %v3872
        %v5263 = vpop.f32.mrb[0].mxu0
        %v5264 = vadd.f32 %v5103, %v5263
        %v5265 = vpop.f32.mrb[0].mxu0
        %v5266 = vpop.f32.mrb[0].mxu0
        %v5267 = vadd.f32 %v5106, %v5266
        %v5268 = vpop.f32.mrb[0].mxu0
        %5269 = vmatprep.mubr.bf16.mxu0 0
        %5270 = vmatmul.mubr.bf16.gmra.mrb[0].mxu0 %v3881
        %v5271 = vpop.f32.mrb[0].mxu0
        %v5272 = vadd.f32 %v5111, %v5271
        %v5273 = vpop.f32.mrb[0].mxu0
        %v5274 = vpop.f32.mrb[0].mxu0
        %v5275 = vadd.f32 %v5114, %v5274
        %v5276 = vpop.f32.mrb[0].mxu0
        %5277 = vmatprep.mubr.bf16.mxu0 0
        %5278 = vmatmul.mubr.bf16.gmra.mrb[0].mxu0 %v3890
        %v5279 = vpop.f32.mrb[0].mxu0
        %v5280 = vadd.f32 %v5119, %v5279
        %v5281 = vpop.f32.mrb[0].mxu0
        %v5282 = vpop.f32.mrb[0].mxu0
        %v5283 = vadd.f32 %v5122, %v5282
        %v5284 = vpop.f32.mrb[0].mxu0
        %5285 = vmatprep.mubr.bf16.mxu0 0
        %5286 = vmatmul.mubr.bf16.gmra.mrb[0].mxu0 %v3899
        %v5287 = vpop.f32.mrb[0].mxu0
        %v5288 = vadd.f32 %v5127, %v5287
        %v5289 = vpop.f32.mrb[0].mxu0
        %v5290 = vpop.f32.mrb[0].mxu0
        %v5291 = vadd.f32 %v5130, %v5290
        %v5292 = vpop.f32.mrb[0].mxu0
        %5293 = vmatprep.mubr.bf16.mxu0 0
        %5294 = vmatmul.mubr.bf16.gmra.mrb[0].mxu0 %v3908
        %v5295 = vpop.f32.mrb[0].mxu0
        %v5296 = vadd.f32 %v5135, %v5295
        %v5297 = vpop.f32.mrb[0].mxu0
        %v5298 = vpop.f32.mrb[0].mxu0
        %v5299 = vadd.f32 %v5138, %v5298
        %v5300 = vpop.f32.mrb[0].mxu0
        %5301 = vmatprep.mubr.bf16.mxu0 0
        %5302 = vmatmul.mubr.bf16.gmra.mrb[0].mxu0 %v3917
        %v5303 = vpop.f32.mrb[0].mxu0
        %v5304 = vadd.f32 %v5143, %v5303
        %v5305 = vpop.f32.mrb[0].mxu0
        %v5306 = vpop.f32.mrb[0].mxu0
        %v5307 = vadd.f32 %v5146, %v5306
        %v5308 = vpop.f32.mrb[0].mxu0
        %5309 = vmatprep.mubr.bf16.mxu0 0
        %5310 = vmatmul.mubr.bf16.gmra.mrb[0].mxu0 %v3926
        %v5311 = vpop.f32.mrb[0].mxu0
        %v5312 = vadd.f32 %v5151, %v5311
        %v5313 = vpop.f32.mrb[0].mxu0
        %v5314 = vpop.f32.mrb[0].mxu0
        %v5315 = vadd.f32 %v5154, %v5314
        %v5316 = vpop.f32.mrb[0].mxu0
        %5317 = vmatprep.mubr.bf16.mxu0 0
        %5318 = vmatmul.mubr.bf16.gmra.mrb[0].mxu0 %v3935
        %v5319 = vpop.f32.mrb[0].mxu0
        %v5320 = vadd.f32 %v5159, %v5319
        %v5321 = vpop.f32.mrb[0].mxu0
        %v5322 = vpop.f32.mrb[0].mxu0
        %v5323 = vadd.f32 %v5162, %v5322
        %v5324 = vpop.f32.mrb[0].mxu0
        %5325 = vmatprep.mubr.bf16.mxu0 0
        %5326 = vmatmul.mubr.bf16.gmra.mrb[0].mxu0 %v3944
        %v5327 = vpop.f32.mrb[0].mxu0
        %v5328 = vadd.f32 %v5167, %v5327
        %v5329 = vpop.f32.mrb[0].mxu0
        %v5330 = vpop.f32.mrb[0].mxu0
        %v5331 = vadd.f32 %v5170, %v5330
        %v5332 = vpop.f32.mrb[0].mxu0
        %5333 = vmatprep.mubr.bf16.mxu0 0
        %5334 = vmatmul.mubr.bf16.gmra.mrb[0].mxu0 %v3953
        %v5335 = vpop.f32.mrb[0].mxu0
        %v5336 = vadd.f32 %v5175, %v5335
        %v5337 = vpop.f32.mrb[0].mxu0
        %v5338 = vpop.f32.mrb[0].mxu0
        %v5339 = vadd.f32 %v5178, %v5338
        %v5340 = vpop.f32.mrb[0].mxu0
        %5341 = vdwg.mxu0
        %v5342 = vpack.c.bf16 %v5219, %v5216
        %v5343 = vpack.c.bf16 %v5227, %v5224
        %v5344 = vpack.c.bf16 %v5235, %v5232
        %v5345 = vpack.c.bf16 %v5243, %v5240
        %v5346 = vpack.c.bf16 %v5251, %v5248
        %v5347 = vpack.c.bf16 %v5259, %v5256
        %v5348 = vpack.c.bf16 %v5267, %v5264
        %v5349 = vpack.c.bf16 %v5275, %v5272
        %v5350 = vpack.c.bf16 %v5283, %v5280
        %v5351 = vpack.c.bf16 %v5291, %v5288
        %v5352 = vpack.c.bf16 %v5299, %v5296
        %v5353 = vpack.c.bf16 %v5307, %v5304
        %v5354 = vpack.c.bf16 %v5315, %v5312
        %v5355 = vpack.c.bf16 %v5323, %v5320
        %v5356 = vpack.c.bf16 %v5331, %v5328
        %v5357 = vpack.c.bf16 %v5339, %v5336
        %v5374 = vunpack.c.l.b16 %v5342
        %v5375 = vunpack.c.h.b16 %v5342
        %v5376 = vunpack.c.l.b16 %v5343
        %v5377 = vunpack.c.h.b16 %v5343
        %v5378 = vunpack.c.l.b16 %v5344
        %v5379 = vunpack.c.h.b16 %v5344
        %v5380 = vunpack.c.l.b16 %v5345
        %v5381 = vunpack.c.h.b16 %v5345
        %v5382 = vunpack.c.l.b16 %v5346
        %v5383 = vunpack.c.h.b16 %v5346
        %v5384 = vunpack.c.l.b16 %v5347
        %v5385 = vunpack.c.h.b16 %v5347
        %v5386 = vunpack.c.l.b16 %v5348
        %v5387 = vunpack.c.h.b16 %v5348
        %v5388 = vunpack.c.l.b16 %v5349
        %v5389 = vunpack.c.h.b16 %v5349
        %v5390 = vunpack.c.l.b16 %v5350
        %v5391 = vunpack.c.h.b16 %v5350
        %v5392 = vunpack.c.l.b16 %v5351
        %v5393 = vunpack.c.h.b16 %v5351
        %v5394 = vunpack.c.l.b16 %v5352
        %v5395 = vunpack.c.h.b16 %v5352
        %v5396 = vunpack.c.l.b16 %v5353
        %v5397 = vunpack.c.h.b16 %v5353
        %v5398 = vunpack.c.l.b16 %v5354
        %v5399 = vunpack.c.h.b16 %v5354
        %v5400 = vunpack.c.l.b16 %v5355
        %v5401 = vunpack.c.h.b16 %v5355
        %v5402 = vunpack.c.l.b16 %v5356
        %v5403 = vunpack.c.h.b16 %v5356
        %v5404 = vunpack.c.l.b16 %v5357
        %v5405 = vunpack.c.h.b16 %v5357
        %v5406 = vpack.c.b16 %v5374, %v5374
        %v5407 = vpack.c.b16 %v5375, %v5375
        %v5408 = vpack.c.b16 %v5376, %v5376
        %v5409 = vpack.c.b16 %v5377, %v5377
        %v5410 = vpack.c.b16 %v5378, %v5378
        %v5411 = vpack.c.b16 %v5379, %v5379
        %v5412 = vpack.c.b16 %v5380, %v5380
        %v5413 = vpack.c.b16 %v5381, %v5381
        %v5414 = vpack.c.b16 %v5382, %v5382
        %v5415 = vpack.c.b16 %v5383, %v5383
        %v5416 = vpack.c.b16 %v5384, %v5384
        %v5417 = vpack.c.b16 %v5385, %v5385
        %v5418 = vpack.c.b16 %v5386, %v5386
        %v5419 = vpack.c.b16 %v5387, %v5387
        %v5420 = vpack.c.b16 %v5388, %v5388
        %v5421 = vpack.c.b16 %v5389, %v5389
        %v5422 = vpack.c.b16 %v5390, %v5390
        %v5423 = vpack.c.b16 %v5391, %v5391
        %v5424 = vpack.c.b16 %v5392, %v5392
        %v5425 = vpack.c.b16 %v5393, %v5393
        %v5426 = vpack.c.b16 %v5394, %v5394
        %v5427 = vpack.c.b16 %v5395, %v5395
        %v5428 = vpack.c.b16 %v5396, %v5396
        %v5429 = vpack.c.b16 %v5397, %v5397
        %v5430 = vpack.c.b16 %v5398, %v5398
        %v5431 = vpack.c.b16 %v5399, %v5399
        %v5432 = vpack.c.b16 %v5400, %v5400
        %v5433 = vpack.c.b16 %v5401, %v5401
        %v5434 = vpack.c.b16 %v5402, %v5402
        %v5435 = vpack.c.b16 %v5403, %v5403
        %v5436 = vpack.c.b16 %v5404, %v5404
        %v5437 = vpack.c.b16 %v5405, %v5405
        %5470 = vst [vmem:[%s287] sm:$0xf] %v5406
        %5471 = vst [vmem:[%s287 + $0x4] sm:$0xf] %v5407
        %5472 = vst [vmem:[%s287 + $0x8] sm:$0xf] %v5408
        %5473 = vst [vmem:[%s287 + $0xc] sm:$0xf] %v5409
        %5474 = vst [vmem:[%s287 + $0x10] sm:$0xf] %v5410
        %5475 = vst [vmem:[%s287 + $0x14] sm:$0xf] %v5411
        %5476 = vst [vmem:[%s287 + $0x18] sm:$0xf] %v5412
        %5477 = vst [vmem:[%s287 + $0x1c] sm:$0xf] %v5413
        %5478 = vst [vmem:[%s287 + $0x20] sm:$0xf] %v5414
        %5479 = vst [vmem:[%s287 + $0x24] sm:$0xf] %v5415
        %5480 = vst [vmem:[%s287 + $0x28] sm:$0xf] %v5416
        %5481 = vst [vmem:[%s287 + $0x2c] sm:$0xf] %v5417
        %5482 = vst [vmem:[%s287 + $0x30] sm:$0xf] %v5418
        %5483 = vst [vmem:[%s287 + $0x34] sm:$0xf] %v5419
        %5484 = vst [vmem:[%s287 + $0x38] sm:$0xf] %v5420
        %5485 = vst [vmem:[%s287 + $0x3c] sm:$0xf] %v5421
        %5486 = vst [vmem:[%s287 + $0x40] sm:$0xf] %v5422
        %5487 = vst [vmem:[%s287 + $0x44] sm:$0xf] %v5423
        %5488 = vst [vmem:[%s287 + $0x48] sm:$0xf] %v5424
        %5489 = vst [vmem:[%s287 + $0x4c] sm:$0xf] %v5425
        %5490 = vst [vmem:[%s287 + $0x50] sm:$0xf] %v5426
        %5491 = vst [vmem:[%s287 + $0x54] sm:$0xf] %v5427
        %5492 = vst [vmem:[%s287 + $0x58] sm:$0xf] %v5428
        %5493 = vst [vmem:[%s287 + $0x5c] sm:$0xf] %v5429
        %5494 = vst [vmem:[%s287 + $0x60] sm:$0xf] %v5430
        %5495 = vst [vmem:[%s287 + $0x64] sm:$0xf] %v5431
        %5496 = vst [vmem:[%s287 + $0x68] sm:$0xf] %v5432
        %5497 = vst [vmem:[%s287 + $0x6c] sm:$0xf] %v5433
        %5498 = vst [vmem:[%s287 + $0x70] sm:$0xf] %v5434
        %5499 = vst [vmem:[%s287 + $0x74] sm:$0xf] %v5435
        %5500 = vst [vmem:[%s287 + $0x78] sm:$0xf] %v5436
        %5501 = vst [vmem:[%s287 + $0x7c] sm:$0xf] %v5437
        %p5502 = scmp.eq.s32.totalorder %s32, 0
        // Predicated region
        $region45: #{tpu_custom_call.1} parent=31 // pred_check
          %p5503 = pneg %p5502
        $region46: #{tpu_custom_call.1} parent=31 // pred_check_branch
          %5505 = sbr.rel (%p5503) target = $region48
        $region47: #{tpu_custom_call.1} parent=31 // pred_region
          %5506 = vst [vmem:[%s293] sm:$0x1] 0.0
          %5507 = vst [vmem:[%s299] sm:$0x1] 0.0
        $region48: #{tpu_custom_call.1} parent=31 // pred_fallthru
          _
        %v5508 = vld [vmem:[%s293] sm:$0x1]
        %v5509 = vadd.f32 %v5216, %v5219
        %v5510 = vadd.f32 %v5509, %v5224
        %v5511 = vadd.f32 %v5510, %v5227
        %v5512 = vadd.f32 %v5511, %v5232
        %v5513 = vadd.f32 %v5512, %v5235
        %v5514 = vadd.f32 %v5513, %v5240
        %v5515 = vadd.f32 %v5514, %v5243
        %v5516 = vadd.f32 %v5515, %v5248
        %v5517 = vadd.f32 %v5516, %v5251
        %v5518 = vadd.f32 %v5517, %v5256
        %v5519 = vadd.f32 %v5518, %v5259
        %v5520 = vadd.f32 %v5519, %v5264
        %v5521 = vadd.f32 %v5520, %v5267
        %v5522 = vadd.f32 %v5521, %v5272
        %v5523 = vadd.f32 %v5522, %v5275
        %v5524 = vadd.f32 %v5523, %v5280
        %v5525 = vadd.f32 %v5524, %v5283
        %v5526 = vadd.f32 %v5525, %v5288
        %v5527 = vadd.f32 %v5526, %v5291
        %v5528 = vadd.f32 %v5527, %v5296
        %v5529 = vadd.f32 %v5528, %v5299
        %v5530 = vadd.f32 %v5529, %v5304
        %v5531 = vadd.f32 %v5530, %v5307
        %v5532 = vadd.f32 %v5531, %v5312
        %v5533 = vadd.f32 %v5532, %v5315
        %v5534 = vadd.f32 %v5533, %v5320
        %v5535 = vadd.f32 %v5534, %v5323
        %v5536 = vadd.f32 %v5535, %v5328
        %v5537 = vadd.f32 %v5536, %v5331
        %v5538 = vadd.f32 %v5537, %v5336
        %v5539 = vadd.f32 %v5538, %v5339
        %v5540 = vrot.slane %v5539, 4
        %v5541 = vadd.f32 %v5539, %v5540
        %v5542 = vrot.slane %v5541, 2
        %v5543 = vadd.f32 %v5541, %v5542
        %v5544 = vrot.slane %v5543, 1
        %v5545 = vadd.f32 %v5543, %v5544
        %v5546 = vadd.f32 %v5508, %v5545
        %5547 = vst [vmem:[%s293] sm:$0x1] %v5546
        %v5548 = vld [vmem:[%s299] sm:$0x1]
        %v5549 = vmul.f32 %v5216, %v5216
        %v5550 = vmul.f32 %v5219, %v5219
        %v5551 = vmul.f32 %v5224, %v5224
        %v5552 = vmul.f32 %v5227, %v5227
        %v5553 = vmul.f32 %v5232, %v5232
        %v5554 = vmul.f32 %v5235, %v5235
        %v5555 = vmul.f32 %v5240, %v5240
        %v5556 = vmul.f32 %v5243, %v5243
        %v5557 = vmul.f32 %v5248, %v5248
        %v5558 = vmul.f32 %v5251, %v5251
        %v5559 = vmul.f32 %v5256, %v5256
        %v5560 = vmul.f32 %v5259, %v5259
        %v5561 = vmul.f32 %v5264, %v5264
        %v5562 = vmul.f32 %v5267, %v5267
        %v5563 = vmul.f32 %v5272, %v5272
        %v5564 = vmul.f32 %v5275, %v5275
        %v5565 = vmul.f32 %v5280, %v5280
        %v5566 = vmul.f32 %v5283, %v5283
        %v5567 = vmul.f32 %v5288, %v5288
        %v5568 = vmul.f32 %v5291, %v5291
        %v5569 = vmul.f32 %v5296, %v5296
        %v5570 = vmul.f32 %v5299, %v5299
        %v5571 = vmul.f32 %v5304, %v5304
        %v5572 = vmul.f32 %v5307, %v5307
        %v5573 = vmul.f32 %v5312, %v5312
        %v5574 = vmul.f32 %v5315, %v5315
        %v5575 = vmul.f32 %v5320, %v5320
        %v5576 = vmul.f32 %v5323, %v5323
        %v5577 = vmul.f32 %v5328, %v5328
        %v5578 = vmul.f32 %v5331, %v5331
        %v5579 = vmul.f32 %v5336, %v5336
        %v5580 = vmul.f32 %v5339, %v5339
        %v5581 = vadd.f32 %v5549, %v5550
        %v5582 = vadd.f32 %v5581, %v5551
        %v5583 = vadd.f32 %v5582, %v5552
        %v5584 = vadd.f32 %v5583, %v5553
        %v5585 = vadd.f32 %v5584, %v5554
        %v5586 = vadd.f32 %v5585, %v5555
        %v5587 = vadd.f32 %v5586, %v5556
        %v5588 = vadd.f32 %v5587, %v5557
        %v5589 = vadd.f32 %v5588, %v5558
        %v5590 = vadd.f32 %v5589, %v5559
        %v5591 = vadd.f32 %v5590, %v5560
        %v5592 = vadd.f32 %v5591, %v5561
        %v5593 = vadd.f32 %v5592, %v5562
        %v5594 = vadd.f32 %v5593, %v5563
        %v5595 = vadd.f32 %v5594, %v5564
        %v5596 = vadd.f32 %v5595, %v5565
        %v5597 = vadd.f32 %v5596, %v5566
        %v5598 = vadd.f32 %v5597, %v5567
        %v5599 = vadd.f32 %v5598, %v5568
        %v5600 = vadd.f32 %v5599, %v5569
        %v5601 = vadd.f32 %v5600, %v5570
        %v5602 = vadd.f32 %v5601, %v5571
        %v5603 = vadd.f32 %v5602, %v5572
        %v5604 = vadd.f32 %v5603, %v5573
        %v5605 = vadd.f32 %v5604, %v5574
        %v5606 = vadd.f32 %v5605, %v5575
        %v5607 = vadd.f32 %v5606, %v5576
        %v5608 = vadd.f32 %v5607, %v5577
        %v5609 = vadd.f32 %v5608, %v5578
        %v5610 = vadd.f32 %v5609, %v5579
        %v5611 = vadd.f32 %v5610, %v5580
        %v5612 = vrot.slane %v5611, 4
        %v5613 = vadd.f32 %v5611, %v5612
        %v5614 = vrot.slane %v5613, 2
        %v5615 = vadd.f32 %v5613, %v5614
        %v5616 = vrot.slane %v5615, 1
        %v5617 = vadd.f32 %v5615, %v5616
        %v5618 = vadd.f32 %v5548, %v5617
        %5619 = vst [vmem:[%s299] sm:$0x1] %v5618
        %s5620 = sand.u32 %s117, 1
        %s5621 = scalar_lea.sflag [#allocation6], %s5620
        %s5622 = sand.u32 %s117, 1
        %s5623 = smul.addr %s5622, 128
        %s5624 = scalar_lea.vmem [#allocation10], %s5623
        %s5625 = sand.u32 %s27, 1
        %s5626 = scalar_lea.sflag [#allocation12], %s5625
        %s5627 = sand.u32 %s143, 1
        %s5628 = scalar_lea.vmem [#allocation11], %s5627
        %s5629 = sand.u32 %s27, 1
        %s5630 = scalar_lea.sflag [#allocation12], %s5629
        %s5631 = sand.u32 %s169, 1
        %s5632 = scalar_lea.vmem [#allocation13], %s5631
        // Predicated region
        $region49: #{tpu_custom_call.1} parent=31 // pred_check
          %p5633 = pneg %p127
        $region50: #{tpu_custom_call.1} parent=31 // pred_check_branch
          %5635 = sbr.rel (%p5633) target = $region52
        $region51: #{tpu_custom_call.1} parent=31 // pred_region
          %s5636 = smul.u32 16, %s32
          %s5638 = ssub.s32 2048, 2048
          %5639 = vsyncadd %s5621, %s5638
          %s5640 = smul.addr %s5636, 2
          %s5641 = smul.addr %s31, 32
          %s5642 = sadd.s32 %s5640, %s5641
          %s5643 = smul.addr %s5642, 64
          %s5644 = scalar_lea.hbm %s3, %s5643
          %s5645 = sshll.u32 %s5624, 4
          %s5646 = int_to_ptr.vmem [resolvable:$true] %s5645
          %5651 = dma.vmem_to_hbm [thread:$0]  %s5646, 2048, %s5644, %s5621, 64, 64, 4
        $region52: #{tpu_custom_call.1} parent=31 // pred_fallthru
          _
        // Predicated region
        $region53: #{tpu_custom_call.1} parent=31 // pred_check
          %p5652 = pneg %p153
        $region54: #{tpu_custom_call.1} parent=31 // pred_check_branch
          %5654 = sbr.rel (%p5652) target = $region56
        $region55: #{tpu_custom_call.1} parent=31 // pred_region
          %s5656 = ssub.s32 16, 16
          %5657 = vsyncadd %s5626, %s5656
          %s5658 = smul.addr %s31, 16
          %s5659 = scalar_lea.hbm %s4, %s5658
          %s5661 = sshll.u32 %s5628, 4
          %s5662 = int_to_ptr.vmem [resolvable:$true] %s5661
          %5664 = dma.vmem_to_hbm [thread:$0]  %s5662, 16, %s5659, %s5626
        $region56: #{tpu_custom_call.1} parent=31 // pred_fallthru
          _
        // Predicated region
        $region57: #{tpu_custom_call.1} parent=31 // pred_check
          %p5665 = pneg %p179
        $region58: #{tpu_custom_call.1} parent=31 // pred_check_branch
          %5667 = sbr.rel (%p5665) target = $region60
        $region59: #{tpu_custom_call.1} parent=31 // pred_region
          %s5669 = ssub.s32 16, 16
          %5670 = vsyncadd %s5630, %s5669
          %s5671 = smul.addr %s31, 16
          %s5672 = scalar_lea.hbm %s5, %s5671
          %s5674 = sshll.u32 %s5632, 4
          %s5675 = int_to_ptr.vmem [resolvable:$true] %s5674
          %5677 = dma.vmem_to_hbm [thread:$0]  %s5675, 16, %s5672, %s5630
        $region60: #{tpu_custom_call.1} parent=31 // pred_fallthru
          _
      $region32: #{tpu_custom_call.1} parent=5 // pred_fallthru
        _
      %p5678 = scmp.le.s32.totalorder 2, %s22
      // Predicated region
      $region61: #{tpu_custom_call.1} parent=5 // pred_check
        %p5679 = pneg %p5678
      $region62: #{tpu_custom_call.1} parent=5 // pred_check_branch
        %5681 = sbr.rel (%p5679) target = $region64
      $region63: #{tpu_custom_call.1} parent=5 // pred_region
        %s5682 = ssub.s32 %s22, 2
        // Predicated region
        $region65: #{tpu_custom_call.1} parent=63 // pred_check
          %p5683 = pneg %p133
        $region66: #{tpu_custom_call.1} parent=63 // pred_check_branch
          %5685 = sbr.rel (%p5683) target = $region68
        $region67: #{tpu_custom_call.1} parent=63 // pred_region
          %s5686 = sand.u32 %s118, 1
          %s5687 = scalar_lea.sflag [#allocation6], %s5686
          %s5688 = sand.u32 %s118, 1
          %s5689 = smul.addr %s5688, 128
          %s5690 = scalar_lea.vmem [#allocation10], %s5689
          %5691 = dma.done %s5687, 2048
        $region68: #{tpu_custom_call.1} parent=63 // pred_fallthru
          _
        // Predicated region
        $region69: #{tpu_custom_call.1} parent=63 // pred_check
          %p5692 = pneg %p159
        $region70: #{tpu_custom_call.1} parent=63 // pred_check_branch
          %5694 = sbr.rel (%p5692) target = $region72
        $region71: #{tpu_custom_call.1} parent=63 // pred_region
          %s5695 = sand.u32 %s28, 1
          %s5696 = scalar_lea.sflag [#allocation12], %s5695
          %s5697 = sand.u32 %s144, 1
          %s5698 = scalar_lea.vmem [#allocation11], %s5697
          %5699 = dma.done %s5696, 16
        $region72: #{tpu_custom_call.1} parent=63 // pred_fallthru
          _
        // Predicated region
        $region73: #{tpu_custom_call.1} parent=63 // pred_check
          %p5700 = pneg %p185
        $region74: #{tpu_custom_call.1} parent=63 // pred_check_branch
          %5702 = sbr.rel (%p5700) target = $region76
        $region75: #{tpu_custom_call.1} parent=63 // pred_region
          %s5703 = sand.u32 %s28, 1
          %s5704 = scalar_lea.sflag [#allocation12], %s5703
          %s5705 = sand.u32 %s170, 1
          %s5706 = scalar_lea.vmem [#allocation13], %s5705
          %5707 = dma.done %s5704, 16
        $region76: #{tpu_custom_call.1} parent=63 // pred_fallthru
          _
      $region64: #{tpu_custom_call.1} parent=5 // pred_fallthru
        _
    $region6: #{tpu_custom_call.1} parent=1 // loop_footer
      %s26 = sadd.s32 1, %s22
    $region7: #{tpu_custom_call.1} parent=1 // loop_footer_branch
      %21 = sbr.rel target = $region3
    $region8: #{tpu_custom_call.1} parent=1 // loop_exit
      _
    %5708 = vsyncpa [#allocation5], 1
    %s5709 = scalar_lea.sflag [#allocation5], 1
    %5710 = vsyncpa %s5709, 1
    %5711 = vsyncpa [#allocation8], 1
    %5712 = vsyncpa [#allocation6], 1
    %s5713 = scalar_lea.sflag [#allocation6], 1
    %5714 = vsyncpa %s5713, 1
    %5715 = vsyncpa [#allocation12], 1
    %s5716 = scalar_lea.sflag [#allocation12], 1
    %5717 = vsyncpa %s5716, 1

</llo_original>
